<compile_context>
chip_gen: v7x
topology: tpu7x:2x2x1
jax: 0.10.0
libtpu: 0.0.40
codegen_flags: <defaults>
</compile_context>

<pallas_src>
import functools

import jax
import jax.numpy as jnp
from jax import lax
from jax.experimental import pallas as pl
from jax.experimental.pallas import tpu as pltpu


# ------------------------------------------------------------------ utilities

@functools.lru_cache(maxsize=None)
def _vmem_limit():
    # Generation-aware scoped-VMEM budget: ~48 MiB on v7x (64 MiB physical),
    # ~96 MiB on v5e/v6e (128 MiB physical); conservative 32 MiB fallback.
    try:
        phys = int(pltpu.get_tpu_info().vmem_capacity_bytes)
        if phys <= 0:
            raise ValueError("bad vmem capacity")
        return min(max((phys * 3) // 4, 32 * 1024 * 1024), 100 * 1024 * 1024)
    except Exception:
        return 32 * 1024 * 1024


def _reflect_pad(x_nhwc, p):
    # matches nn.ReflectionPad2d (edge not repeated)
    return jnp.pad(x_nhwc, ((0, 0), (p, p), (p, p), (0, 0)), mode="reflect")


def _pick_row_tile(extent, n_batch, row_elems, target_rows=256, min_grid=4):
    """Largest divisor of `extent` whose tile has <= target_rows matmul rows
    (keeps the f32 accumulator small), shrunk until the grid has >= min_grid
    steps so both v7x TensorCores get work."""
    divisors = [d for d in range(1, extent + 1) if extent % d == 0]
    fit = [d for d in divisors if d * row_elems <= target_rows]
    th = max(fit) if fit else 1
    while n_batch * (extent // th) < min_grid:
        smaller = [d for d in divisors if d < th]
        if not smaller:
            break
        th = max(smaller)
    return th


def _pick_lane_tile(m, n_batch, min_grid=4, max_tile=4096):
    """Lane-dense tile (multiple of 128) dividing m, or m itself (always legal)."""
    cands = [d for d in range(m, 0, -1)
             if m % d == 0 and d % 128 == 0 and d <= max_tile]
    if not cands:
        return m
    tm = cands[0]
    for d in cands:
        if n_batch * (m // d) >= min_grid:
            tm = d
            break
    return tm


def _pack_taps(w_hwio, fold=2):
    """(kh, kw, Cin, Cout) HWIO -> (G, fold*Cin, Cout) bf16 with taps folded into
    the contraction dim (K = fold*Cin); missing taps are zero-padded.  Returns
    the packed weights and the static tap grouping ((di, dj) pairs per group)."""
    kh, kw, cin, cout = w_hwio.shape
    taps = [(di, dj) for di in range(kh) for dj in range(kw)]
    t = len(taps)
    g = -(-t // fold)
    pad = g * fold - t
    w = w_hwio.reshape(t, cin, cout)
    if pad:
        w = jnp.concatenate([w, jnp.zeros((pad, cin, cout), w.dtype)], axis=0)
        taps = taps + [taps[-1]] * pad          # dummy taps carry zero weights
    w = w.reshape(g, fold * cin, cout).astype(jnp.bfloat16)
    groups = tuple(tuple(taps[i * fold + f] for f in range(fold)) for i in range(g))
    return w, groups


# --------------------------------------------------------------- Pallas kernels
# All conv kernels contract on the MXU with bf16 operands and f32 accumulation.
# conv_block1/2 keep the whole reflection-padded activation of one batch element
# resident in VMEM and walk row tiles of the output.
# TODO(synk): for large images the per-batch resident activation overflows VMEM
# (esp. v7x's 64 MiB); switch to halo row-tiling (overlapping blocks / manual DMA).


def _conv_input_kernel(p_ref, w_ref, b_ref, alpha_ref, o_ref):
    # conv_input: im2col'ed patches (K=128) -> single matmul + bias + PReLU.
    _, th, W, Cout = o_ref.shape
    K = p_ref.shape[-1]
    lhs = p_ref[0].reshape(th * W, K)                               # bf16
    y = jnp.dot(lhs, w_ref[...], preferred_element_type=jnp.float32) + b_ref[...]
    a = alpha_ref[0]
    y = jnp.where(y >= 0.0, y, a * y)                               # PReLU
    o_ref[0] = y.reshape(th, W, Cout).astype(o_ref.dtype)


def _conv_block1_kernel(xp_ref, w_ref, b_ref, o_ref, sum_ref, sq_ref, *, tap_groups):
    # conv_block1's conv + bias; taps K-folded in pairs (K=128 per matmul).
    # BatchNorm batch statistics are written as per-grid-step partials so the
    # grid stays fully parallel (no cross-step accumulator).
    r = pl.program_id(1)
    _, th, W, Cout = o_ref.shape
    Cin = xp_ref.shape[-1]
    row0 = r * th
    acc = jnp.zeros((th * W, Cout), jnp.float32)
    for g, group in enumerate(tap_groups):
        parts = [xp_ref[0, pl.ds(row0 + di, th), pl.ds(dj, W), :] for (di, dj) in group]
        lhs = parts[0] if len(parts) == 1 else jnp.concatenate(parts, axis=-1)
        lhs = lhs.reshape(th * W, Cin * len(parts))
        acc = acc + jnp.dot(lhs, w_ref[g], preferred_element_type=jnp.float32)
    y = acc + b_ref[...]
    sum_ref[0, 0] = jnp.sum(y, axis=0, keepdims=True)
    sq_ref[0, 0] = jnp.sum(y * y, axis=0, keepdims=True)
    o_ref[0] = y.reshape(th, W, Cout).astype(o_ref.dtype)


def _conv_block2_kernel(p00_ref, p01_ref, p10_ref, p11_ref, w_ref, b_ref,
                        scale_ref, shift_ref, alpha_ref, o_ref, *, tap_groups):
    # conv_block2: BN affine + PReLU applied ONCE per needed element (hoisted out
    # of the tap loop into a per-phase sub-block transform), then the stride-2
    # conv(64->12) with K-folded taps.  The four inputs are the even/odd
    # (row, col) phases of the reflection-padded activation, so every load is
    # unit-stride: tap (di, dj) lives in phase (di%2, dj%2) at offset (di//2, dj//2).
    r = pl.program_id(1)
    _, th, Wo, Cout = o_ref.shape
    Cmid = p00_ref.shape[-1]
    row0 = r * th
    scale = scale_ref[...]                                          # (1, Cmid)
    shift = shift_ref[...]
    a = alpha_ref[0]
    phase_refs = ((p00_ref, p01_ref), (p10_ref, p11_ref))
    subs = {}
    for pi in range(2):
        for pj in range(2):
            v = phase_refs[pi][pj][0, pl.ds(row0, th + 1), :, :].astype(jnp.float32)
            v = v * scale + shift                                   # BatchNorm (batch stats)
            v = jnp.where(v >= 0.0, v, a * v)                       # PReLU
            subs[(pi, pj)] = v.astype(jnp.bfloat16)                 # (th+1, Wq, Cmid)
    acc = jnp.zeros((th * Wo, Cout), jnp.float32)
    for g, group in enumerate(tap_groups):
        parts = []
        for (di, dj) in group:
            s = subs[(di % 2, dj % 2)]
            parts.append(s[di // 2:di // 2 + th, dj // 2:dj // 2 + Wo, :])
        lhs = parts[0] if len(parts) == 1 else jnp.concatenate(parts, axis=-1)
        lhs = lhs.reshape(th * Wo, Cmid * len(parts))
        acc = acc + jnp.dot(lhs, w_ref[g], preferred_element_type=jnp.float32)
    y = acc + b_ref[...]
    o_ref[0] = y.reshape(th, Wo, Cout).astype(o_ref.dtype)


def _l2norm_add_kernel(res_ref, x_ref, o_ref):
    # F.normalize(p=2, dim=channel) + residual add on channel-planar (1, 3, tm)
    # blocks (tm lane-dense); channel reduction is 3 VPU adds, rsqrt on the EUP.
    r = res_ref[0].astype(jnp.float32)                              # (3, tm)
    nsq = jnp.sum(r * r, axis=0, keepdims=True)                     # (1, tm)
    inv = lax.rsqrt(jnp.maximum(nsq, 1e-24))                        # == 1/max(||r||,1e-12)
    o_ref[0] = x_ref[0] + r * inv


# ------------------------------------------------------------- kernel wrappers

def _conv_input_call(patches, w, b, alpha, H, W):
    N = patches.shape[0]
    K = patches.shape[-1]
    Cout = w.shape[-1]
    th = _pick_row_tile(H, N, W)
    return pl.pallas_call(
        _conv_input_kernel,
        out_shape=jax.ShapeDtypeStruct((N, H, W, Cout), jnp.bfloat16),
        grid=(N, H // th),
        in_specs=[
            pl.BlockSpec((1, th, W, K), lambda n, r: (n, r, 0, 0)),
            pl.BlockSpec((K, Cout), lambda n, r: (0, 0)),
            pl.BlockSpec((1, Cout), lambda n, r: (0, 0)),
            pl.BlockSpec(memory_space=pltpu.MemorySpace.SMEM),
        ],
        out_specs=pl.BlockSpec((1, th, W, Cout), lambda n, r: (n, r, 0, 0)),
        compiler_params=pltpu.CompilerParams(
            dimension_semantics=("parallel", "parallel"),
            vmem_limit_bytes=_vmem_limit()),
    )(patches, w, b, alpha)


def _conv_block1_call(xp, w, b, tap_groups, H, W):
    N, Hp, Wp, Cin = xp.shape
    Cout = w.shape[-1]
    th = _pick_row_tile(H, N, W)
    nr = H // th
    kernel = functools.partial(_conv_block1_kernel, tap_groups=tap_groups)
    return pl.pallas_call(
        kernel,
        out_shape=(jax.ShapeDtypeStruct((N, H, W, Cout), jnp.bfloat16),
                   jax.ShapeDtypeStruct((N, nr, 1, Cout), jnp.float32),
                   jax.ShapeDtypeStruct((N, nr, 1, Cout), jnp.float32)),
        grid=(N, nr),
        in_specs=[
            pl.BlockSpec((1, Hp, Wp, Cin), lambda n, r: (n, 0, 0, 0)),
            pl.BlockSpec(w.shape, lambda n, r: (0, 0, 0)),
            pl.BlockSpec((1, Cout), lambda n, r: (0, 0)),
        ],
        out_specs=(
            pl.BlockSpec((1, th, W, Cout), lambda n, r: (n, r, 0, 0)),
            pl.BlockSpec((1, 1, 1, Cout), lambda n, r: (n, r, 0, 0)),
            pl.BlockSpec((1, 1, 1, Cout), lambda n, r: (n, r, 0, 0)),
        ),
        compiler_params=pltpu.CompilerParams(
            dimension_semantics=("parallel", "parallel"),
            vmem_limit_bytes=_vmem_limit()),
    )(xp, w, b)


def _conv_block2_call(phases, w, b, scale, shift, alpha, tap_groups, Ho, Wo):
    p00, p01, p10, p11 = phases
    N, Hq, Wq, Cmid = p00.shape
    Cout = w.shape[-1]
    th = _pick_row_tile(Ho, N, Wo)
    kernel = functools.partial(_conv_block2_kernel, tap_groups=tap_groups)
    phase_spec = pl.BlockSpec((1, Hq, Wq, Cmid), lambda n, r: (n, 0, 0, 0))
    return pl.pallas_call(
        kernel,
        out_shape=jax.ShapeDtypeStruct((N, Ho, Wo, Cout), jnp.bfloat16),
        grid=(N, Ho // th),
        in_specs=[
            phase_spec, phase_spec, phase_spec, phase_spec,
            pl.BlockSpec(w.shape, lambda n, r: (0, 0, 0)),
            pl.BlockSpec((1, Cout), lambda n, r: (0, 0)),
            pl.BlockSpec((1, Cmid), lambda n, r: (0, 0)),
            pl.BlockSpec((1, Cmid), lambda n, r: (0, 0)),
            pl.BlockSpec(memory_space=pltpu.MemorySpace.SMEM),
        ],
        out_specs=pl.BlockSpec((1, th, Wo, Cout), lambda n, r: (n, r, 0, 0)),
        compiler_params=pltpu.CompilerParams(
            dimension_semantics=("parallel", "parallel"),
            vmem_limit_bytes=_vmem_limit()),
    )(p00, p01, p10, p11, w, b, scale, shift, alpha)


def _l2norm_add_call(res, x):
    N, C, M = res.shape
    tm = _pick_lane_tile(M, N)
    return pl.pallas_call(
        _l2norm_add_kernel,
        out_shape=jax.ShapeDtypeStruct((N, C, M), jnp.float32),
        grid=(N, M // tm),
        in_specs=[pl.BlockSpec((1, C, tm), lambda n, r: (n, 0, r)),
                  pl.BlockSpec((1, C, tm), lambda n, r: (n, 0, r))],
        out_specs=pl.BlockSpec((1, C, tm), lambda n, r: (n, 0, r)),
        compiler_params=pltpu.CompilerParams(
            dimension_semantics=("parallel", "parallel"),
            vmem_limit_bytes=_vmem_limit()),
    )(res, x)


# ---------------------------------------------------------------- parameters

def init_params(key):
    k = jax.random.split(key, 6)
    p = {}
    # f32 "master" weights in HWIO layout (kh, kw, Cin, Cout)
    p["w0"] = jax.random.normal(k[0], (5, 5, 3, 64), jnp.float32) * 0.05
    p["b0"] = jax.random.normal(k[1], (64,), jnp.float32) * 0.05
    p["alpha0"] = jnp.full((1,), 0.25, jnp.float32)       # nn.PReLU default init
    p["w1"] = jax.random.normal(k[2], (3, 3, 64, 64), jnp.float32) * 0.05
    p["b1"] = jax.random.normal(k[3], (64,), jnp.float32) * 0.05
    p["gamma1"] = jnp.ones((64,), jnp.float32)            # BatchNorm2d default init
    p["beta1"] = jnp.zeros((64,), jnp.float32)
    p["alpha1"] = jnp.full((1,), 0.25, jnp.float32)
    p["w2"] = jax.random.normal(k[4], (3, 3, 64, 12), jnp.float32) * 0.05
    p["b2"] = jax.random.normal(k[5], (12,), jnp.float32) * 0.05
    return p


# ------------------------------------------------------------------- forward

def compression_network_forward(params, x_nchw):
    N, Cin, H, W = x_nchw.shape
    assert Cin == 3 and H % 2 == 0 and W % 2 == 0
    x_nchw = x_nchw.astype(jnp.float32)
    x_nhwc = jnp.transpose(x_nchw, (0, 2, 3, 1))

    # --- conv_input: ReflectionPad(2) + Conv(3->64, k5, s1) + PReLU ------------
    # The 3-channel input is tiny, so im2col it in JAX (k*k*Cin = 75, pad -> 128)
    # and run the whole layer as ONE K=128 MXU matmul per row tile.
    xp0 = _reflect_pad(x_nhwc, 2).astype(jnp.bfloat16)
    patches = jnp.concatenate(
        [xp0[:, di:di + H, dj:dj + W, :] for di in range(5) for dj in range(5)],
        axis=-1)                                                    # (N, H, W, 75)
    patches = jnp.pad(patches, ((0, 0), (0, 0), (0, 0), (0, 128 - 75)))
    w0 = jnp.pad(params["w0"].reshape(75, 64), ((0, 128 - 75), (0, 0))).astype(jnp.bfloat16)
    b0 = params["b0"].reshape(1, 64).astype(jnp.float32)
    y0 = _conv_input_call(patches, w0, b0, params["alpha0"].astype(jnp.float32), H, W)

    # --- conv_block1: ReflectionPad(1) + Conv(64->64, k3, s1) + bias -----------
    # BN batch statistics come out as per-grid-step partial sums (parallel grid).
    # TODO(synk): fuse the reflection pad into conv_input's epilogue / halo-tile
    # over H instead of keeping the whole padded image resident (needed for big H).
    w1, groups1 = _pack_taps(params["w1"], fold=2)                  # (5, 128, 64) bf16
    b1 = params["b1"].reshape(1, 64).astype(jnp.float32)
    xp1 = _reflect_pad(y0, 1)
    y1, sum_p, sq_p = _conv_block1_call(xp1, w1, b1, groups1, H, W)

    cnt = float(N * H * W)
    mean = jnp.sum(sum_p, axis=(0, 1, 2)) / cnt
    var = jnp.sum(sq_p, axis=(0, 1, 2)) / cnt - mean * mean         # biased (training BN)
    scale_v = params["gamma1"] * lax.rsqrt(var + 1e-5)
    shift_v = params["beta1"] - mean * scale_v
    scale = scale_v.reshape(1, 64).astype(jnp.float32)              # (1, 64) for BlockSpec
    shift = shift_v.reshape(1, 64).astype(jnp.float32)

    # --- conv_block2: BN affine + PReLU + ReflectionPad(1) + Conv(64->12, k3, s2)
    # BN/PReLU are pointwise so they commute with the reflection padding and are
    # applied (once per element) inside the conv kernel; the even/odd phase split
    # makes every stride-2 tap a unit-stride load.
    # TODO(synk): fuse pad + phase split into the producing kernel (or strided
    # in-kernel loads) to drop this extra XLA pass over the 64-channel activation.
    Ho, Wo = H // 2, W // 2
    y1p = _reflect_pad(y1, 1)
    phases = tuple(y1p[:, i::2, j::2, :] for i in (0, 1) for j in (0, 1))
    w2, groups2 = _pack_taps(params["w2"], fold=2)                  # (5, 128, 12) bf16
    b2 = params["b2"].reshape(1, 12).astype(jnp.float32)
    y2 = _conv_block2_call(phases, w2, b2, scale, shift,
                           params["alpha1"].astype(jnp.float32), groups2, Ho, Wo)

    # --- PixelShuffle(2) (pure layout remap) + F.normalize(dim=1) + residual ---
    res = y2.reshape(N, Ho, Wo, 3, 2, 2)
    res = jnp.transpose(res, (0, 3, 1, 4, 2, 5)).reshape(N, 3, H * W)   # bf16
    out = _l2norm_add_call(res, x_nchw.reshape(N, 3, H * W))
    return out.reshape(N, 3, H, W)


# ------------------------------------------------------- pure-JAX reference

def reference_forward(params, x_nchw):
    x = jnp.transpose(x_nchw, (0, 2, 3, 1)).astype(jnp.float32)
    identity = x

    def conv(inp, w_hwio, b, stride, pad):
        ip = _reflect_pad(inp, pad)
        dn = lax.conv_dimension_numbers(ip.shape, w_hwio.shape,
                                        ("NHWC", "HWIO", "NHWC"))
        y = lax.conv_general_dilated(ip, w_hwio, (stride, stride), "VALID",
                                     dimension_numbers=dn,
                                     precision=lax.Precision.HIGHEST)
        return y + b

    a0, a1 = params["alpha0"][0], params["alpha1"][0]
    y = conv(x, params["w0"], params["b0"], 1, 2)
    y = jnp.where(y >= 0, y, a0 * y)
    y = conv(y, params["w1"], params["b1"], 1, 1)
    mean = jnp.mean(y, axis=(0, 1, 2))
    var = jnp.mean((y - mean) ** 2, axis=(0, 1, 2))
    y = (y - mean) / jnp.sqrt(var + 1e-5) * params["gamma1"] + params["beta1"]
    y = jnp.where(y >= 0, y, a1 * y)
    y = conv(y, params["w2"], params["b2"], 2, 1)
    N, Ho, Wo, _ = y.shape
    y = y.reshape(N, Ho, Wo, 3, 2, 2).transpose(0, 1, 4, 2, 5, 3)
    y = y.reshape(N, Ho * 2, Wo * 2, 3)
    norm = jnp.sqrt(jnp.sum(y * y, axis=-1, keepdims=True))
    y = y / jnp.maximum(norm, 1e-12)
    return jnp.transpose(identity + y, (0, 3, 1, 2))


# ----------------------------------------------------------------------- main

if __name__ == "__main__":
    key = jax.random.PRNGKey(0)
    pkey, xkey = jax.random.split(key)
    params = init_params(pkey)
    x = jax.random.normal(xkey, (2, 3, 16, 16), jnp.float32)   # NCHW, like PyTorch

    out = jax.block_until_ready(jax.jit(compression_network_forward)(params, x))
    assert out.shape == (2, 3, 16, 16) and out.dtype == jnp.float32

    ref = jax.block_until_ready(jax.jit(reference_forward)(params, x))
    max_err = float(jnp.max(jnp.abs(out - ref)))
    # bf16 weights/activations + single-pass MXU accumulation vs. the f32
    # HIGHEST-precision reference -> a few % worst-case relative error.
    assert jnp.allclose(out, ref, atol=3e-2, rtol=3e-2), \
        f"mismatch vs reference (max abs err {max_err:.4e})"

    print("KERNEL_OK")
</pallas_src>

<mosaic_0001>
module attributes {stable_mosaic.version = 11 : i64} {
  func.func @_conv_input_kernel(%arg0: i32, %arg1: i32, %arg2: memref<1x8x16x128xbf16, #tpu.memory_space<vmem>>, %arg3: memref<128x64xbf16, #tpu.memory_space<vmem>>, %arg4: memref<1x64xf32, #tpu.memory_space<vmem>>, %arg5: memref<1xf32, #tpu.memory_space<smem>>, %arg6: memref<1x8x16x64xbf16, #tpu.memory_space<vmem>>) attributes {dimension_semantics = [#tpu.dimension_semantics<parallel>, #tpu.dimension_semantics<parallel>], iteration_bounds = array<i64: 2, 2>, scalar_prefetch = 0 : i64, scratch_operands = 0 : i64, tpu.core_type = #tpu.core_type<tc>, window_params = [{transform_indices = @transform_0, window_bounds = array<i64: 1, 8, 16, 128>}, {pipeline_mode = #tpu.pipeline_mode<synchronous>, transform_indices = @transform_1, window_bounds = array<i64: 128, 64>}, {pipeline_mode = #tpu.pipeline_mode<synchronous>, transform_indices = @transform_2, window_bounds = array<i64: 1, 64>}, {transform_indices = @transform_3, window_bounds = array<i64: 1>}, {transform_indices = @transform_4, window_bounds = array<i64: 1, 8, 16, 64>}]} {
    %c0 = arith.constant 0 : index
    %c0_0 = arith.constant 0 : index
    %c0_1 = arith.constant 0 : index
    %c0_2 = arith.constant 0 : index
    %0 = vector.load %arg2[%c0, %c0_0, %c0_1, %c0_2] : memref<1x8x16x128xbf16, #tpu.memory_space<vmem>>, vector<1x8x16x128xbf16>
    %1 = vector.shape_cast %0 : vector<1x8x16x128xbf16> to vector<8x16x128xbf16>
    %2 = vector.shape_cast %1 : vector<8x16x128xbf16> to vector<128x128xbf16>
    %c0_3 = arith.constant 0 : index
    %c0_4 = arith.constant 0 : index
    %3 = vector.load %arg3[%c0_3, %c0_4] : memref<128x64xbf16, #tpu.memory_space<vmem>>, vector<128x64xbf16>
    %cst = arith.constant dense<0.000000e+00> : vector<128x64xf32>
    %4 = tpu.matmul %2, %3, %cst {dimension_numbers = #tpu.dot_dimension_numbers<[1], [0], [0], [1], [0, 0, 1, 1], [], []>} : vector<128x128xbf16>, vector<128x64xbf16>, vector<128x64xf32> -> vector<128x64xf32>
    %c0_5 = arith.constant 0 : index
    %c0_6 = arith.constant 0 : index
    %5 = vector.load %arg4[%c0_5, %c0_6] : memref<1x64xf32, #tpu.memory_space<vmem>>, vector<1x64xf32>
    %6 = vector.broadcast %5 : vector<1x64xf32> to vector<128x64xf32>
    %7 = arith.addf %4, %6 : vector<128x64xf32>
    %c0_7 = arith.constant 0 : index
    %8 = memref.load %arg5[%c0_7] : memref<1xf32, #tpu.memory_space<smem>>
    %cst_8 = arith.constant 0.000000e+00 : f32
    %9 = vector.broadcast %cst_8 : f32 to vector<128x64xf32>
    %10 = arith.cmpf oge, %7, %9 : vector<128x64xf32>
    %11 = vector.broadcast %8 : f32 to vector<128x64xf32>
    %12 = arith.mulf %11, %7 : vector<128x64xf32>
    %13 = arith.select %10, %7, %12 : vector<128x64xi1>, vector<128x64xf32>
    %14 = vector.shape_cast %13 : vector<128x64xf32> to vector<8x16x64xf32>
    %15 = arith.truncf %14 : vector<8x16x64xf32> to vector<8x16x64xbf16>
    %c0_9 = arith.constant 0 : index
    %c0_10 = arith.constant 0 : index
    %c0_11 = arith.constant 0 : index
    %c0_12 = arith.constant 0 : index
    %16 = vector.load %arg6[%c0_9, %c0_10, %c0_11, %c0_12] : memref<1x8x16x64xbf16, #tpu.memory_space<vmem>>, vector<1x8x16x64xbf16>
    %17 = vector.shape_cast %16 : vector<1x8x16x64xbf16> to vector<8x16x64xbf16>
    %18 = vector.shape_cast %15 : vector<8x16x64xbf16> to vector<1x8x16x64xbf16>
    tpu.vector_store %arg6[%c0_9, %c0_10, %c0_11, %c0_12], %18 {strides = array<i32>} : memref<1x8x16x64xbf16, #tpu.memory_space<vmem>>, vector<1x8x16x64xbf16>,
    return
  }
  func.func @transform_0(%arg0: i32, %arg1: i32) -> (i32, i32, i32, i32) {
    %c0_i32 = arith.constant 0 : i32
    %c0_i32_0 = arith.constant 0 : i32
    %c0_i32_1 = arith.constant 0 : i32
    return %arg0, %arg1, %c0_i32, %c0_i32_0 : i32, i32, i32, i32
  }
  func.func @transform_1(%arg0: i32, %arg1: i32) -> (i32, i32) {
    %c0_i32 = arith.constant 0 : i32
    %c0_i32_0 = arith.constant 0 : i32
    %c0_i32_1 = arith.constant 0 : i32
    return %c0_i32, %c0_i32_0 : i32, i32
  }
  func.func @transform_2(%arg0: i32, %arg1: i32) -> (i32, i32) {
    %c0_i32 = arith.constant 0 : i32
    %c0_i32_0 = arith.constant 0 : i32
    %c0_i32_1 = arith.constant 0 : i32
    return %c0_i32, %c0_i32_0 : i32, i32
  }
  func.func @transform_3(%arg0: i32, %arg1: i32) -> i32 {
    %c0_i32 = arith.constant 0 : i32
    %c0_i32_0 = arith.constant 0 : i32
    return %c0_i32 : i32
  }
  func.func @transform_4(%arg0: i32, %arg1: i32) -> (i32, i32, i32, i32) {
    %c0_i32 = arith.constant 0 : i32
    %c0_i32_0 = arith.constant 0 : i32
    %c0_i32_1 = arith.constant 0 : i32
    return %arg0, %arg1, %c0_i32, %c0_i32_0 : i32, i32, i32, i32
  }
}

module attributes {stable_mosaic.version = 11 : i64} {
  func.func @_conv_block1_kernel(%arg0: i32, %arg1: i32, %arg2: memref<1x18x18x64xbf16, #tpu.memory_space<vmem>>, %arg3: memref<5x128x64xbf16, #tpu.memory_space<vmem>>, %arg4: memref<1x64xf32, #tpu.memory_space<vmem>>, %arg5: memref<1x8x16x64xbf16, #tpu.memory_space<vmem>>, %arg6: memref<1x1x1x64xf32, #tpu.memory_space<vmem>>, %arg7: memref<1x1x1x64xf32, #tpu.memory_space<vmem>>) attributes {dimension_semantics = [#tpu.dimension_semantics<parallel>, #tpu.dimension_semantics<parallel>], iteration_bounds = array<i64: 2, 2>, scalar_prefetch = 0 : i64, scratch_operands = 0 : i64, tpu.core_type = #tpu.core_type<tc>, window_params = [{transform_indices = @transform_0, window_bounds = array<i64: 1, 18, 18, 64>}, {pipeline_mode = #tpu.pipeline_mode<synchronous>, transform_indices = @transform_1, window_bounds = array<i64: 5, 128, 64>}, {pipeline_mode = #tpu.pipeline_mode<synchronous>, transform_indices = @transform_2, window_bounds = array<i64: 1, 64>}, {transform_indices = @transform_3, window_bounds = array<i64: 1, 8, 16, 64>}, {transform_indices = @transform_4, window_bounds = array<i64: 1, 1, 1, 64>}, {transform_indices = @transform_5, window_bounds = array<i64: 1, 1, 1, 64>}]} {
    %c8_i32 = arith.constant 8 : i32
    %0 = arith.muli %arg1, %c8_i32 : i32
    %cst = arith.constant 0.000000e+00 : f32
    %1 = vector.broadcast %cst : f32 to vector<128x64xf32>
    %c0_i32 = arith.constant 0 : i32
    %2 = arith.addi %0, %c0_i32 : i32
    %c0 = arith.constant 0 : index
    %3 = arith.index_cast %2 : i32 to index
    %c0_0 = arith.constant 0 : index
    %c0_1 = arith.constant 0 : index
    %4 = vector.load %arg2[%c0, %3, %c0_0, %c0_1] : memref<1x18x18x64xbf16, #tpu.memory_space<vmem>>, vector<1x8x16x64xbf16>
    %5 = vector.shape_cast %4 : vector<1x8x16x64xbf16> to vector<8x16x64xbf16>
    %c0_i32_2 = arith.constant 0 : i32
    %6 = arith.addi %0, %c0_i32_2 : i32
    %c0_3 = arith.constant 0 : index
    %7 = arith.index_cast %6 : i32 to index
    %c1 = arith.constant 1 : index
    %c0_4 = arith.constant 0 : index
    %8 = vector.load %arg2[%c0_3, %7, %c1, %c0_4] : memref<1x18x18x64xbf16, #tpu.memory_space<vmem>>, vector<1x8x16x64xbf16>
    %9 = vector.shape_cast %8 : vector<1x8x16x64xbf16> to vector<8x16x64xbf16>
    %10 = tpu.concatenate %5, %9 in 2 : vector<8x16x64xbf16>, vector<8x16x64xbf16> -> vector<8x16x128xbf16>
    %11 = vector.shape_cast %10 : vector<8x16x128xbf16> to vector<128x128xbf16>
    %c0_5 = arith.constant 0 : index
    %c0_6 = arith.constant 0 : index
    %c0_7 = arith.constant 0 : index
    %12 = vector.load %arg3[%c0_5, %c0_6, %c0_7] : memref<5x128x64xbf16, #tpu.memory_space<vmem>>, vector<1x128x64xbf16>
    %13 = vector.shape_cast %12 : vector<1x128x64xbf16> to vector<128x64xbf16>
    %cst_8 = arith.constant dense<0.000000e+00> : vector<128x64xf32>
    %14 = tpu.matmul %11, %13, %cst_8 {dimension_numbers = #tpu.dot_dimension_numbers<[1], [0], [0], [1], [0, 0, 1, 1], [], []>} : vector<128x128xbf16>, vector<128x64xbf16>, vector<128x64xf32> -> vector<128x64xf32>
    %15 = arith.addf %1, %14 : vector<128x64xf32>
    %c0_i32_9 = arith.constant 0 : i32
    %16 = arith.addi %0, %c0_i32_9 : i32
    %c0_10 = arith.constant 0 : index
    %17 = arith.index_cast %16 : i32 to index
    %c2 = arith.constant 2 : index
    %c0_11 = arith.constant 0 : index
    %18 = vector.load %arg2[%c0_10, %17, %c2, %c0_11] : memref<1x18x18x64xbf16, #tpu.memory_space<vmem>>, vector<1x8x16x64xbf16>
    %19 = vector.shape_cast %18 : vector<1x8x16x64xbf16> to vector<8x16x64xbf16>
    %c1_i32 = arith.constant 1 : i32
    %20 = arith.addi %0, %c1_i32 : i32
    %c0_12 = arith.constant 0 : index
    %21 = arith.index_cast %20 : i32 to index
    %c0_13 = arith.constant 0 : index
    %c0_14 = arith.constant 0 : index
    %22 = vector.load %arg2[%c0_12, %21, %c0_13, %c0_14] : memref<1x18x18x64xbf16, #tpu.memory_space<vmem>>, vector<1x8x16x64xbf16>
    %23 = vector.shape_cast %22 : vector<1x8x16x64xbf16> to vector<8x16x64xbf16>
    %24 = tpu.concatenate %19, %23 in 2 : vector<8x16x64xbf16>, vector<8x16x64xbf16> -> vector<8x16x128xbf16>
    %25 = vector.shape_cast %24 : vector<8x16x128xbf16> to vector<128x128xbf16>
    %c1_15 = arith.constant 1 : index
    %c0_16 = arith.constant 0 : index
    %c0_17 = arith.constant 0 : index
    %26 = vector.load %arg3[%c1_15, %c0_16, %c0_17] : memref<5x128x64xbf16, #tpu.memory_space<vmem>>, vector<1x128x64xbf16>
    %27 = vector.shape_cast %26 : vector<1x128x64xbf16> to vector<128x64xbf16>
    %cst_18 = arith.constant dense<0.000000e+00> : vector<128x64xf32>
    %28 = tpu.matmul %25, %27, %cst_18 {dimension_numbers = #tpu.dot_dimension_numbers<[1], [0], [0], [1], [0, 0, 1, 1], [], []>} : vector<128x128xbf16>, vector<128x64xbf16>, vector<128x64xf32> -> vector<128x64xf32>
    %29 = arith.addf %15, %28 : vector<128x64xf32>
    %c1_i32_19 = arith.constant 1 : i32
    %30 = arith.addi %0, %c1_i32_19 : i32
    %c0_20 = arith.constant 0 : index
    %31 = arith.index_cast %30 : i32 to index
    %c1_21 = arith.constant 1 : index
    %c0_22 = arith.constant 0 : index
    %32 = vector.load %arg2[%c0_20, %31, %c1_21, %c0_22] : memref<1x18x18x64xbf16, #tpu.memory_space<vmem>>, vector<1x8x16x64xbf16>
    %33 = vector.shape_cast %32 : vector<1x8x16x64xbf16> to vector<8x16x64xbf16>
    %c1_i32_23 = arith.constant 1 : i32
    %34 = arith.addi %0, %c1_i32_23 : i32
    %c0_24 = arith.constant 0 : index
    %35 = arith.index_cast %34 : i32 to index
    %c2_25 = arith.constant 2 : index
    %c0_26 = arith.constant 0 : index
    %36 = vector.load %arg2[%c0_24, %35, %c2_25, %c0_26] : memref<1x18x18x64xbf16, #tpu.memory_space<vmem>>, vector<1x8x16x64xbf16>
    %37 = vector.shape_cast %36 : vector<1x8x16x64xbf16> to vector<8x16x64xbf16>
    %38 = tpu.concatenate %33, %37 in 2 : vector<8x16x64xbf16>, vector<8x16x64xbf16> -> vector<8x16x128xbf16>
    %39 = vector.shape_cast %38 : vector<8x16x128xbf16> to vector<128x128xbf16>
    %c2_27 = arith.constant 2 : index
    %c0_28 = arith.constant 0 : index
    %c0_29 = arith.constant 0 : index
    %40 = vector.load %arg3[%c2_27, %c0_28, %c0_29] : memref<5x128x64xbf16, #tpu.memory_space<vmem>>, vector<1x128x64xbf16>
    %41 = vector.shape_cast %40 : vector<1x128x64xbf16> to vector<128x64xbf16>
    %cst_30 = arith.constant dense<0.000000e+00> : vector<128x64xf32>
    %42 = tpu.matmul %39, %41, %cst_30 {dimension_numbers = #tpu.dot_dimension_numbers<[1], [0], [0], [1], [0, 0, 1, 1], [], []>} : vector<128x128xbf16>, vector<128x64xbf16>, vector<128x64xf32> -> vector<128x64xf32>
    %43 = arith.addf %29, %42 : vector<128x64xf32>
    %c2_i32 = arith.constant 2 : i32
    %44 = arith.addi %0, %c2_i32 : i32
    %c0_31 = arith.constant 0 : index
    %45 = arith.index_cast %44 : i32 to index
    %c0_32 = arith.constant 0 : index
    %c0_33 = arith.constant 0 : index
    %46 = vector.load %arg2[%c0_31, %45, %c0_32, %c0_33] : memref<1x18x18x64xbf16, #tpu.memory_space<vmem>>, vector<1x8x16x64xbf16>
    %47 = vector.shape_cast %46 : vector<1x8x16x64xbf16> to vector<8x16x64xbf16>
    %c2_i32_34 = arith.constant 2 : i32
    %48 = arith.addi %0, %c2_i32_34 : i32
    %c0_35 = arith.constant 0 : index
    %49 = arith.index_cast %48 : i32 to index
    %c1_36 = arith.constant 1 : index
    %c0_37 = arith.constant 0 : index
    %50 = vector.load %arg2[%c0_35, %49, %c1_36, %c0_37] : memref<1x18x18x64xbf16, #tpu.memory_space<vmem>>, vector<1x8x16x64xbf16>
    %51 = vector.shape_cast %50 : vector<1x8x16x64xbf16> to vector<8x16x64xbf16>
    %52 = tpu.concatenate %47, %51 in 2 : vector<8x16x64xbf16>, vector<8x16x64xbf16> -> vector<8x16x128xbf16>
    %53 = vector.shape_cast %52 : vector<8x16x128xbf16> to vector<128x128xbf16>
    %c3 = arith.constant 3 : index
    %c0_38 = arith.constant 0 : index
    %c0_39 = arith.constant 0 : index
    %54 = vector.load %arg3[%c3, %c0_38, %c0_39] : memref<5x128x64xbf16, #tpu.memory_space<vmem>>, vector<1x128x64xbf16>
    %55 = vector.shape_cast %54 : vector<1x128x64xbf16> to vector<128x64xbf16>
    %cst_40 = arith.constant dense<0.000000e+00> : vector<128x64xf32>
    %56 = tpu.matmul %53, %55, %cst_40 {dimension_numbers = #tpu.dot_dimension_numbers<[1], [0], [0], [1], [0, 0, 1, 1], [], []>} : vector<128x128xbf16>, vector<128x64xbf16>, vector<128x64xf32> -> vector<128x64xf32>
    %57 = arith.addf %43, %56 : vector<128x64xf32>
    %c2_i32_41 = arith.constant 2 : i32
    %58 = arith.addi %0, %c2_i32_41 : i32
    %c0_42 = arith.constant 0 : index
    %59 = arith.index_cast %58 : i32 to index
    %c2_43 = arith.constant 2 : index
    %c0_44 = arith.constant 0 : index
    %60 = vector.load %arg2[%c0_42, %59, %c2_43, %c0_44] : memref<1x18x18x64xbf16, #tpu.memory_space<vmem>>, vector<1x8x16x64xbf16>
    %61 = vector.shape_cast %60 : vector<1x8x16x64xbf16> to vector<8x16x64xbf16>
    %c2_i32_45 = arith.constant 2 : i32
    %62 = arith.addi %0, %c2_i32_45 : i32
    %c0_46 = arith.constant 0 : index
    %63 = arith.index_cast %62 : i32 to index
    %c2_47 = arith.constant 2 : index
    %c0_48 = arith.constant 0 : index
    %64 = vector.load %arg2[%c0_46, %63, %c2_47, %c0_48] : memref<1x18x18x64xbf16, #tpu.memory_space<vmem>>, vector<1x8x16x64xbf16>
    %65 = vector.shape_cast %64 : vector<1x8x16x64xbf16> to vector<8x16x64xbf16>
    %66 = tpu.concatenate %61, %65 in 2 : vector<8x16x64xbf16>, vector<8x16x64xbf16> -> vector<8x16x128xbf16>
    %67 = vector.shape_cast %66 : vector<8x16x128xbf16> to vector<128x128xbf16>
    %c4 = arith.constant 4 : index
    %c0_49 = arith.constant 0 : index
    %c0_50 = arith.constant 0 : index
    %68 = vector.load %arg3[%c4, %c0_49, %c0_50] : memref<5x128x64xbf16, #tpu.memory_space<vmem>>, vector<1x128x64xbf16>
    %69 = vector.shape_cast %68 : vector<1x128x64xbf16> to vector<128x64xbf16>
    %cst_51 = arith.constant dense<0.000000e+00> : vector<128x64xf32>
    %70 = tpu.matmul %67, %69, %cst_51 {dimension_numbers = #tpu.dot_dimension_numbers<[1], [0], [0], [1], [0, 0, 1, 1], [], []>} : vector<128x128xbf16>, vector<128x64xbf16>, vector<128x64xf32> -> vector<128x64xf32>
    %71 = arith.addf %57, %70 : vector<128x64xf32>
    %c0_52 = arith.constant 0 : index
    %c0_53 = arith.constant 0 : index
    %72 = vector.load %arg4[%c0_52, %c0_53] : memref<1x64xf32, #tpu.memory_space<vmem>>, vector<1x64xf32>
    %73 = vector.broadcast %72 : vector<1x64xf32> to vector<128x64xf32>
    %74 = arith.addf %71, %73 : vector<128x64xf32>
    %cst_54 = arith.constant dense<0.000000e+00> : vector<64xf32>
    %75 = vector.multi_reduction <add>, %74, %cst_54 [0] : vector<128x64xf32> to vector<64xf32>
    %76 = vector.shape_cast %75 : vector<64xf32> to vector<1x64xf32>
    %c0_55 = arith.constant 0 : index
    %c0_56 = arith.constant 0 : index
    %c0_57 = arith.constant 0 : index
    %c0_58 = arith.constant 0 : index
    %77 = vector.load %arg6[%c0_55, %c0_56, %c0_57, %c0_58] : memref<1x1x1x64xf32, #tpu.memory_space<vmem>>, vector<1x1x1x64xf32>
    %78 = vector.shape_cast %77 : vector<1x1x1x64xf32> to vector<1x64xf32>
    %79 = vector.shape_cast %76 : vector<1x64xf32> to vector<1x1x1x64xf32>
    tpu.vector_store %arg6[%c0_55, %c0_56, %c0_57, %c0_58], %79 {strides = array<i32>} : memref<1x1x1x64xf32, #tpu.memory_space<vmem>>, vector<1x1x1x64xf32>,
    %80 = arith.mulf %74, %74 : vector<128x64xf32>
    %cst_59 = arith.constant dense<0.000000e+00> : vector<64xf32>
    %81 = vector.multi_reduction <add>, %80, %cst_59 [0] : vector<128x64xf32> to vector<64xf32>
    %82 = vector.shape_cast %81 : vector<64xf32> to vector<1x64xf32>
    %c0_60 = arith.constant 0 : index
    %c0_61 = arith.constant 0 : index
    %c0_62 = arith.constant 0 : index
    %c0_63 = arith.constant 0 : index
    %83 = vector.load %arg7[%c0_60, %c0_61, %c0_62, %c0_63] : memref<1x1x1x64xf32, #tpu.memory_space<vmem>>, vector<1x1x1x64xf32>
    %84 = vector.shape_cast %83 : vector<1x1x1x64xf32> to vector<1x64xf32>
    %85 = vector.shape_cast %82 : vector<1x64xf32> to vector<1x1x1x64xf32>
    tpu.vector_store %arg7[%c0_60, %c0_61, %c0_62, %c0_63], %85 {strides = array<i32>} : memref<1x1x1x64xf32, #tpu.memory_space<vmem>>, vector<1x1x1x64xf32>,
    %86 = vector.shape_cast %74 : vector<128x64xf32> to vector<8x16x64xf32>
    %87 = arith.truncf %86 : vector<8x16x64xf32> to vector<8x16x64xbf16>
    %c0_64 = arith.constant 0 : index
    %c0_65 = arith.constant 0 : index
    %c0_66 = arith.constant 0 : index
    %c0_67 = arith.constant 0 : index
    %88 = vector.load %arg5[%c0_64, %c0_65, %c0_66, %c0_67] : memref<1x8x16x64xbf16, #tpu.memory_space<vmem>>, vector<1x8x16x64xbf16>
    %89 = vector.shape_cast %88 : vector<1x8x16x64xbf16> to vector<8x16x64xbf16>
    %90 = vector.shape_cast %87 : vector<8x16x64xbf16> to vector<1x8x16x64xbf16>
    tpu.vector_store %arg5[%c0_64, %c0_65, %c0_66, %c0_67], %90 {strides = array<i32>} : memref<1x8x16x64xbf16, #tpu.memory_space<vmem>>, vector<1x8x16x64xbf16>,
    return
  }
  func.func @transform_0(%arg0: i32, %arg1: i32) -> (i32, i32, i32, i32) {
    %c0_i32 = arith.constant 0 : i32
    %c0_i32_0 = arith.constant 0 : i32
    %c0_i32_1 = arith.constant 0 : i32
    %c0_i32_2 = arith.constant 0 : i32
    return %arg0, %c0_i32, %c0_i32_0, %c0_i32_1 : i32, i32, i32, i32
  }
  func.func @transform_1(%arg0: i32, %arg1: i32) -> (i32, i32, i32) {
    %c0_i32 = arith.constant 0 : i32
    %c0_i32_0 = arith.constant 0 : i32
    %c0_i32_1 = arith.constant 0 : i32
    %c0_i32_2 = arith.constant 0 : i32
    return %c0_i32, %c0_i32_0, %c0_i32_1 : i32, i32, i32
  }
  func.func @transform_2(%arg0: i32, %arg1: i32) -> (i32, i32) {
    %c0_i32 = arith.constant 0 : i32
    %c0_i32_0 = arith.constant 0 : i32
    %c0_i32_1 = arith.constant 0 : i32
    return %c0_i32, %c0_i32_0 : i32, i32
  }
  func.func @transform_3(%arg0: i32, %arg1: i32) -> (i32, i32, i32, i32) {
    %c0_i32 = arith.constant 0 : i32
    %c0_i32_0 = arith.constant 0 : i32
    %c0_i32_1 = arith.constant 0 : i32
    return %arg0, %arg1, %c0_i32, %c0_i32_0 : i32, i32, i32, i32
  }
  func.func @transform_4(%arg0: i32, %arg1: i32) -> (i32, i32, i32, i32) {
    %c0_i32 = arith.constant 0 : i32
    %c0_i32_0 = arith.constant 0 : i32
    %c0_i32_1 = arith.constant 0 : i32
    return %arg0, %arg1, %c0_i32, %c0_i32_0 : i32, i32, i32, i32
  }
  func.func @transform_5(%arg0: i32, %arg1: i32) -> (i32, i32, i32, i32) {
    %c0_i32 = arith.constant 0 : i32
    %c0_i32_0 = arith.constant 0 : i32
    %c0_i32_1 = arith.constant 0 : i32
    return %arg0, %arg1, %c0_i32, %c0_i32_0 : i32, i32, i32, i32
  }
}

module attributes {stable_mosaic.version = 11 : i64} {
  func.func @_conv_block2_kernel(%arg0: i32, %arg1: i32, %arg2: memref<1x9x9x64xbf16, #tpu.memory_space<vmem>>, %arg3: memref<1x9x9x64xbf16, #tpu.memory_space<vmem>>, %arg4: memref<1x9x9x64xbf16, #tpu.memory_space<vmem>>, %arg5: memref<1x9x9x64xbf16, #tpu.memory_space<vmem>>, %arg6: memref<5x128x12xbf16, #tpu.memory_space<vmem>>, %arg7: memref<1x12xf32, #tpu.memory_space<vmem>>, %arg8: memref<1x64xf32, #tpu.memory_space<vmem>>, %arg9: memref<1x64xf32, #tpu.memory_space<vmem>>, %arg10: memref<1xf32, #tpu.memory_space<smem>>, %arg11: memref<1x4x8x12xbf16, #tpu.memory_space<vmem>>) attributes {dimension_semantics = [#tpu.dimension_semantics<parallel>, #tpu.dimension_semantics<parallel>], iteration_bounds = array<i64: 2, 2>, scalar_prefetch = 0 : i64, scratch_operands = 0 : i64, tpu.core_type = #tpu.core_type<tc>, window_params = [{transform_indices = @transform_0, window_bounds = array<i64: 1, 9, 9, 64>}, {transform_indices = @transform_1, window_bounds = array<i64: 1, 9, 9, 64>}, {transform_indices = @transform_2, window_bounds = array<i64: 1, 9, 9, 64>}, {transform_indices = @transform_3, window_bounds = array<i64: 1, 9, 9, 64>}, {pipeline_mode = #tpu.pipeline_mode<synchronous>, transform_indices = @transform_4, window_bounds = array<i64: 5, 128, 12>}, {pipeline_mode = #tpu.pipeline_mode<synchronous>, transform_indices = @transform_5, window_bounds = array<i64: 1, 12>}, {pipeline_mode = #tpu.pipeline_mode<synchronous>, transform_indices = @transform_6, window_bounds = array<i64: 1, 64>}, {pipeline_mode = #tpu.pipeline_mode<synchronous>, transform_indices = @transform_7, window_bounds = array<i64: 1, 64>}, {transform_indices = @transform_8, window_bounds = array<i64: 1>}, {transform_indices = @transform_9, window_bounds = array<i64: 1, 4, 8, 12>}]} {
    %c4_i32 = arith.constant 4 : i32
    %0 = arith.muli %arg1, %c4_i32 : i32
    %c0 = arith.constant 0 : index
    %c0_0 = arith.constant 0 : index
    %1 = vector.load %arg8[%c0, %c0_0] : memref<1x64xf32, #tpu.memory_space<vmem>>, vector<1x64xf32>
    %c0_1 = arith.constant 0 : index
    %c0_2 = arith.constant 0 : index
    %2 = vector.load %arg9[%c0_1, %c0_2] : memref<1x64xf32, #tpu.memory_space<vmem>>, vector<1x64xf32>
    %c0_3 = arith.constant 0 : index
    %3 = memref.load %arg10[%c0_3] : memref<1xf32, #tpu.memory_space<smem>>
    %c0_4 = arith.constant 0 : index
    %4 = arith.index_cast %0 : i32 to index
    %c0_5 = arith.constant 0 : index
    %c0_6 = arith.constant 0 : index
    %5 = vector.load %arg2[%c0_4, %4, %c0_5, %c0_6] : memref<1x9x9x64xbf16, #tpu.memory_space<vmem>>, vector<1x5x9x64xbf16>
    %6 = vector.shape_cast %5 : vector<1x5x9x64xbf16> to vector<5x9x64xbf16>
    %7 = arith.extf %6 : vector<5x9x64xbf16> to vector<5x9x64xf32>
    %8 = vector.shape_cast %1 : vector<1x64xf32> to vector<1x1x64xf32>
    %9 = vector.broadcast %8 : vector<1x1x64xf32> to vector<5x9x64xf32>
    %10 = arith.mulf %7, %9 : vector<5x9x64xf32>
    %11 = vector.shape_cast %2 : vector<1x64xf32> to vector<1x1x64xf32>
    %12 = vector.broadcast %11 : vector<1x1x64xf32> to vector<5x9x64xf32>
    %13 = arith.addf %10, %12 : vector<5x9x64xf32>
    %cst = arith.constant 0.000000e+00 : f32
    %14 = vector.broadcast %cst : f32 to vector<5x9x64xf32>
    %15 = arith.cmpf oge, %13, %14 : vector<5x9x64xf32>
    %16 = vector.broadcast %3 : f32 to vector<5x9x64xf32>
    %17 = arith.mulf %16, %13 : vector<5x9x64xf32>
    %18 = arith.select %15, %13, %17 : vector<5x9x64xi1>, vector<5x9x64xf32>
    %19 = arith.truncf %18 : vector<5x9x64xf32> to vector<5x9x64xbf16>
    %c0_7 = arith.constant 0 : index
    %20 = arith.index_cast %0 : i32 to index
    %c0_8 = arith.constant 0 : index
    %c0_9 = arith.constant 0 : index
    %21 = vector.load %arg3[%c0_7, %20, %c0_8, %c0_9] : memref<1x9x9x64xbf16, #tpu.memory_space<vmem>>, vector<1x5x9x64xbf16>
    %22 = vector.shape_cast %21 : vector<1x5x9x64xbf16> to vector<5x9x64xbf16>
    %23 = arith.extf %22 : vector<5x9x64xbf16> to vector<5x9x64xf32>
    %24 = vector.shape_cast %1 : vector<1x64xf32> to vector<1x1x64xf32>
    %25 = vector.broadcast %24 : vector<1x1x64xf32> to vector<5x9x64xf32>
    %26 = arith.mulf %23, %25 : vector<5x9x64xf32>
    %27 = vector.shape_cast %2 : vector<1x64xf32> to vector<1x1x64xf32>
    %28 = vector.broadcast %27 : vector<1x1x64xf32> to vector<5x9x64xf32>
    %29 = arith.addf %26, %28 : vector<5x9x64xf32>
    %cst_10 = arith.constant 0.000000e+00 : f32
    %30 = vector.broadcast %cst_10 : f32 to vector<5x9x64xf32>
    %31 = arith.cmpf oge, %29, %30 : vector<5x9x64xf32>
    %32 = vector.broadcast %3 : f32 to vector<5x9x64xf32>
    %33 = arith.mulf %32, %29 : vector<5x9x64xf32>
    %34 = arith.select %31, %29, %33 : vector<5x9x64xi1>, vector<5x9x64xf32>
    %35 = arith.truncf %34 : vector<5x9x64xf32> to vector<5x9x64xbf16>
    %c0_11 = arith.constant 0 : index
    %36 = arith.index_cast %0 : i32 to index
    %c0_12 = arith.constant 0 : index
    %c0_13 = arith.constant 0 : index
    %37 = vector.load %arg4[%c0_11, %36, %c0_12, %c0_13] : memref<1x9x9x64xbf16, #tpu.memory_space<vmem>>, vector<1x5x9x64xbf16>
    %38 = vector.shape_cast %37 : vector<1x5x9x64xbf16> to vector<5x9x64xbf16>
    %39 = arith.extf %38 : vector<5x9x64xbf16> to vector<5x9x64xf32>
    %40 = vector.shape_cast %1 : vector<1x64xf32> to vector<1x1x64xf32>
    %41 = vector.broadcast %40 : vector<1x1x64xf32> to vector<5x9x64xf32>
    %42 = arith.mulf %39, %41 : vector<5x9x64xf32>
    %43 = vector.shape_cast %2 : vector<1x64xf32> to vector<1x1x64xf32>
    %44 = vector.broadcast %43 : vector<1x1x64xf32> to vector<5x9x64xf32>
    %45 = arith.addf %42, %44 : vector<5x9x64xf32>
    %cst_14 = arith.constant 0.000000e+00 : f32
    %46 = vector.broadcast %cst_14 : f32 to vector<5x9x64xf32>
    %47 = arith.cmpf oge, %45, %46 : vector<5x9x64xf32>
    %48 = vector.broadcast %3 : f32 to vector<5x9x64xf32>
    %49 = arith.mulf %48, %45 : vector<5x9x64xf32>
    %50 = arith.select %47, %45, %49 : vector<5x9x64xi1>, vector<5x9x64xf32>
    %51 = arith.truncf %50 : vector<5x9x64xf32> to vector<5x9x64xbf16>
    %c0_15 = arith.constant 0 : index
    %52 = arith.index_cast %0 : i32 to index
    %c0_16 = arith.constant 0 : index
    %c0_17 = arith.constant 0 : index
    %53 = vector.load %arg5[%c0_15, %52, %c0_16, %c0_17] : memref<1x9x9x64xbf16, #tpu.memory_space<vmem>>, vector<1x5x9x64xbf16>
    %54 = vector.shape_cast %53 : vector<1x5x9x64xbf16> to vector<5x9x64xbf16>
    %55 = arith.extf %54 : vector<5x9x64xbf16> to vector<5x9x64xf32>
    %56 = vector.shape_cast %1 : vector<1x64xf32> to vector<1x1x64xf32>
    %57 = vector.broadcast %56 : vector<1x1x64xf32> to vector<5x9x64xf32>
    %58 = arith.mulf %55, %57 : vector<5x9x64xf32>
    %59 = vector.shape_cast %2 : vector<1x64xf32> to vector<1x1x64xf32>
    %60 = vector.broadcast %59 : vector<1x1x64xf32> to vector<5x9x64xf32>
    %61 = arith.addf %58, %60 : vector<5x9x64xf32>
    %cst_18 = arith.constant 0.000000e+00 : f32
    %62 = vector.broadcast %cst_18 : f32 to vector<5x9x64xf32>
    %63 = arith.cmpf oge, %61, %62 : vector<5x9x64xf32>
    %64 = vector.broadcast %3 : f32 to vector<5x9x64xf32>
    %65 = arith.mulf %64, %61 : vector<5x9x64xf32>
    %66 = arith.select %63, %61, %65 : vector<5x9x64xi1>, vector<5x9x64xf32>
    %67 = arith.truncf %66 : vector<5x9x64xf32> to vector<5x9x64xbf16>
    %cst_19 = arith.constant 0.000000e+00 : f32
    %68 = vector.broadcast %cst_19 : f32 to vector<32x12xf32>
    %69 = vector.extract_strided_slice %19 {offsets = [0, 0, 0], sizes = [4, 8, 64], strides = [1, 1, 1]} : vector<5x9x64xbf16> to vector<4x8x64xbf16>
    %70 = vector.extract_strided_slice %35 {offsets = [0, 0, 0], sizes = [4, 8, 64], strides = [1, 1, 1]} : vector<5x9x64xbf16> to vector<4x8x64xbf16>
    %71 = tpu.concatenate %69, %70 in 2 : vector<4x8x64xbf16>, vector<4x8x64xbf16> -> vector<4x8x128xbf16>
    %72 = vector.shape_cast %71 : vector<4x8x128xbf16> to vector<32x128xbf16>
    %c0_20 = arith.constant 0 : index
    %c0_21 = arith.constant 0 : index
    %c0_22 = arith.constant 0 : index
    %73 = vector.load %arg6[%c0_20, %c0_21, %c0_22] : memref<5x128x12xbf16, #tpu.memory_space<vmem>>, vector<1x128x12xbf16>
    %74 = vector.shape_cast %73 : vector<1x128x12xbf16> to vector<128x12xbf16>
    %cst_23 = arith.constant dense<0.000000e+00> : vector<32x12xf32>
    %75 = tpu.matmul %72, %74, %cst_23 {dimension_numbers = #tpu.dot_dimension_numbers<[1], [0], [0], [1], [0, 0, 1, 1], [], []>} : vector<32x128xbf16>, vector<128x12xbf16>, vector<32x12xf32> -> vector<32x12xf32>
    %76 = arith.addf %68, %75 : vector<32x12xf32>
    %77 = vector.extract_strided_slice %19 {offsets = [0, 1, 0], sizes = [4, 8, 64], strides = [1, 1, 1]} : vector<5x9x64xbf16> to vector<4x8x64xbf16>
    %78 = vector.extract_strided_slice %51 {offsets = [0, 0, 0], sizes = [4, 8, 64], strides = [1, 1, 1]} : vector<5x9x64xbf16> to vector<4x8x64xbf16>
    %79 = tpu.concatenate %77, %78 in 2 : vector<4x8x64xbf16>, vector<4x8x64xbf16> -> vector<4x8x128xbf16>
    %80 = vector.shape_cast %79 : vector<4x8x128xbf16> to vector<32x128xbf16>
    %c1 = arith.constant 1 : index
    %c0_24 = arith.constant 0 : index
    %c0_25 = arith.constant 0 : index
    %81 = vector.load %arg6[%c1, %c0_24, %c0_25] : memref<5x128x12xbf16, #tpu.memory_space<vmem>>, vector<1x128x12xbf16>
    %82 = vector.shape_cast %81 : vector<1x128x12xbf16> to vector<128x12xbf16>
    %cst_26 = arith.constant dense<0.000000e+00> : vector<32x12xf32>
    %83 = tpu.matmul %80, %82, %cst_26 {dimension_numbers = #tpu.dot_dimension_numbers<[1], [0], [0], [1], [0, 0, 1, 1], [], []>} : vector<32x128xbf16>, vector<128x12xbf16>, vector<32x12xf32> -> vector<32x12xf32>
    %84 = arith.addf %76, %83 : vector<32x12xf32>
    %85 = vector.extract_strided_slice %67 {offsets = [0, 0, 0], sizes = [4, 8, 64], strides = [1, 1, 1]} : vector<5x9x64xbf16> to vector<4x8x64xbf16>
    %86 = vector.extract_strided_slice %51 {offsets = [0, 1, 0], sizes = [4, 8, 64], strides = [1, 1, 1]} : vector<5x9x64xbf16> to vector<4x8x64xbf16>
    %87 = tpu.concatenate %85, %86 in 2 : vector<4x8x64xbf16>, vector<4x8x64xbf16> -> vector<4x8x128xbf16>
    %88 = vector.shape_cast %87 : vector<4x8x128xbf16> to vector<32x128xbf16>
    %c2 = arith.constant 2 : index
    %c0_27 = arith.constant 0 : index
    %c0_28 = arith.constant 0 : index
    %89 = vector.load %arg6[%c2, %c0_27, %c0_28] : memref<5x128x12xbf16, #tpu.memory_space<vmem>>, vector<1x128x12xbf16>
    %90 = vector.shape_cast %89 : vector<1x128x12xbf16> to vector<128x12xbf16>
    %cst_29 = arith.constant dense<0.000000e+00> : vector<32x12xf32>
    %91 = tpu.matmul %88, %90, %cst_29 {dimension_numbers = #tpu.dot_dimension_numbers<[1], [0], [0], [1], [0, 0, 1, 1], [], []>} : vector<32x128xbf16>, vector<128x12xbf16>, vector<32x12xf32> -> vector<32x12xf32>
    %92 = arith.addf %84, %91 : vector<32x12xf32>
    %93 = vector.extract_strided_slice %19 {offsets = [1, 0, 0], sizes = [4, 8, 64], strides = [1, 1, 1]} : vector<5x9x64xbf16> to vector<4x8x64xbf16>
    %94 = vector.extract_strided_slice %35 {offsets = [1, 0, 0], sizes = [4, 8, 64], strides = [1, 1, 1]} : vector<5x9x64xbf16> to vector<4x8x64xbf16>
    %95 = tpu.concatenate %93, %94 in 2 : vector<4x8x64xbf16>, vector<4x8x64xbf16> -> vector<4x8x128xbf16>
    %96 = vector.shape_cast %95 : vector<4x8x128xbf16> to vector<32x128xbf16>
    %c3 = arith.constant 3 : index
    %c0_30 = arith.constant 0 : index
    %c0_31 = arith.constant 0 : index
    %97 = vector.load %arg6[%c3, %c0_30, %c0_31] : memref<5x128x12xbf16, #tpu.memory_space<vmem>>, vector<1x128x12xbf16>
    %98 = vector.shape_cast %97 : vector<1x128x12xbf16> to vector<128x12xbf16>
    %cst_32 = arith.constant dense<0.000000e+00> : vector<32x12xf32>
    %99 = tpu.matmul %96, %98, %cst_32 {dimension_numbers = #tpu.dot_dimension_numbers<[1], [0], [0], [1], [0, 0, 1, 1], [], []>} : vector<32x128xbf16>, vector<128x12xbf16>, vector<32x12xf32> -> vector<32x12xf32>
    %100 = arith.addf %92, %99 : vector<32x12xf32>
    %101 = vector.extract_strided_slice %19 {offsets = [1, 1, 0], sizes = [4, 8, 64], strides = [1, 1, 1]} : vector<5x9x64xbf16> to vector<4x8x64xbf16>
    %102 = vector.extract_strided_slice %19 {offsets = [1, 1, 0], sizes = [4, 8, 64], strides = [1, 1, 1]} : vector<5x9x64xbf16> to vector<4x8x64xbf16>
    %103 = tpu.concatenate %101, %102 in 2 : vector<4x8x64xbf16>, vector<4x8x64xbf16> -> vector<4x8x128xbf16>
    %104 = vector.shape_cast %103 : vector<4x8x128xbf16> to vector<32x128xbf16>
    %c4 = arith.constant 4 : index
    %c0_33 = arith.constant 0 : index
    %c0_34 = arith.constant 0 : index
    %105 = vector.load %arg6[%c4, %c0_33, %c0_34] : memref<5x128x12xbf16, #tpu.memory_space<vmem>>, vector<1x128x12xbf16>
    %106 = vector.shape_cast %105 : vector<1x128x12xbf16> to vector<128x12xbf16>
    %cst_35 = arith.constant dense<0.000000e+00> : vector<32x12xf32>
    %107 = tpu.matmul %104, %106, %cst_35 {dimension_numbers = #tpu.dot_dimension_numbers<[1], [0], [0], [1], [0, 0, 1, 1], [], []>} : vector<32x128xbf16>, vector<128x12xbf16>, vector<32x12xf32> -> vector<32x12xf32>
    %108 = arith.addf %100, %107 : vector<32x12xf32>
    %c0_36 = arith.constant 0 : index
    %c0_37 = arith.constant 0 : index
    %109 = vector.load %arg7[%c0_36, %c0_37] : memref<1x12xf32, #tpu.memory_space<vmem>>, vector<1x12xf32>
    %110 = vector.broadcast %109 : vector<1x12xf32> to vector<32x12xf32>
    %111 = arith.addf %108, %110 : vector<32x12xf32>
    %112 = vector.shape_cast %111 : vector<32x12xf32> to vector<4x8x12xf32>
    %113 = arith.truncf %112 : vector<4x8x12xf32> to vector<4x8x12xbf16>
    %c0_38 = arith.constant 0 : index
    %c0_39 = arith.constant 0 : index
    %c0_40 = arith.constant 0 : index
    %c0_41 = arith.constant 0 : index
    %114 = vector.load %arg11[%c0_38, %c0_39, %c0_40, %c0_41] : memref<1x4x8x12xbf16, #tpu.memory_space<vmem>>, vector<1x4x8x12xbf16>
    %115 = vector.shape_cast %114 : vector<1x4x8x12xbf16> to vector<4x8x12xbf16>
    %116 = vector.shape_cast %113 : vector<4x8x12xbf16> to vector<1x4x8x12xbf16>
    tpu.vector_store %arg11[%c0_38, %c0_39, %c0_40, %c0_41], %116 {strides = array<i32>} : memref<1x4x8x12xbf16, #tpu.memory_space<vmem>>, vector<1x4x8x12xbf16>,
    return
  }
  func.func @transform_0(%arg0: i32, %arg1: i32) -> (i32, i32, i32, i32) {
    %c0_i32 = arith.constant 0 : i32
    %c0_i32_0 = arith.constant 0 : i32
    %c0_i32_1 = arith.constant 0 : i32
    %c0_i32_2 = arith.constant 0 : i32
    return %arg0, %c0_i32, %c0_i32_0, %c0_i32_1 : i32, i32, i32, i32
  }
  func.func @transform_1(%arg0: i32, %arg1: i32) -> (i32, i32, i32, i32) {
    %c0_i32 = arith.constant 0 : i32
    %c0_i32_0 = arith.constant 0 : i32
    %c0_i32_1 = arith.constant 0 : i32
    %c0_i32_2 = arith.constant 0 : i32
    return %arg0, %c0_i32, %c0_i32_0, %c0_i32_1 : i32, i32, i32, i32
  }
  func.func @transform_2(%arg0: i32, %arg1: i32) -> (i32, i32, i32, i32) {
    %c0_i32 = arith.constant 0 : i32
    %c0_i32_0 = arith.constant 0 : i32
    %c0_i32_1 = arith.constant 0 : i32
    %c0_i32_2 = arith.constant 0 : i32
    return %arg0, %c0_i32, %c0_i32_0, %c0_i32_1 : i32, i32, i32, i32
  }
  func.func @transform_3(%arg0: i32, %arg1: i32) -> (i32, i32, i32, i32) {
    %c0_i32 = arith.constant 0 : i32
    %c0_i32_0 = arith.constant 0 : i32
    %c0_i32_1 = arith.constant 0 : i32
    %c0_i32_2 = arith.constant 0 : i32
    return %arg0, %c0_i32, %c0_i32_0, %c0_i32_1 : i32, i32, i32, i32
  }
  func.func @transform_4(%arg0: i32, %arg1: i32) -> (i32, i32, i32) {
    %c0_i32 = arith.constant 0 : i32
    %c0_i32_0 = arith.constant 0 : i32
    %c0_i32_1 = arith.constant 0 : i32
    %c0_i32_2 = arith.constant 0 : i32
    return %c0_i32, %c0_i32_0, %c0_i32_1 : i32, i32, i32
  }
  func.func @transform_5(%arg0: i32, %arg1: i32) -> (i32, i32) {
    %c0_i32 = arith.constant 0 : i32
    %c0_i32_0 = arith.constant 0 : i32
    %c0_i32_1 = arith.constant 0 : i32
    return %c0_i32, %c0_i32_0 : i32, i32
  }
  func.func @transform_6(%arg0: i32, %arg1: i32) -> (i32, i32) {
    %c0_i32 = arith.constant 0 : i32
    %c0_i32_0 = arith.constant 0 : i32
    %c0_i32_1 = arith.constant 0 : i32
    return %c0_i32, %c0_i32_0 : i32, i32
  }
  func.func @transform_7(%arg0: i32, %arg1: i32) -> (i32, i32) {
    %c0_i32 = arith.constant 0 : i32
    %c0_i32_0 = arith.constant 0 : i32
    %c0_i32_1 = arith.constant 0 : i32
    return %c0_i32, %c0_i32_0 : i32, i32
  }
  func.func @transform_8(%arg0: i32, %arg1: i32) -> i32 {
    %c0_i32 = arith.constant 0 : i32
    %c0_i32_0 = arith.constant 0 : i32
    return %c0_i32 : i32
  }
  func.func @transform_9(%arg0: i32, %arg1: i32) -> (i32, i32, i32, i32) {
    %c0_i32 = arith.constant 0 : i32
    %c0_i32_0 = arith.constant 0 : i32
    %c0_i32_1 = arith.constant 0 : i32
    return %arg0, %arg1, %c0_i32, %c0_i32_0 : i32, i32, i32, i32
  }
}

module attributes {stable_mosaic.version = 11 : i64} {
  func.func @_l2norm_add_kernel(%arg0: i32, %arg1: i32, %arg2: memref<1x3x128xbf16, #tpu.memory_space<vmem>>, %arg3: memref<1x3x128xf32, #tpu.memory_space<vmem>>, %arg4: memref<1x3x128xf32, #tpu.memory_space<vmem>>) attributes {dimension_semantics = [#tpu.dimension_semantics<parallel>, #tpu.dimension_semantics<parallel>], iteration_bounds = array<i64: 2, 2>, scalar_prefetch = 0 : i64, scratch_operands = 0 : i64, tpu.core_type = #tpu.core_type<tc>, window_params = [{transform_indices = @transform_0, window_bounds = array<i64: 1, 3, 128>}, {transform_indices = @transform_1, window_bounds = array<i64: 1, 3, 128>}, {transform_indices = @transform_2, window_bounds = array<i64: 1, 3, 128>}]} {
    %c0 = arith.constant 0 : index
    %c0_0 = arith.constant 0 : index
    %c0_1 = arith.constant 0 : index
    %0 = vector.load %arg2[%c0, %c0_0, %c0_1] : memref<1x3x128xbf16, #tpu.memory_space<vmem>>, vector<1x3x128xbf16>
    %1 = vector.shape_cast %0 : vector<1x3x128xbf16> to vector<3x128xbf16>
    %2 = arith.extf %1 : vector<3x128xbf16> to vector<3x128xf32>
    %3 = arith.mulf %2, %2 : vector<3x128xf32>
    %cst = arith.constant dense<0.000000e+00> : vector<128xf32>
    %4 = vector.multi_reduction <add>, %3, %cst [0] : vector<3x128xf32> to vector<128xf32>
    %5 = vector.shape_cast %4 : vector<128xf32> to vector<1x128xf32>
    %cst_2 = arith.constant 1.000000e-24 : f32
    %6 = vector.broadcast %cst_2 : f32 to vector<1x128xf32>
    %7 = arith.maximumf %5, %6 : vector<1x128xf32>
    %8 = math.rsqrt %7 : vector<1x128xf32>
    %c0_3 = arith.constant 0 : index
    %c0_4 = arith.constant 0 : index
    %c0_5 = arith.constant 0 : index
    %9 = vector.load %arg3[%c0_3, %c0_4, %c0_5] : memref<1x3x128xf32, #tpu.memory_space<vmem>>, vector<1x3x128xf32>
    %10 = vector.shape_cast %9 : vector<1x3x128xf32> to vector<3x128xf32>
    %11 = vector.broadcast %8 : vector<1x128xf32> to vector<3x128xf32>
    %12 = arith.mulf %2, %11 : vector<3x128xf32>
    %13 = arith.addf %10, %12 : vector<3x128xf32>
    %c0_6 = arith.constant 0 : index
    %c0_7 = arith.constant 0 : index
    %c0_8 = arith.constant 0 : index
    %14 = vector.load %arg4[%c0_6, %c0_7, %c0_8] : memref<1x3x128xf32, #tpu.memory_space<vmem>>, vector<1x3x128xf32>
    %15 = vector.shape_cast %14 : vector<1x3x128xf32> to vector<3x128xf32>
    %16 = vector.shape_cast %13 : vector<3x128xf32> to vector<1x3x128xf32>
    tpu.vector_store %arg4[%c0_6, %c0_7, %c0_8], %16 {strides = array<i32>} : memref<1x3x128xf32, #tpu.memory_space<vmem>>, vector<1x3x128xf32>,
    return
  }
  func.func @transform_0(%arg0: i32, %arg1: i32) -> (i32, i32, i32) {
    %c0_i32 = arith.constant 0 : i32
    %c0_i32_0 = arith.constant 0 : i32
    return %arg0, %c0_i32, %arg1 : i32, i32, i32
  }
  func.func @transform_1(%arg0: i32, %arg1: i32) -> (i32, i32, i32) {
    %c0_i32 = arith.constant 0 : i32
    %c0_i32_0 = arith.constant 0 : i32
    return %arg0, %c0_i32, %arg1 : i32, i32, i32
  }
  func.func @transform_2(%arg0: i32, %arg1: i32) -> (i32, i32, i32) {
    %c0_i32 = arith.constant 0 : i32
    %c0_i32_0 = arith.constant 0 : i32
    return %arg0, %c0_i32, %arg1 : i32, i32, i32
  }
}

</mosaic_0001>

<llo_original>
// kernel: compression_network_forward.4
$region0: #{compression_network_forward.4}
  #allocation0 [shape = 'u32[]', space=smem, size = 0x4, offset = 0x4, fixed_abs, tag = 'smem constant byte address 0x4 - core index']
  #allocation1 [shape = 'u32[144,128]{1,0:T(1,128)}', space=vmem, size = 0x12000, scoped, tag = 'internal scratch']
  #allocation2 [shape = 'f32[1]{0:T(128)S(6)}', space=smem, size = 0x200, scoped, tag = 'scoped memory for compression_network_forward.4']
  %s0 = inlined_call_operand.vmem [shape: bf16[2,16,16,128], index: 0, kind: input, shape index: {}]
  %s1 = inlined_call_operand.vmem [shape: bf16[128,64], index: 1, kind: input, shape index: {}]
  %s2 = inlined_call_operand.vmem [shape: f32[1,64], index: 2, kind: input, shape index: {}]
  %s3 = inlined_call_operand.<no memory space> [shape: f32[1], index: 3, kind: input, shape index: {}]
  %s4 = inlined_call_operand.vmem [shape: bf16[2,16,16,64], index: 4, kind: output, shape index: {}]
  %s5 = sld [smem:[#allocation0]]
  $region49: #{compression_network_forward.4} parent=0
    _
  %s7 = ssub.s32 1, %s5
  %s8 = scalar_select 0, %s7, %s5
  %9 = sst [smem:[#allocation2]] %s3
  loop: start=0, step=1, limit=6
  $region2: #{compression_network_forward.4} parent=0 // loop_pre_header
    _
  $region3: #{compression_network_forward.4} parent=0 // loop_header
    %s11 = sphi 0, %s15
    %p12 = scmp.ge.s32.totalorder %s11, 6
    %s18 = sphi 0, %s30
    %s19 = sphi 0, %s26
    %s20 = sphi 0, %s18
    %s21 = sphi 0, %s19
    %s22 = sphi 0, %s20
    %s23 = sphi 0, %s21
    %s35 = sphi 0, %s37
    %s38 = sphi 0, %s35
    %s39 = sphi 0, %s38
    %s55 = sphi 0, %s39
    %s59 = sphi 0, %s59
    %s61 = sphi 0, %s59
    %s62 = sphi 0, %s61
    %s76 = sphi 0, %s62
    %s80 = sphi 0, %s80
    %s82 = sphi 0, %s80
    %s83 = sphi 0, %s82
    %s97 = sphi 0, %s83
    %s101 = sphi 0, %s101
    %s103 = sphi 0, %s101
    %s104 = sphi 0, %s103
    %s118 = sphi 0, %s104
    %s126 = sphi 0, %s128
    %s129 = sphi 0, %s126
    %s130 = sphi 0, %s129
    %s146 = sphi 0, %s130
  $region4: #{compression_network_forward.4} parent=0 // loop_header_branch
    %14 = sbr.rel (%p12) target = $region8
  $region5: #{compression_network_forward.4} parent=0 // loop_body
    %s16 = ssub.s32 %s11, 1
    %s17 = ssub.s32 %s11, 2
    %s24 = sadd.s32 1, %s19
    %p25 = scmp.ge.s32.totalorder %s24, 2
    %s26 = scalar_select %p25, 0, %s24
    %s27 = sadd.s32 1, %s18
    %s28 = scalar_select %p25, %s27, %s18
    %p29 = scmp.ge.s32.totalorder %s28, 2
    %s30 = scalar_select %p29, 0, %s28
    %s31 = ssub.s32 %s18, %s30
    %s32 = ssub.s32 %s19, %s26
    %s33 = sor.u32 %s31, %s32
    %p34 = scmp.eq.s32.totalorder %s33, 0
    %s36 = sadd.s32 %s35, 1
    %s37 = scalar_select %p34, %s35, %s36
    %p40 = pneg %p34
    %p41 = scmp.eq.s32.totalorder %s11, 3
    %p42 = por %p40, %p41
    %p43 = scmp.ne.s32.totalorder %s35, %s38
    %p44 = scmp.eq.s32.totalorder %s11, 0
    %p45 = por %p43, %p44
    %p46 = scmp.ne.s32.totalorder %s35, %s38
    %p47 = scmp.eq.s32.totalorder %s16, 3
    %p48 = por %p46, %p47
    %p49 = scmp.ne.s32.totalorder %s38, %s39
    %p50 = scmp.eq.s32.totalorder %s16, 0
    %p51 = por %p49, %p50
    %p52 = scmp.ne.s32.totalorder %s38, %s39
    %p53 = scmp.eq.s32.totalorder %s17, 3
    %p54 = por %p52, %p53
    %p56 = scmp.ne.s32.totalorder %s39, %s55
    %p57 = scmp.eq.s32.totalorder %s17, 0
    %p58 = por %p56, %p57
    %s60 = sadd.s32 %s59, 1
    %p63 = scmp.eq.s32.totalorder %s11, 3
    %p64 = scmp.ne.s32.totalorder %s59, %s61
    %p65 = scmp.eq.s32.totalorder %s11, 0
    %p66 = por %p64, %p65
    %p67 = scmp.ne.s32.totalorder %s59, %s61
    %p68 = scmp.eq.s32.totalorder %s16, 3
    %p69 = por %p67, %p68
    %p70 = scmp.ne.s32.totalorder %s61, %s62
    %p71 = scmp.eq.s32.totalorder %s16, 0
    %p72 = por %p70, %p71
    %p73 = scmp.ne.s32.totalorder %s61, %s62
    %p74 = scmp.eq.s32.totalorder %s17, 3
    %p75 = por %p73, %p74
    %p77 = scmp.ne.s32.totalorder %s62, %s76
    %p78 = scmp.eq.s32.totalorder %s17, 0
    %p79 = por %p77, %p78
    %s81 = sadd.s32 %s80, 1
    %p84 = scmp.eq.s32.totalorder %s11, 3
    %p85 = scmp.ne.s32.totalorder %s80, %s82
    %p86 = scmp.eq.s32.totalorder %s11, 0
    %p87 = por %p85, %p86
    %p88 = scmp.ne.s32.totalorder %s80, %s82
    %p89 = scmp.eq.s32.totalorder %s16, 3
    %p90 = por %p88, %p89
    %p91 = scmp.ne.s32.totalorder %s82, %s83
    %p92 = scmp.eq.s32.totalorder %s16, 0
    %p93 = por %p91, %p92
    %p94 = scmp.ne.s32.totalorder %s82, %s83
    %p95 = scmp.eq.s32.totalorder %s17, 3
    %p96 = por %p94, %p95
    %p98 = scmp.ne.s32.totalorder %s83, %s97
    %p99 = scmp.eq.s32.totalorder %s17, 0
    %p100 = por %p98, %p99
    %s102 = sadd.s32 %s101, 1
    %p105 = scmp.eq.s32.totalorder %s11, 3
    %p106 = scmp.ne.s32.totalorder %s101, %s103
    %p107 = scmp.eq.s32.totalorder %s11, 0
    %p108 = por %p106, %p107
    %p109 = scmp.ne.s32.totalorder %s101, %s103
    %p110 = scmp.eq.s32.totalorder %s16, 3
    %p111 = por %p109, %p110
    %p112 = scmp.ne.s32.totalorder %s103, %s104
    %p113 = scmp.eq.s32.totalorder %s16, 0
    %p114 = por %p112, %p113
    %p115 = scmp.ne.s32.totalorder %s103, %s104
    %p116 = scmp.eq.s32.totalorder %s17, 3
    %p117 = por %p115, %p116
    %p119 = scmp.ne.s32.totalorder %s104, %s118
    %p120 = scmp.eq.s32.totalorder %s17, 0
    %p121 = por %p119, %p120
    %s122 = ssub.s32 %s18, %s30
    %s123 = ssub.s32 %s19, %s26
    %s124 = sor.u32 %s122, %s123
    %p125 = scmp.eq.s32.totalorder %s124, 0
    %s127 = sadd.s32 %s126, 1
    %s128 = scalar_select %p125, %s126, %s127
    %p131 = pneg %p125
    %p132 = scmp.eq.s32.totalorder %s11, 3
    %p133 = por %p131, %p132
    %p134 = scmp.ne.s32.totalorder %s126, %s129
    %p135 = scmp.eq.s32.totalorder %s11, 0
    %p136 = por %p134, %p135
    %p137 = scmp.ne.s32.totalorder %s126, %s129
    %p138 = scmp.eq.s32.totalorder %s16, 3
    %p139 = por %p137, %p138
    %p140 = scmp.ne.s32.totalorder %s129, %s130
    %p141 = scmp.eq.s32.totalorder %s16, 0
    %p142 = por %p140, %p141
    %p143 = scmp.ne.s32.totalorder %s129, %s130
    %p144 = scmp.eq.s32.totalorder %s17, 3
    %p145 = por %p143, %p144
    %p147 = scmp.ne.s32.totalorder %s130, %s146
    %p148 = scmp.eq.s32.totalorder %s17, 0
    %p149 = por %p147, %p148
    %p150 = scmp.le.s32.totalorder 1, %s11
    %p151 = scmp.lt.s32.totalorder %s11, 5
    %p152 = pnand %p150, %p151
    %p153 = pneg %p152
    // Predicated region
    $region9: #{compression_network_forward.4} parent=5 // pred_check
      _
    $region10: #{compression_network_forward.4} parent=5 // pred_check_branch
      %155 = sbr.rel (%p152) target = $region12
    $region11: #{compression_network_forward.4} parent=5 // pred_region
      %s156 = ssub.s32 %s11, 1
      // Predicated region
      $region13: #{compression_network_forward.4} parent=11 // pred_check
        %p157 = pneg %p72
      $region14: #{compression_network_forward.4} parent=11 // pred_check_branch
        %159 = sbr.rel (%p157) target = $region16
      $region15: #{compression_network_forward.4} parent=11 // pred_region
        _
      $region16: #{compression_network_forward.4} parent=11 // pred_fallthru
        _
      // Predicated region
      $region17: #{compression_network_forward.4} parent=11 // pred_check
        %p160 = pneg %p93
      $region18: #{compression_network_forward.4} parent=11 // pred_check_branch
        %162 = sbr.rel (%p160) target = $region20
      $region19: #{compression_network_forward.4} parent=11 // pred_region
        _
      $region20: #{compression_network_forward.4} parent=11 // pred_fallthru
        _
      // Predicated region
      $region21: #{compression_network_forward.4} parent=11 // pred_check
        %p163 = pneg %p114
      $region22: #{compression_network_forward.4} parent=11 // pred_check_branch
        %165 = sbr.rel (%p163) target = $region24
      $region23: #{compression_network_forward.4} parent=11 // pred_region
        _
      $region24: #{compression_network_forward.4} parent=11 // pred_fallthru
        _
    $region12: #{compression_network_forward.4} parent=5 // pred_fallthru
      _
    %p166 = scmp.lt.s32.totalorder %s11, 4
    // Predicated region
    $region25: #{compression_network_forward.4} parent=5 // pred_check
      %p167 = pneg %p166
    $region26: #{compression_network_forward.4} parent=5 // pred_check_branch
      %169 = sbr.rel (%p167) target = $region28
    $region27: #{compression_network_forward.4} parent=5 // pred_region
      // Predicated region
      $region29: #{compression_network_forward.4} parent=27 // pred_check
        %p170 = pneg %p45
      $region30: #{compression_network_forward.4} parent=27 // pred_check_branch
        %172 = sbr.rel (%p170) target = $region32
      $region31: #{compression_network_forward.4} parent=27 // pred_region
        %s173 = smul.u32 8, %s19
        %p174 = scmp.lt.s32.totalorder %s18, 1
        %s175 = scalar_select %p174, %s18, 1
        %p176 = scmp.lt.s32.totalorder %s173, 15
        %s177 = scalar_select %p176, %s173, 15
        %s178 = smul.addr %s177, 2
        %s179 = smul.addr %s175, 32
        %s180 = sadd.s32 %s178, %s179
        %s181 = smul.addr %s180, 4
        %s182 = scalar_lea.vmem %s0, %s181
        %s183 = smul.u32 8, %s19
      $region32: #{compression_network_forward.4} parent=27 // pred_fallthru
        _
    $region28: #{compression_network_forward.4} parent=5 // pred_fallthru
      _
    %p184 = scmp.le.s32.totalorder 1, %s11
    %p185 = scmp.lt.s32.totalorder %s11, 5
    %p186 = pnand %p184, %p185
    %p187 = pneg %p186
    // Predicated region
    $region33: #{compression_network_forward.4} parent=5 // pred_check
      _
    $region34: #{compression_network_forward.4} parent=5 // pred_check_branch
      %189 = sbr.rel (%p186) target = $region36
    $region35: #{compression_network_forward.4} parent=5 // pred_region
      %s190 = ssub.s32 %s11, 1
      %s191 = smul.u32 8, %s21
      %p192 = scmp.lt.s32.totalorder %s20, 1
      %s193 = scalar_select %p192, %s20, 1
      %p194 = scmp.lt.s32.totalorder %s191, 15
      %s195 = scalar_select %p194, %s191, 15
      %s196 = smul.addr %s195, 2
      %s197 = smul.addr %s193, 32
      %s198 = sadd.s32 %s196, %s197
      %s199 = smul.addr %s198, 4
      %s200 = scalar_lea.vmem %s0, %s199
      %p201 = pneg %p51
      %p202 = pneg %p48
      %p203 = pneg %p72
      %p204 = pneg %p69
      %p205 = pneg %p93
      %p206 = pneg %p90
      %p207 = pneg %p114
      %p208 = pneg %p111
      %p209 = pneg %p142
      %p210 = pneg %p139
      %s211 = smul.u32 8, %s21
      %p212 = scmp.lt.s32.totalorder %s20, 1
      %s213 = scalar_select %p212, %s20, 1
      %p214 = scmp.lt.s32.totalorder %s211, 15
      %s215 = scalar_select %p214, %s211, 15
      %s216 = smul.addr %s215, 2
      %s217 = smul.addr %s213, 32
      %s218 = sadd.s32 %s216, %s217
      %s219 = smul.addr %s218, 4
      %s220 = scalar_lea.vmem %s4, %s219
      %s221 = smul.u32 8, %s21
      %p222 = scmp.lt.s32.totalorder %s20, 1
      %s223 = scalar_select %p222, %s20, 1
      %p224 = scmp.lt.s32.totalorder %s221, 15
      %s225 = scalar_select %p224, %s221, 15
      %s226 = smul.addr %s225, 2
      %s227 = smul.addr %s223, 32
      %s228 = sadd.s32 %s226, %s227
      %s229 = smul.addr %s228, 4
      %s230 = scalar_lea.vmem %s0, %s229
      %s231 = smul.u32 8, %s21
      %s232 = smul.u32 8, %s21
      %p233 = scmp.lt.s32.totalorder %s20, 1
      %s234 = scalar_select %p233, %s20, 1
      %p235 = scmp.lt.s32.totalorder %s232, 15
      %s236 = scalar_select %p235, %s232, 15
      %s237 = smul.addr %s236, 2
      %s238 = smul.addr %s234, 32
      %s239 = sadd.s32 %s237, %s238
      %s240 = smul.addr %s239, 4
      %s241 = scalar_lea.vmem %s4, %s240
      %s242 = smul.u32 8, %s21
      %v244 = vld [vmem:[%s230] sm:$0xf]
      %v245 = vld [vmem:[%s230 + $0x4] sm:$0xf]
      %v246 = vld [vmem:[%s230 + $0x8] sm:$0xf]
      %v247 = vld [vmem:[%s230 + $0xc] sm:$0xf]
      %v248 = vld [vmem:[%s230 + $0x10] sm:$0xf]
      %v249 = vld [vmem:[%s230 + $0x14] sm:$0xf]
      %v250 = vld [vmem:[%s230 + $0x18] sm:$0xf]
      %v251 = vld [vmem:[%s230 + $0x1c] sm:$0xf]
      %v252 = vld [vmem:[%s230 + $0x20] sm:$0xf]
      %v253 = vld [vmem:[%s230 + $0x24] sm:$0xf]
      %v254 = vld [vmem:[%s230 + $0x28] sm:$0xf]
      %v255 = vld [vmem:[%s230 + $0x2c] sm:$0xf]
      %v256 = vld [vmem:[%s230 + $0x30] sm:$0xf]
      %v257 = vld [vmem:[%s230 + $0x34] sm:$0xf]
      %v258 = vld [vmem:[%s230 + $0x38] sm:$0xf]
      %v259 = vld [vmem:[%s230 + $0x3c] sm:$0xf]
      %v260 = vld [vmem:[%s1] sm:$0xf]
      %v261 = vld [vmem:[%s1 + $0x4] sm:$0xf]
      %v262 = vld [vmem:[%s1 + $0x8] sm:$0xf]
      %v263 = vld [vmem:[%s1 + $0xc] sm:$0xf]
      %v264 = vld [vmem:[%s1 + $0x10] sm:$0xf]
      %v265 = vld [vmem:[%s1 + $0x14] sm:$0xf]
      %v266 = vld [vmem:[%s1 + $0x18] sm:$0xf]
      %v267 = vld [vmem:[%s1 + $0x1c] sm:$0xf]
      %v268 = vld [vmem:[%s1 + $0x20] sm:$0xf]
      %v269 = vld [vmem:[%s1 + $0x24] sm:$0xf]
      %v270 = vld [vmem:[%s1 + $0x28] sm:$0xf]
      %v271 = vld [vmem:[%s1 + $0x2c] sm:$0xf]
      %v272 = vld [vmem:[%s1 + $0x30] sm:$0xf]
      %v273 = vld [vmem:[%s1 + $0x34] sm:$0xf]
      %v274 = vld [vmem:[%s1 + $0x38] sm:$0xf]
      %v275 = vld [vmem:[%s1 + $0x3c] sm:$0xf]
      %v276 = vld [vmem:[%s2] sm:$0x1]
      %v278 = vlaneseq
      %v279 = vshrl.u32 %v278, 7
      %v280 = vsub.s32 0, %v279
      %v281 = vrot.slane %v276, %v280
      %v299 = vunpack.c.l.b16 %v244
      %v300 = vunpack.c.l.b16 %v245
      %v301 = vunpack.c.l.b16 %v246
      %v302 = vunpack.c.l.b16 %v247
      %v303 = vunpack.c.l.b16 %v248
      %v304 = vunpack.c.l.b16 %v249
      %v305 = vunpack.c.l.b16 %v250
      %v306 = vunpack.c.l.b16 %v251
      %v307 = vunpack.c.l.b16 %v252
      %v308 = vunpack.c.l.b16 %v253
      %v309 = vunpack.c.l.b16 %v254
      %v310 = vunpack.c.l.b16 %v255
      %v311 = vunpack.c.l.b16 %v256
      %v312 = vunpack.c.l.b16 %v257
      %v313 = vunpack.c.l.b16 %v258
      %v314 = vunpack.c.l.b16 %v259
      %v315 = vpack.c.b16 %v300, %v299
      %v316 = vpack.c.b16 %v302, %v301
      %v317 = vpack.c.b16 %v304, %v303
      %v318 = vpack.c.b16 %v306, %v305
      %v319 = vpack.c.b16 %v308, %v307
      %v320 = vpack.c.b16 %v310, %v309
      %v321 = vpack.c.b16 %v312, %v311
      %v322 = vpack.c.b16 %v314, %v313
      %v347 = vunpack.c.l.b16 %v260
      %v348 = vunpack.c.l.b16 %v261
      %v349 = vunpack.c.l.b16 %v262
      %v350 = vunpack.c.l.b16 %v263
      %v351 = vunpack.c.l.b16 %v264
      %v352 = vunpack.c.l.b16 %v265
      %v353 = vunpack.c.l.b16 %v266
      %v354 = vunpack.c.l.b16 %v267
      %v355 = vunpack.c.l.b16 %v268
      %v356 = vunpack.c.l.b16 %v269
      %v357 = vunpack.c.l.b16 %v270
      %v358 = vunpack.c.l.b16 %v271
      %v359 = vunpack.c.l.b16 %v272
      %v360 = vunpack.c.l.b16 %v273
      %v361 = vunpack.c.l.b16 %v274
      %v362 = vunpack.c.l.b16 %v275
      %v363 = vpack.c.b16 %v348, %v347
      %v364 = vpack.c.b16 %v350, %v349
      %v365 = vpack.c.b16 %v352, %v351
      %v366 = vpack.c.b16 %v354, %v353
      %v367 = vpack.c.b16 %v356, %v355
      %v368 = vpack.c.b16 %v358, %v357
      %v369 = vpack.c.b16 %v360, %v359
      %v370 = vpack.c.b16 %v362, %v361
      %379 = vmatprep.subr.bf16.mxu0 0
      %380 = vmatpush1.bf16.msra.mxu0 %v363
      %381 = vmatprep.subr.bf16.mxu0 0
      %382 = vmatpush1.bf16.msra.mxu0 %v364
      %383 = vmatprep.subr.bf16.mxu0 0
      %384 = vmatpush1.bf16.msra.mxu0 %v365
      %385 = vmatprep.subr.bf16.mxu0 0
      %386 = vmatpush1.bf16.msra.mxu0 %v366
      %387 = vmatprep.subr.bf16.mxu0 0
      %388 = vmatpush1.bf16.msra.mxu0 %v367
      %389 = vmatprep.subr.bf16.mxu0 0
      %390 = vmatpush1.bf16.msra.mxu0 %v368
      %391 = vmatprep.subr.bf16.mxu0 0
      %392 = vmatpush1.bf16.msra.mxu0 %v369
      %393 = vmatprep.subr.bf16.mxu0 0
      %394 = vmatpush1.bf16.msra.mxu0 %v370
      %395 = vmatprep.subr.bf16.mxu0 0
      %396 = vmatpush1.bf16.msra.mxu0 0
      %397 = vmatprep.subr.bf16.mxu0 0
      %398 = vmatpush1.bf16.msra.mxu0 0
      %399 = vmatprep.subr.bf16.mxu0 0
      %400 = vmatpush1.bf16.msra.mxu0 0
      %401 = vmatprep.subr.bf16.mxu0 0
      %402 = vmatpush1.bf16.msra.mxu0 0
      %403 = vmatprep.subr.bf16.mxu0 0
      %404 = vmatpush1.bf16.msra.mxu0 0
      %405 = vmatprep.subr.bf16.mxu0 0
      %406 = vmatpush1.bf16.msra.mxu0 0
      %407 = vmatprep.subr.bf16.mxu0 0
      %408 = vmatpush1.bf16.msra.mxu0 0
      %409 = vmatprep.subr.bf16.mxu0 0
      %410 = vmatpush1.bf16.msra.mxu0 0
      %411 = vmatprep.mubr.bf16.mxu0 0
      %412 = vmatmul.mubr.bf16.gmra.mrb[0].mxu0 %v315
      %v413 = vpop.f32.mrb[0].mxu0
      %v414 = vadd.f32 %v281, %v413
      %v415 = vpop.f32.mrb[0].mxu0
      %v416 = vpop.f32.mrb[0].mxu0
      %v417 = vadd.f32 %v281, %v416
      %v418 = vpop.f32.mrb[0].mxu0
      %419 = vmatprep.mubr.bf16.mxu0 0
      %420 = vmatmul.mubr.bf16.gmra.mrb[0].mxu0 %v316
      %v421 = vpop.f32.mrb[0].mxu0
      %v422 = vadd.f32 %v281, %v421
      %v423 = vpop.f32.mrb[0].mxu0
      %v424 = vpop.f32.mrb[0].mxu0
      %v425 = vadd.f32 %v281, %v424
      %v426 = vpop.f32.mrb[0].mxu0
      %427 = vmatprep.mubr.bf16.mxu0 0
      %428 = vmatmul.mubr.bf16.gmra.mrb[0].mxu0 %v317
      %v429 = vpop.f32.mrb[0].mxu0
      %v430 = vadd.f32 %v281, %v429
      %v431 = vpop.f32.mrb[0].mxu0
      %v432 = vpop.f32.mrb[0].mxu0
      %v433 = vadd.f32 %v281, %v432
      %v434 = vpop.f32.mrb[0].mxu0
      %435 = vmatprep.mubr.bf16.mxu0 0
      %436 = vmatmul.mubr.bf16.gmra.mrb[0].mxu0 %v318
      %v437 = vpop.f32.mrb[0].mxu0
      %v438 = vadd.f32 %v281, %v437
      %v439 = vpop.f32.mrb[0].mxu0
      %v440 = vpop.f32.mrb[0].mxu0
      %v441 = vadd.f32 %v281, %v440
      %v442 = vpop.f32.mrb[0].mxu0
      %443 = vmatprep.mubr.bf16.mxu0 0
      %444 = vmatmul.mubr.bf16.gmra.mrb[0].mxu0 %v319
      %v445 = vpop.f32.mrb[0].mxu0
      %v446 = vadd.f32 %v281, %v445
      %v447 = vpop.f32.mrb[0].mxu0
      %v448 = vpop.f32.mrb[0].mxu0
      %v449 = vadd.f32 %v281, %v448
      %v450 = vpop.f32.mrb[0].mxu0
      %451 = vmatprep.mubr.bf16.mxu0 0
      %452 = vmatmul.mubr.bf16.gmra.mrb[0].mxu0 %v320
      %v453 = vpop.f32.mrb[0].mxu0
      %v454 = vadd.f32 %v281, %v453
      %v455 = vpop.f32.mrb[0].mxu0
      %v456 = vpop.f32.mrb[0].mxu0
      %v457 = vadd.f32 %v281, %v456
      %v458 = vpop.f32.mrb[0].mxu0
      %459 = vmatprep.mubr.bf16.mxu0 0
      %460 = vmatmul.mubr.bf16.gmra.mrb[0].mxu0 %v321
      %v461 = vpop.f32.mrb[0].mxu0
      %v462 = vadd.f32 %v281, %v461
      %v463 = vpop.f32.mrb[0].mxu0
      %v464 = vpop.f32.mrb[0].mxu0
      %v465 = vadd.f32 %v281, %v464
      %v466 = vpop.f32.mrb[0].mxu0
      %467 = vmatprep.mubr.bf16.mxu0 0
      %468 = vmatmul.mubr.bf16.gmra.mrb[0].mxu0 %v322
      %v469 = vpop.f32.mrb[0].mxu0
      %v470 = vadd.f32 %v281, %v469
      %v471 = vpop.f32.mrb[0].mxu0
      %v472 = vpop.f32.mrb[0].mxu0
      %v473 = vadd.f32 %v281, %v472
      %v474 = vpop.f32.mrb[0].mxu0
      %475 = vdwg.mxu0
      %s476 = sld [smem:[#allocation2]]
      %vm477 = vcmp.ge.f32.partialorder %v414, 0.0
      %vm478 = vcmp.ge.f32.partialorder %v417, 0.0
      %vm479 = vcmp.ge.f32.partialorder %v422, 0.0
      %vm480 = vcmp.ge.f32.partialorder %v425, 0.0
      %vm481 = vcmp.ge.f32.partialorder %v430, 0.0
      %vm482 = vcmp.ge.f32.partialorder %v433, 0.0
      %vm483 = vcmp.ge.f32.partialorder %v438, 0.0
      %vm484 = vcmp.ge.f32.partialorder %v441, 0.0
      %vm485 = vcmp.ge.f32.partialorder %v446, 0.0
      %vm486 = vcmp.ge.f32.partialorder %v449, 0.0
      %vm487 = vcmp.ge.f32.partialorder %v454, 0.0
      %vm488 = vcmp.ge.f32.partialorder %v457, 0.0
      %vm489 = vcmp.ge.f32.partialorder %v462, 0.0
      %vm490 = vcmp.ge.f32.partialorder %v465, 0.0
      %vm491 = vcmp.ge.f32.partialorder %v470, 0.0
      %vm492 = vcmp.ge.f32.partialorder %v473, 0.0
      %v493 = vstv %s476
      %v494 = vmul.f32 %v493, %v414
      %v495 = vmul.f32 %v493, %v417
      %v496 = vmul.f32 %v493, %v422
      %v497 = vmul.f32 %v493, %v425
      %v498 = vmul.f32 %v493, %v430
      %v499 = vmul.f32 %v493, %v433
      %v500 = vmul.f32 %v493, %v438
      %v501 = vmul.f32 %v493, %v441
      %v502 = vmul.f32 %v493, %v446
      %v503 = vmul.f32 %v493, %v449
      %v504 = vmul.f32 %v493, %v454
      %v505 = vmul.f32 %v493, %v457
      %v506 = vmul.f32 %v493, %v462
      %v507 = vmul.f32 %v493, %v465
      %v508 = vmul.f32 %v493, %v470
      %v509 = vmul.f32 %v493, %v473
      %v510 = vsel %vm477, %v414, %v494
      %v511 = vsel %vm478, %v417, %v495
      %v512 = vsel %vm479, %v422, %v496
      %v513 = vsel %vm480, %v425, %v497
      %v514 = vsel %vm481, %v430, %v498
      %v515 = vsel %vm482, %v433, %v499
      %v516 = vsel %vm483, %v438, %v500
      %v517 = vsel %vm484, %v441, %v501
      %v518 = vsel %vm485, %v446, %v502
      %v519 = vsel %vm486, %v449, %v503
      %v520 = vsel %vm487, %v454, %v504
      %v521 = vsel %vm488, %v457, %v505
      %v522 = vsel %vm489, %v462, %v506
      %v523 = vsel %vm490, %v465, %v507
      %v524 = vsel %vm491, %v470, %v508
      %v525 = vsel %vm492, %v473, %v509
      %v526 = vpack.c.bf16 %v511, %v510
      %v527 = vpack.c.bf16 %v513, %v512
      %v528 = vpack.c.bf16 %v515, %v514
      %v529 = vpack.c.bf16 %v517, %v516
      %v530 = vpack.c.bf16 %v519, %v518
      %v531 = vpack.c.bf16 %v521, %v520
      %v532 = vpack.c.bf16 %v523, %v522
      %v533 = vpack.c.bf16 %v525, %v524
      %v542 = vunpack.c.l.b16 %v526
      %v543 = vunpack.c.h.b16 %v526
      %v544 = vunpack.c.l.b16 %v527
      %v545 = vunpack.c.h.b16 %v527
      %v546 = vunpack.c.l.b16 %v528
      %v547 = vunpack.c.h.b16 %v528
      %v548 = vunpack.c.l.b16 %v529
      %v549 = vunpack.c.h.b16 %v529
      %v550 = vunpack.c.l.b16 %v530
      %v551 = vunpack.c.h.b16 %v530
      %v552 = vunpack.c.l.b16 %v531
      %v553 = vunpack.c.h.b16 %v531
      %v554 = vunpack.c.l.b16 %v532
      %v555 = vunpack.c.h.b16 %v532
      %v556 = vunpack.c.l.b16 %v533
      %v557 = vunpack.c.h.b16 %v533
      %v558 = vpack.c.b16 %v542, %v542
      %v559 = vpack.c.b16 %v543, %v543
      %v560 = vpack.c.b16 %v544, %v544
      %v561 = vpack.c.b16 %v545, %v545
      %v562 = vpack.c.b16 %v546, %v546
      %v563 = vpack.c.b16 %v547, %v547
      %v564 = vpack.c.b16 %v548, %v548
      %v565 = vpack.c.b16 %v549, %v549
      %v566 = vpack.c.b16 %v550, %v550
      %v567 = vpack.c.b16 %v551, %v551
      %v568 = vpack.c.b16 %v552, %v552
      %v569 = vpack.c.b16 %v553, %v553
      %v570 = vpack.c.b16 %v554, %v554
      %v571 = vpack.c.b16 %v555, %v555
      %v572 = vpack.c.b16 %v556, %v556
      %v573 = vpack.c.b16 %v557, %v557
      %vm590 = vcmask 519168
      %591 = vst.msk [vmem:[%s241] sm:$0xf] %vm590, %v558
      %592 = vst.msk [vmem:[%s241 + $0x4] sm:$0xf] %vm590, %v559
      %593 = vst.msk [vmem:[%s241 + $0x8] sm:$0xf] %vm590, %v560
      %594 = vst.msk [vmem:[%s241 + $0xc] sm:$0xf] %vm590, %v561
      %595 = vst.msk [vmem:[%s241 + $0x10] sm:$0xf] %vm590, %v562
      %596 = vst.msk [vmem:[%s241 + $0x14] sm:$0xf] %vm590, %v563
      %597 = vst.msk [vmem:[%s241 + $0x18] sm:$0xf] %vm590, %v564
      %598 = vst.msk [vmem:[%s241 + $0x1c] sm:$0xf] %vm590, %v565
      %599 = vst.msk [vmem:[%s241 + $0x20] sm:$0xf] %vm590, %v566
      %600 = vst.msk [vmem:[%s241 + $0x24] sm:$0xf] %vm590, %v567
      %601 = vst.msk [vmem:[%s241 + $0x28] sm:$0xf] %vm590, %v568
      %602 = vst.msk [vmem:[%s241 + $0x2c] sm:$0xf] %vm590, %v569
      %603 = vst.msk [vmem:[%s241 + $0x30] sm:$0xf] %vm590, %v570
      %604 = vst.msk [vmem:[%s241 + $0x34] sm:$0xf] %vm590, %v571
      %605 = vst.msk [vmem:[%s241 + $0x38] sm:$0xf] %vm590, %v572
      %606 = vst.msk [vmem:[%s241 + $0x3c] sm:$0xf] %vm590, %v573
      %s607 = smul.u32 8, %s21
      %p608 = scmp.lt.s32.totalorder %s20, 1
      %s609 = scalar_select %p608, %s20, 1
      %p610 = scmp.lt.s32.totalorder %s607, 15
      %s611 = scalar_select %p610, %s607, 15
      %s612 = smul.addr %s611, 2
      %s613 = smul.addr %s609, 32
      %s614 = sadd.s32 %s612, %s613
      %s615 = smul.addr %s614, 4
      %s616 = scalar_lea.vmem %s4, %s615
      // Predicated region
      $region37: #{compression_network_forward.4} parent=35 // pred_check
        %p617 = pneg %p139
      $region38: #{compression_network_forward.4} parent=35 // pred_check_branch
        %619 = sbr.rel (%p617) target = $region40
      $region39: #{compression_network_forward.4} parent=35 // pred_region
        %s620 = smul.u32 8, %s21
      $region40: #{compression_network_forward.4} parent=35 // pred_fallthru
        _
    $region36: #{compression_network_forward.4} parent=5 // pred_fallthru
      _
    %p621 = scmp.le.s32.totalorder 2, %s11
    // Predicated region
    $region41: #{compression_network_forward.4} parent=5 // pred_check
      %p622 = pneg %p621
    $region42: #{compression_network_forward.4} parent=5 // pred_check_branch
      %624 = sbr.rel (%p622) target = $region44
    $region43: #{compression_network_forward.4} parent=5 // pred_region
      %s625 = ssub.s32 %s11, 2
      // Predicated region
      $region45: #{compression_network_forward.4} parent=43 // pred_check
        %p626 = pneg %p145
      $region46: #{compression_network_forward.4} parent=43 // pred_check_branch
        %628 = sbr.rel (%p626) target = $region48
      $region47: #{compression_network_forward.4} parent=43 // pred_region
        %s629 = smul.u32 8, %s23
        %p630 = scmp.lt.s32.totalorder %s22, 1
        %s631 = scalar_select %p630, %s22, 1
        %p632 = scmp.lt.s32.totalorder %s629, 15
        %s633 = scalar_select %p632, %s629, 15
        %s634 = smul.addr %s633, 2
        %s635 = smul.addr %s631, 32
        %s636 = sadd.s32 %s634, %s635
        %s637 = smul.addr %s636, 4
        %s638 = scalar_lea.vmem %s4, %s637
      $region48: #{compression_network_forward.4} parent=43 // pred_fallthru
        _
    $region44: #{compression_network_forward.4} parent=5 // pred_fallthru
      _
  $region6: #{compression_network_forward.4} parent=0 // loop_footer
    %s15 = sadd.s32 1, %s11
  $region7: #{compression_network_forward.4} parent=0 // loop_footer_branch
    %10 = sbr.rel target = $region3
  $region8: #{compression_network_forward.4} parent=0 // loop_exit
    _

// kernel: compression_network_forward.5
$region0: #{compression_network_forward.5}
  #allocation0 [shape = 'u32[]', space=smem, size = 0x4, offset = 0x4, fixed_abs, tag = 'smem constant byte address 0x4 - core index']
  #allocation1 [shape = 'u32[144,128]{1,0:T(1,128)}', space=vmem, size = 0x12000, scoped, tag = 'internal scratch']
  %s0 = inlined_call_operand.vmem [shape: bf16[2,18,18,64], index: 0, kind: input, shape index: {}]
  %s1 = inlined_call_operand.vmem [shape: bf16[5,128,64], index: 1, kind: input, shape index: {}]
  %s2 = inlined_call_operand.vmem [shape: f32[1,64], index: 2, kind: input, shape index: {}]
  %s3 = inlined_call_operand.vmem [shape: bf16[2,16,16,64], index: 3, kind: output, shape index: {0}]
  %s4 = inlined_call_operand.vmem [shape: f32[2,2,1,64], index: 4, kind: output, shape index: {1}]
  %s5 = inlined_call_operand.vmem [shape: f32[2,2,1,64], index: 5, kind: output, shape index: {2}]
  %6 = xla_tuple %s3, %s4, %s5
  %s7 = sld [smem:[#allocation0]]
  $region61: #{compression_network_forward.5} parent=0
    _
  %s9 = ssub.s32 1, %s7
  %s10 = scalar_select 0, %s9, %s7
  loop: start=0, step=1, limit=6
  $region2: #{compression_network_forward.5} parent=0 // loop_pre_header
    _
  $region3: #{compression_network_forward.5} parent=0 // loop_header
    %s12 = sphi 0, %s16
    %p13 = scmp.ge.s32.totalorder %s12, 6
    %s19 = sphi 0, %s31
    %s20 = sphi 0, %s27
    %s21 = sphi 0, %s19
    %s22 = sphi 0, %s20
    %s23 = sphi 0, %s21
    %s24 = sphi 0, %s22
    %s34 = sphi 0, %s36
    %s37 = sphi 0, %s34
    %s38 = sphi 0, %s37
    %s54 = sphi 0, %s38
    %s58 = sphi 0, %s58
    %s60 = sphi 0, %s58
    %s61 = sphi 0, %s60
    %s75 = sphi 0, %s61
    %s79 = sphi 0, %s79
    %s81 = sphi 0, %s79
    %s82 = sphi 0, %s81
    %s96 = sphi 0, %s82
    %s104 = sphi 0, %s106
    %s107 = sphi 0, %s104
    %s108 = sphi 0, %s107
    %s124 = sphi 0, %s108
    %s132 = sphi 0, %s134
    %s135 = sphi 0, %s132
    %s136 = sphi 0, %s135
    %s152 = sphi 0, %s136
    %s160 = sphi 0, %s162
    %s163 = sphi 0, %s160
    %s164 = sphi 0, %s163
    %s180 = sphi 0, %s164
  $region4: #{compression_network_forward.5} parent=0 // loop_header_branch
    %15 = sbr.rel (%p13) target = $region8
  $region5: #{compression_network_forward.5} parent=0 // loop_body
    %s17 = ssub.s32 %s12, 1
    %s18 = ssub.s32 %s12, 2
    %s25 = sadd.s32 1, %s20
    %p26 = scmp.ge.s32.totalorder %s25, 2
    %s27 = scalar_select %p26, 0, %s25
    %s28 = sadd.s32 1, %s19
    %s29 = scalar_select %p26, %s28, %s19
    %p30 = scmp.ge.s32.totalorder %s29, 2
    %s31 = scalar_select %p30, 0, %s29
    %s32 = ssub.s32 %s19, %s31
    %p33 = scmp.eq.s32.totalorder %s32, 0
    %s35 = sadd.s32 %s34, 1
    %s36 = scalar_select %p33, %s34, %s35
    %p39 = pneg %p33
    %p40 = scmp.eq.s32.totalorder %s12, 3
    %p41 = por %p39, %p40
    %p42 = scmp.ne.s32.totalorder %s34, %s37
    %p43 = scmp.eq.s32.totalorder %s12, 0
    %p44 = por %p42, %p43
    %p45 = scmp.ne.s32.totalorder %s34, %s37
    %p46 = scmp.eq.s32.totalorder %s17, 3
    %p47 = por %p45, %p46
    %p48 = scmp.ne.s32.totalorder %s37, %s38
    %p49 = scmp.eq.s32.totalorder %s17, 0
    %p50 = por %p48, %p49
    %p51 = scmp.ne.s32.totalorder %s37, %s38
    %p52 = scmp.eq.s32.totalorder %s18, 3
    %p53 = por %p51, %p52
    %p55 = scmp.ne.s32.totalorder %s38, %s54
    %p56 = scmp.eq.s32.totalorder %s18, 0
    %p57 = por %p55, %p56
    %s59 = sadd.s32 %s58, 1
    %p62 = scmp.eq.s32.totalorder %s12, 3
    %p63 = scmp.ne.s32.totalorder %s58, %s60
    %p64 = scmp.eq.s32.totalorder %s12, 0
    %p65 = por %p63, %p64
    %p66 = scmp.ne.s32.totalorder %s58, %s60
    %p67 = scmp.eq.s32.totalorder %s17, 3
    %p68 = por %p66, %p67
    %p69 = scmp.ne.s32.totalorder %s60, %s61
    %p70 = scmp.eq.s32.totalorder %s17, 0
    %p71 = por %p69, %p70
    %p72 = scmp.ne.s32.totalorder %s60, %s61
    %p73 = scmp.eq.s32.totalorder %s18, 3
    %p74 = por %p72, %p73
    %p76 = scmp.ne.s32.totalorder %s61, %s75
    %p77 = scmp.eq.s32.totalorder %s18, 0
    %p78 = por %p76, %p77
    %s80 = sadd.s32 %s79, 1
    %p83 = scmp.eq.s32.totalorder %s12, 3
    %p84 = scmp.ne.s32.totalorder %s79, %s81
    %p85 = scmp.eq.s32.totalorder %s12, 0
    %p86 = por %p84, %p85
    %p87 = scmp.ne.s32.totalorder %s79, %s81
    %p88 = scmp.eq.s32.totalorder %s17, 3
    %p89 = por %p87, %p88
    %p90 = scmp.ne.s32.totalorder %s81, %s82
    %p91 = scmp.eq.s32.totalorder %s17, 0
    %p92 = por %p90, %p91
    %p93 = scmp.ne.s32.totalorder %s81, %s82
    %p94 = scmp.eq.s32.totalorder %s18, 3
    %p95 = por %p93, %p94
    %p97 = scmp.ne.s32.totalorder %s82, %s96
    %p98 = scmp.eq.s32.totalorder %s18, 0
    %p99 = por %p97, %p98
    %s100 = ssub.s32 %s19, %s31
    %s101 = ssub.s32 %s20, %s27
    %s102 = sor.u32 %s100, %s101
    %p103 = scmp.eq.s32.totalorder %s102, 0
    %s105 = sadd.s32 %s104, 1
    %s106 = scalar_select %p103, %s104, %s105
    %p109 = pneg %p103
    %p110 = scmp.eq.s32.totalorder %s12, 3
    %p111 = por %p109, %p110
    %p112 = scmp.ne.s32.totalorder %s104, %s107
    %p113 = scmp.eq.s32.totalorder %s12, 0
    %p114 = por %p112, %p113
    %p115 = scmp.ne.s32.totalorder %s104, %s107
    %p116 = scmp.eq.s32.totalorder %s17, 3
    %p117 = por %p115, %p116
    %p118 = scmp.ne.s32.totalorder %s107, %s108
    %p119 = scmp.eq.s32.totalorder %s17, 0
    %p120 = por %p118, %p119
    %p121 = scmp.ne.s32.totalorder %s107, %s108
    %p122 = scmp.eq.s32.totalorder %s18, 3
    %p123 = por %p121, %p122
    %p125 = scmp.ne.s32.totalorder %s108, %s124
    %p126 = scmp.eq.s32.totalorder %s18, 0
    %p127 = por %p125, %p126
    %s128 = ssub.s32 %s19, %s31
    %s129 = ssub.s32 %s20, %s27
    %s130 = sor.u32 %s128, %s129
    %p131 = scmp.eq.s32.totalorder %s130, 0
    %s133 = sadd.s32 %s132, 1
    %s134 = scalar_select %p131, %s132, %s133
    %p137 = pneg %p131
    %p138 = scmp.eq.s32.totalorder %s12, 3
    %p139 = por %p137, %p138
    %p140 = scmp.ne.s32.totalorder %s132, %s135
    %p141 = scmp.eq.s32.totalorder %s12, 0
    %p142 = por %p140, %p141
    %p143 = scmp.ne.s32.totalorder %s132, %s135
    %p144 = scmp.eq.s32.totalorder %s17, 3
    %p145 = por %p143, %p144
    %p146 = scmp.ne.s32.totalorder %s135, %s136
    %p147 = scmp.eq.s32.totalorder %s17, 0
    %p148 = por %p146, %p147
    %p149 = scmp.ne.s32.totalorder %s135, %s136
    %p150 = scmp.eq.s32.totalorder %s18, 3
    %p151 = por %p149, %p150
    %p153 = scmp.ne.s32.totalorder %s136, %s152
    %p154 = scmp.eq.s32.totalorder %s18, 0
    %p155 = por %p153, %p154
    %s156 = ssub.s32 %s19, %s31
    %s157 = ssub.s32 %s20, %s27
    %s158 = sor.u32 %s156, %s157
    %p159 = scmp.eq.s32.totalorder %s158, 0
    %s161 = sadd.s32 %s160, 1
    %s162 = scalar_select %p159, %s160, %s161
    %p165 = pneg %p159
    %p166 = scmp.eq.s32.totalorder %s12, 3
    %p167 = por %p165, %p166
    %p168 = scmp.ne.s32.totalorder %s160, %s163
    %p169 = scmp.eq.s32.totalorder %s12, 0
    %p170 = por %p168, %p169
    %p171 = scmp.ne.s32.totalorder %s160, %s163
    %p172 = scmp.eq.s32.totalorder %s17, 3
    %p173 = por %p171, %p172
    %p174 = scmp.ne.s32.totalorder %s163, %s164
    %p175 = scmp.eq.s32.totalorder %s17, 0
    %p176 = por %p174, %p175
    %p177 = scmp.ne.s32.totalorder %s163, %s164
    %p178 = scmp.eq.s32.totalorder %s18, 3
    %p179 = por %p177, %p178
    %p181 = scmp.ne.s32.totalorder %s164, %s180
    %p182 = scmp.eq.s32.totalorder %s18, 0
    %p183 = por %p181, %p182
    %p184 = scmp.le.s32.totalorder 1, %s12
    %p185 = scmp.lt.s32.totalorder %s12, 5
    %p186 = pnand %p184, %p185
    %p187 = pneg %p186
    // Predicated region
    $region9: #{compression_network_forward.5} parent=5 // pred_check
      _
    $region10: #{compression_network_forward.5} parent=5 // pred_check_branch
      %189 = sbr.rel (%p186) target = $region12
    $region11: #{compression_network_forward.5} parent=5 // pred_region
      %s190 = ssub.s32 %s12, 1
      // Predicated region
      $region13: #{compression_network_forward.5} parent=11 // pred_check
        %p191 = pneg %p71
      $region14: #{compression_network_forward.5} parent=11 // pred_check_branch
        %193 = sbr.rel (%p191) target = $region16
      $region15: #{compression_network_forward.5} parent=11 // pred_region
        _
      $region16: #{compression_network_forward.5} parent=11 // pred_fallthru
        _
      // Predicated region
      $region17: #{compression_network_forward.5} parent=11 // pred_check
        %p194 = pneg %p92
      $region18: #{compression_network_forward.5} parent=11 // pred_check_branch
        %196 = sbr.rel (%p194) target = $region20
      $region19: #{compression_network_forward.5} parent=11 // pred_region
        _
      $region20: #{compression_network_forward.5} parent=11 // pred_fallthru
        _
    $region12: #{compression_network_forward.5} parent=5 // pred_fallthru
      _
    %p197 = scmp.lt.s32.totalorder %s12, 4
    // Predicated region
    $region21: #{compression_network_forward.5} parent=5 // pred_check
      %p198 = pneg %p197
    $region22: #{compression_network_forward.5} parent=5 // pred_check_branch
      %200 = sbr.rel (%p198) target = $region24
    $region23: #{compression_network_forward.5} parent=5 // pred_region
      // Predicated region
      $region25: #{compression_network_forward.5} parent=23 // pred_check
        %p201 = pneg %p44
      $region26: #{compression_network_forward.5} parent=23 // pred_check_branch
        %203 = sbr.rel (%p201) target = $region28
      $region27: #{compression_network_forward.5} parent=23 // pred_region
        %p204 = scmp.lt.s32.totalorder %s19, 1
        %s205 = scalar_select %p204, %s19, 1
        %s206 = smul.addr %s205, 54
        %s207 = smul.addr %s206, 4
        %s208 = scalar_lea.vmem %s0, %s207
      $region28: #{compression_network_forward.5} parent=23 // pred_fallthru
        _
    $region24: #{compression_network_forward.5} parent=5 // pred_fallthru
      _
    %p209 = scmp.le.s32.totalorder 1, %s12
    %p210 = scmp.lt.s32.totalorder %s12, 5
    %p211 = pnand %p209, %p210
    %p212 = pneg %p211
    // Predicated region
    $region29: #{compression_network_forward.5} parent=5 // pred_check
      _
    $region30: #{compression_network_forward.5} parent=5 // pred_check_branch
      %214 = sbr.rel (%p211) target = $region32
    $region31: #{compression_network_forward.5} parent=5 // pred_region
      %s215 = ssub.s32 %s12, 1
      %p216 = scmp.lt.s32.totalorder %s21, 1
      %s217 = scalar_select %p216, %s21, 1
      %s218 = smul.addr %s217, 54
      %s219 = smul.addr %s218, 4
      %s220 = scalar_lea.vmem %s0, %s219
      %p221 = pneg %p50
      %p222 = pneg %p47
      %p223 = pneg %p71
      %p224 = pneg %p68
      %p225 = pneg %p92
      %p226 = pneg %p89
      %p227 = pneg %p120
      %p228 = pneg %p117
      %s229 = smul.u32 8, %s22
      %p230 = scmp.lt.s32.totalorder %s21, 1
      %s231 = scalar_select %p230, %s21, 1
      %p232 = scmp.lt.s32.totalorder %s229, 15
      %s233 = scalar_select %p232, %s229, 15
      %s234 = smul.addr %s233, 2
      %s235 = smul.addr %s231, 32
      %s236 = sadd.s32 %s234, %s235
      %s237 = smul.addr %s236, 4
      %s238 = scalar_lea.vmem %s3, %s237
      %p239 = pneg %p148
      %p240 = pneg %p145
      %p241 = scmp.lt.s32.totalorder %s21, 1
      %s242 = scalar_select %p241, %s21, 1
      %p243 = scmp.lt.s32.totalorder %s22, 1
      %s244 = scalar_select %p243, %s22, 1
      %s245 = smul.addr %s242, 2
      %s246 = sadd.s32 %s244, %s245
      %s247 = scalar_lea.vmem %s4, %s246
      %p248 = pneg %p176
      %p249 = pneg %p173
      %p250 = scmp.lt.s32.totalorder %s21, 1
      %s251 = scalar_select %p250, %s21, 1
      %p252 = scmp.lt.s32.totalorder %s22, 1
      %s253 = scalar_select %p252, %s22, 1
      %s254 = smul.addr %s251, 2
      %s255 = sadd.s32 %s253, %s254
      %s256 = scalar_lea.vmem %s5, %s255
      %p257 = scmp.lt.s32.totalorder %s21, 1
      %s258 = scalar_select %p257, %s21, 1
      %s259 = smul.addr %s258, 54
      %s260 = smul.addr %s259, 4
      %s261 = scalar_lea.vmem %s0, %s260
      %s262 = smul.u32 8, %s22
      %p263 = scmp.lt.s32.totalorder %s21, 1
      %s264 = scalar_select %p263, %s21, 1
      %p265 = scmp.lt.s32.totalorder %s262, 15
      %s266 = scalar_select %p265, %s262, 15
      %s267 = smul.addr %s266, 2
      %s268 = smul.addr %s264, 32
      %s269 = sadd.s32 %s267, %s268
      %s270 = smul.addr %s269, 4
      %s271 = scalar_lea.vmem %s3, %s270
      %s272 = smul.u32 8, %s22
      %p273 = scmp.lt.s32.totalorder %s21, 1
      %s274 = scalar_select %p273, %s21, 1
      %p275 = scmp.lt.s32.totalorder %s22, 1
      %s276 = scalar_select %p275, %s22, 1
      %s277 = smul.addr %s274, 2
      %s278 = sadd.s32 %s276, %s277
      %s279 = scalar_lea.vmem %s4, %s278
      %p280 = scmp.lt.s32.totalorder %s21, 1
      %s281 = scalar_select %p280, %s21, 1
      %p282 = scmp.lt.s32.totalorder %s22, 1
      %s283 = scalar_select %p282, %s22, 1
      %s284 = smul.addr %s281, 2
      %s285 = sadd.s32 %s283, %s284
      %s286 = scalar_lea.vmem %s5, %s285
      %s288 = smul.u32 %s22, 8
      %s289 = smul.u32 %s288, 3
      %s290 = smul.addr %s289, 4
      %s291 = scalar_lea.vmem %s261, %s290
      %v292 = vld [vmem:[%s291] sm:$0xf]
      %v293 = vld [vmem:[%s291 + $0x4] sm:$0xf]
      %v294 = vld [vmem:[%s291 + $0xc] sm:$0xf]
      %v295 = vld [vmem:[%s291 + $0x10] sm:$0xf]
      %v296 = vld [vmem:[%s291 + $0x18] sm:$0xf]
      %v297 = vld [vmem:[%s291 + $0x1c] sm:$0xf]
      %v298 = vld [vmem:[%s291 + $0x24] sm:$0xf]
      %v299 = vld [vmem:[%s291 + $0x28] sm:$0xf]
      %v300 = vld [vmem:[%s291 + $0x30] sm:$0xf]
      %v301 = vld [vmem:[%s291 + $0x34] sm:$0xf]
      %v302 = vld [vmem:[%s291 + $0x3c] sm:$0xf]
      %v303 = vld [vmem:[%s291 + $0x40] sm:$0xf]
      %v304 = vld [vmem:[%s291 + $0x48] sm:$0xf]
      %v305 = vld [vmem:[%s291 + $0x4c] sm:$0xf]
      %v306 = vld [vmem:[%s291 + $0x54] sm:$0xf]
      %v307 = vld [vmem:[%s291 + $0x58] sm:$0xf]
      %v308 = vld [vmem:[%s291 + $0x8] sm:$0x1]
      %v309 = vld [vmem:[%s291 + $0x14] sm:$0x1]
      %v310 = vld [vmem:[%s291 + $0x20] sm:$0x1]
      %v311 = vld [vmem:[%s291 + $0x2c] sm:$0x1]
      %v312 = vld [vmem:[%s291 + $0x38] sm:$0x1]
      %v313 = vld [vmem:[%s291 + $0x44] sm:$0x1]
      %v314 = vld [vmem:[%s291 + $0x50] sm:$0x1]
      %v315 = vld [vmem:[%s291 + $0x5c] sm:$0x1]
      %v332 = vunpack.c.l.b16 %v292
      %v333 = vunpack.c.l.b16 %v293
      %v334 = vunpack.c.l.b16 %v294
      %v335 = vunpack.c.l.b16 %v295
      %v336 = vunpack.c.l.b16 %v296
      %v337 = vunpack.c.l.b16 %v297
      %v338 = vunpack.c.l.b16 %v298
      %v339 = vunpack.c.l.b16 %v299
      %v340 = vunpack.c.l.b16 %v300
      %v341 = vunpack.c.l.b16 %v301
      %v342 = vunpack.c.l.b16 %v302
      %v343 = vunpack.c.l.b16 %v303
      %v344 = vunpack.c.l.b16 %v304
      %v345 = vunpack.c.l.b16 %v305
      %v346 = vunpack.c.l.b16 %v306
      %v347 = vunpack.c.l.b16 %v307
      %v348 = vpack.c.b16 %v333, %v332
      %v349 = vpack.c.b16 %v335, %v334
      %v350 = vpack.c.b16 %v337, %v336
      %v351 = vpack.c.b16 %v339, %v338
      %v352 = vpack.c.b16 %v341, %v340
      %v353 = vpack.c.b16 %v343, %v342
      %v354 = vpack.c.b16 %v345, %v344
      %v355 = vpack.c.b16 %v347, %v346
      %v364 = vunpack.c.l.b16 %v308
      %v365 = vunpack.c.l.b16 %v309
      %v366 = vunpack.c.l.b16 %v310
      %v367 = vunpack.c.l.b16 %v311
      %v368 = vunpack.c.l.b16 %v312
      %v369 = vunpack.c.l.b16 %v313
      %v370 = vunpack.c.l.b16 %v314
      %v371 = vunpack.c.l.b16 %v315
      %v372 = vpack.c.b16 %v364, %v364
      %v373 = vpack.c.b16 %v365, %v365
      %v374 = vpack.c.b16 %v366, %v366
      %v375 = vpack.c.b16 %v367, %v367
      %v376 = vpack.c.b16 %v368, %v368
      %v377 = vpack.c.b16 %v369, %v369
      %v378 = vpack.c.b16 %v370, %v370
      %v379 = vpack.c.b16 %v371, %v371
      %vm380 = vsmask.f32 7424
      %v382 = vshrl.u32 %v348, 16
      %v384 = vshll.u32 %v348, 16
      %v386 = vrot.slane %v384, 1
      %v387 = vor.u32 %v382, %v386
      %v389 = vshll.u32 %v372, 16
      %v391 = vrot.slane %v389, 1
      %v392 = vsel %vm380, %v387, %v391
      %v394 = vshrl.u32 %v349, 16
      %v396 = vshll.u32 %v349, 16
      %v398 = vrot.slane %v396, 1
      %v399 = vor.u32 %v394, %v398
      %v401 = vshll.u32 %v373, 16
      %v403 = vrot.slane %v401, 1
      %v404 = vsel %vm380, %v399, %v403
      %v406 = vshrl.u32 %v350, 16
      %v408 = vshll.u32 %v350, 16
      %v410 = vrot.slane %v408, 1
      %v411 = vor.u32 %v406, %v410
      %v413 = vshll.u32 %v374, 16
      %v415 = vrot.slane %v413, 1
      %v416 = vsel %vm380, %v411, %v415
      %v418 = vshrl.u32 %v351, 16
      %v420 = vshll.u32 %v351, 16
      %v422 = vrot.slane %v420, 1
      %v423 = vor.u32 %v418, %v422
      %v425 = vshll.u32 %v375, 16
      %v427 = vrot.slane %v425, 1
      %v428 = vsel %vm380, %v423, %v427
      %v430 = vshrl.u32 %v352, 16
      %v432 = vshll.u32 %v352, 16
      %v434 = vrot.slane %v432, 1
      %v435 = vor.u32 %v430, %v434
      %v437 = vshll.u32 %v376, 16
      %v439 = vrot.slane %v437, 1
      %v440 = vsel %vm380, %v435, %v439
      %v442 = vshrl.u32 %v353, 16
      %v444 = vshll.u32 %v353, 16
      %v446 = vrot.slane %v444, 1
      %v447 = vor.u32 %v442, %v446
      %v449 = vshll.u32 %v377, 16
      %v451 = vrot.slane %v449, 1
      %v452 = vsel %vm380, %v447, %v451
      %v454 = vshrl.u32 %v354, 16
      %v456 = vshll.u32 %v354, 16
      %v458 = vrot.slane %v456, 1
      %v459 = vor.u32 %v454, %v458
      %v461 = vshll.u32 %v378, 16
      %v463 = vrot.slane %v461, 1
      %v464 = vsel %vm380, %v459, %v463
      %v466 = vshrl.u32 %v355, 16
      %v468 = vshll.u32 %v355, 16
      %v470 = vrot.slane %v468, 1
      %v471 = vor.u32 %v466, %v470
      %v473 = vshll.u32 %v379, 16
      %v475 = vrot.slane %v473, 1
      %v476 = vsel %vm380, %v471, %v475
      %477 = vrot.lane.b32.xlu0 %v392, 64
      %v478 = vpop.permute.xlu0 %477
      %479 = vrot.lane.b32.xlu0 %v404, 64
      %v480 = vpop.permute.xlu0 %479
      %481 = vrot.lane.b32.xlu0 %v416, 64
      %v482 = vpop.permute.xlu0 %481
      %483 = vrot.lane.b32.xlu0 %v428, 64
      %v484 = vpop.permute.xlu0 %483
      %485 = vrot.lane.b32.xlu0 %v440, 64
      %v486 = vpop.permute.xlu0 %485
      %487 = vrot.lane.b32.xlu0 %v452, 64
      %v488 = vpop.permute.xlu0 %487
      %489 = vrot.lane.b32.xlu0 %v464, 64
      %v490 = vpop.permute.xlu0 %489
      %491 = vrot.lane.b32.xlu0 %v476, 64
      %v492 = vpop.permute.xlu0 %491
      %vm493 = vcmask 523264
      %v495 = vsel %vm493, %v348, %v478
      %v498 = vsel %vm493, %v349, %v480
      %v501 = vsel %vm493, %v350, %v482
      %v504 = vsel %vm493, %v351, %v484
      %v507 = vsel %vm493, %v352, %v486
      %v510 = vsel %vm493, %v353, %v488
      %v513 = vsel %vm493, %v354, %v490
      %v516 = vsel %vm493, %v355, %v492
      %v518 = vld [vmem:[%s1] sm:$0xf]
      %v519 = vld [vmem:[%s1 + $0x4] sm:$0xf]
      %v520 = vld [vmem:[%s1 + $0x8] sm:$0xf]
      %v521 = vld [vmem:[%s1 + $0xc] sm:$0xf]
      %v522 = vld [vmem:[%s1 + $0x10] sm:$0xf]
      %v523 = vld [vmem:[%s1 + $0x14] sm:$0xf]
      %v524 = vld [vmem:[%s1 + $0x18] sm:$0xf]
      %v525 = vld [vmem:[%s1 + $0x1c] sm:$0xf]
      %v526 = vld [vmem:[%s1 + $0x20] sm:$0xf]
      %v527 = vld [vmem:[%s1 + $0x24] sm:$0xf]
      %v528 = vld [vmem:[%s1 + $0x28] sm:$0xf]
      %v529 = vld [vmem:[%s1 + $0x2c] sm:$0xf]
      %v530 = vld [vmem:[%s1 + $0x30] sm:$0xf]
      %v531 = vld [vmem:[%s1 + $0x34] sm:$0xf]
      %v532 = vld [vmem:[%s1 + $0x38] sm:$0xf]
      %v533 = vld [vmem:[%s1 + $0x3c] sm:$0xf]
      %v534 = vld [vmem:[%s291] sm:$0xe]
      %v535 = vld [vmem:[%s291 + $0xc] sm:$0xe]
      %v536 = vld [vmem:[%s291 + $0x18] sm:$0xe]
      %v537 = vld [vmem:[%s291 + $0x24] sm:$0xe]
      %v538 = vld [vmem:[%s291 + $0x30] sm:$0xe]
      %v539 = vld [vmem:[%s291 + $0x3c] sm:$0xe]
      %v540 = vld [vmem:[%s291 + $0x48] sm:$0xe]
      %v541 = vld [vmem:[%s291 + $0x54] sm:$0xe]
      %s542 = sadd.s32 %s288, 1
      %s543 = smul.u32 %s542, 3
      %s544 = smul.addr %s543, 4
      %s545 = scalar_lea.vmem %s261, %s544
      %v546 = vld [vmem:[%s545] sm:$0xf]
      %v547 = vld [vmem:[%s545 + $0x4] sm:$0xf]
      %v548 = vld [vmem:[%s545 + $0xc] sm:$0xf]
      %v549 = vld [vmem:[%s545 + $0x10] sm:$0xf]
      %v550 = vld [vmem:[%s545 + $0x18] sm:$0xf]
      %v551 = vld [vmem:[%s545 + $0x1c] sm:$0xf]
      %v552 = vld [vmem:[%s545 + $0x24] sm:$0xf]
      %v553 = vld [vmem:[%s545 + $0x28] sm:$0xf]
      %v554 = vld [vmem:[%s545 + $0x30] sm:$0xf]
      %v555 = vld [vmem:[%s545 + $0x34] sm:$0xf]
      %v556 = vld [vmem:[%s545 + $0x3c] sm:$0xf]
      %v557 = vld [vmem:[%s545 + $0x40] sm:$0xf]
      %v558 = vld [vmem:[%s545 + $0x48] sm:$0xf]
      %v559 = vld [vmem:[%s545 + $0x4c] sm:$0xf]
      %v560 = vld [vmem:[%s545 + $0x54] sm:$0xf]
      %v561 = vld [vmem:[%s545 + $0x58] sm:$0xf]
      %v570 = vunpack.c.l.b16 %v534
      %v571 = vunpack.c.l.b16 %v535
      %v572 = vunpack.c.l.b16 %v536
      %v573 = vunpack.c.l.b16 %v537
      %v574 = vunpack.c.l.b16 %v538
      %v575 = vunpack.c.l.b16 %v539
      %v576 = vunpack.c.l.b16 %v540
      %v577 = vunpack.c.l.b16 %v541
      %v578 = vpack.c.b16 %v333, %v570
      %v579 = vpack.c.b16 %v335, %v571
      %v580 = vpack.c.b16 %v337, %v572
      %v581 = vpack.c.b16 %v339, %v573
      %v582 = vpack.c.b16 %v341, %v574
      %v583 = vpack.c.b16 %v343, %v575
      %v584 = vpack.c.b16 %v345, %v576
      %v585 = vpack.c.b16 %v347, %v577
      %v602 = vunpack.c.l.b16 %v546
      %v603 = vunpack.c.l.b16 %v547
      %v604 = vunpack.c.l.b16 %v548
      %v605 = vunpack.c.l.b16 %v549
      %v606 = vunpack.c.l.b16 %v550
      %v607 = vunpack.c.l.b16 %v551
      %v608 = vunpack.c.l.b16 %v552
      %v609 = vunpack.c.l.b16 %v553
      %v610 = vunpack.c.l.b16 %v554
      %v611 = vunpack.c.l.b16 %v555
      %v612 = vunpack.c.l.b16 %v556
      %v613 = vunpack.c.l.b16 %v557
      %v614 = vunpack.c.l.b16 %v558
      %v615 = vunpack.c.l.b16 %v559
      %v616 = vunpack.c.l.b16 %v560
      %v617 = vunpack.c.l.b16 %v561
      %v618 = vpack.c.b16 %v603, %v602
      %v619 = vpack.c.b16 %v605, %v604
      %v620 = vpack.c.b16 %v607, %v606
      %v621 = vpack.c.b16 %v609, %v608
      %v622 = vpack.c.b16 %v611, %v610
      %v623 = vpack.c.b16 %v613, %v612
      %v624 = vpack.c.b16 %v615, %v614
      %v625 = vpack.c.b16 %v617, %v616
      %v626 = vrot.slane %v618, 7
      %v627 = vrot.slane %v619, 7
      %v628 = vrot.slane %v620, 7
      %v629 = vrot.slane %v621, 7
      %v630 = vrot.slane %v622, 7
      %v631 = vrot.slane %v623, 7
      %v632 = vrot.slane %v624, 7
      %v633 = vrot.slane %v625, 7
      %634 = vrot.lane.b32.xlu0 %v626, 64
      %v635 = vpop.permute.xlu0 %634
      %636 = vrot.lane.b32.xlu0 %v627, 64
      %v637 = vpop.permute.xlu0 %636
      %638 = vrot.lane.b32.xlu0 %v628, 64
      %v639 = vpop.permute.xlu0 %638
      %640 = vrot.lane.b32.xlu0 %v629, 64
      %v641 = vpop.permute.xlu0 %640
      %642 = vrot.lane.b32.xlu0 %v630, 64
      %v643 = vpop.permute.xlu0 %642
      %644 = vrot.lane.b32.xlu0 %v631, 64
      %v645 = vpop.permute.xlu0 %644
      %646 = vrot.lane.b32.xlu0 %v632, 64
      %v647 = vpop.permute.xlu0 %646
      %648 = vrot.lane.b32.xlu0 %v633, 64
      %v649 = vpop.permute.xlu0 %648
      %v652 = vsel %vm493, %v578, %v635
      %v653 = vsel %vm493, %v372, %v635
      %v656 = vsel %vm493, %v579, %v637
      %v657 = vsel %vm493, %v373, %v637
      %v660 = vsel %vm493, %v580, %v639
      %v661 = vsel %vm493, %v374, %v639
      %v664 = vsel %vm493, %v581, %v641
      %v665 = vsel %vm493, %v375, %v641
      %v668 = vsel %vm493, %v582, %v643
      %v669 = vsel %vm493, %v376, %v643
      %v672 = vsel %vm493, %v583, %v645
      %v673 = vsel %vm493, %v377, %v645
      %v676 = vsel %vm493, %v584, %v647
      %v677 = vsel %vm493, %v378, %v647
      %v680 = vsel %vm493, %v585, %v649
      %v681 = vsel %vm493, %v379, %v649
      %vm698 = vcmask 1046528
      %v699 = vrot.slane %v652, 1
      %v700 = vrot.slane %v653, 1
      %v701 = vsel %vm698, %v699, %v700
      %v702 = vrot.slane %v656, 1
      %v703 = vrot.slane %v657, 1
      %v704 = vsel %vm698, %v702, %v703
      %v705 = vrot.slane %v660, 1
      %v706 = vrot.slane %v661, 1
      %v707 = vsel %vm698, %v705, %v706
      %v708 = vrot.slane %v664, 1
      %v709 = vrot.slane %v665, 1
      %v710 = vsel %vm698, %v708, %v709
      %v711 = vrot.slane %v668, 1
      %v712 = vrot.slane %v669, 1
      %v713 = vsel %vm698, %v711, %v712
      %v714 = vrot.slane %v672, 1
      %v715 = vrot.slane %v673, 1
      %v716 = vsel %vm698, %v714, %v715
      %v717 = vrot.slane %v676, 1
      %v718 = vrot.slane %v677, 1
      %v719 = vsel %vm698, %v717, %v718
      %v720 = vrot.slane %v680, 1
      %v721 = vrot.slane %v681, 1
      %v722 = vsel %vm698, %v720, %v721
      %s731 = scalar_lea.vmem %s1, 64
      %v732 = vld [vmem:[%s731] sm:$0xf]
      %v733 = vld [vmem:[%s731 + $0x4] sm:$0xf]
      %v734 = vld [vmem:[%s731 + $0x8] sm:$0xf]
      %v735 = vld [vmem:[%s731 + $0xc] sm:$0xf]
      %v736 = vld [vmem:[%s731 + $0x10] sm:$0xf]
      %v737 = vld [vmem:[%s731 + $0x14] sm:$0xf]
      %v738 = vld [vmem:[%s731 + $0x18] sm:$0xf]
      %v739 = vld [vmem:[%s731 + $0x1c] sm:$0xf]
      %v740 = vld [vmem:[%s731 + $0x20] sm:$0xf]
      %v741 = vld [vmem:[%s731 + $0x24] sm:$0xf]
      %v742 = vld [vmem:[%s731 + $0x28] sm:$0xf]
      %v743 = vld [vmem:[%s731 + $0x2c] sm:$0xf]
      %v744 = vld [vmem:[%s731 + $0x30] sm:$0xf]
      %v745 = vld [vmem:[%s731 + $0x34] sm:$0xf]
      %v746 = vld [vmem:[%s731 + $0x38] sm:$0xf]
      %v747 = vld [vmem:[%s731 + $0x3c] sm:$0xf]
      %v764 = vunpack.c.l.b16 %v732
      %v765 = vunpack.c.l.b16 %v733
      %v766 = vunpack.c.l.b16 %v734
      %v767 = vunpack.c.l.b16 %v735
      %v768 = vunpack.c.l.b16 %v736
      %v769 = vunpack.c.l.b16 %v737
      %v770 = vunpack.c.l.b16 %v738
      %v771 = vunpack.c.l.b16 %v739
      %v772 = vunpack.c.l.b16 %v740
      %v773 = vunpack.c.l.b16 %v741
      %v774 = vunpack.c.l.b16 %v742
      %v775 = vunpack.c.l.b16 %v743
      %v776 = vunpack.c.l.b16 %v744
      %v777 = vunpack.c.l.b16 %v745
      %v778 = vunpack.c.l.b16 %v746
      %v779 = vunpack.c.l.b16 %v747
      %v780 = vpack.c.b16 %v765, %v764
      %v781 = vpack.c.b16 %v767, %v766
      %v782 = vpack.c.b16 %v769, %v768
      %v783 = vpack.c.b16 %v771, %v770
      %v784 = vpack.c.b16 %v773, %v772
      %v785 = vpack.c.b16 %v775, %v774
      %v786 = vpack.c.b16 %v777, %v776
      %v787 = vpack.c.b16 %v779, %v778
      %796 = vmatprep.subr.bf16.mxu0 0
      %797 = vmatpush1.bf16.msra.mxu0 %v780
      %798 = vmatprep.subr.bf16.mxu0 0
      %799 = vmatpush1.bf16.msra.mxu0 %v781
      %800 = vmatprep.subr.bf16.mxu0 0
      %801 = vmatpush1.bf16.msra.mxu0 %v782
      %802 = vmatprep.subr.bf16.mxu0 0
      %803 = vmatpush1.bf16.msra.mxu0 %v783
      %804 = vmatprep.subr.bf16.mxu0 0
      %805 = vmatpush1.bf16.msra.mxu0 %v784
      %806 = vmatprep.subr.bf16.mxu0 0
      %807 = vmatpush1.bf16.msra.mxu0 %v785
      %808 = vmatprep.subr.bf16.mxu0 0
      %809 = vmatpush1.bf16.msra.mxu0 %v786
      %810 = vmatprep.subr.bf16.mxu0 0
      %811 = vmatpush1.bf16.msra.mxu0 %v787
      %812 = vmatprep.subr.bf16.mxu0 0
      %813 = vmatpush1.bf16.msra.mxu0 0
      %814 = vmatprep.subr.bf16.mxu0 0
      %815 = vmatpush1.bf16.msra.mxu0 0
      %816 = vmatprep.subr.bf16.mxu0 0
      %817 = vmatpush1.bf16.msra.mxu0 0
      %818 = vmatprep.subr.bf16.mxu0 0
      %819 = vmatpush1.bf16.msra.mxu0 0
      %820 = vmatprep.subr.bf16.mxu0 0
      %821 = vmatpush1.bf16.msra.mxu0 0
      %822 = vmatprep.subr.bf16.mxu0 0
      %823 = vmatpush1.bf16.msra.mxu0 0
      %824 = vmatprep.subr.bf16.mxu0 0
      %825 = vmatpush1.bf16.msra.mxu0 0
      %826 = vmatprep.subr.bf16.mxu0 0
      %827 = vmatpush1.bf16.msra.mxu0 0
      %828 = vmatprep.mubr.bf16.mxu0 0
      %829 = vmatmul.mubr.bf16.gmra.mrb[0].mxu0 %v701
      %v830 = vpop.f32.mrb[0].mxu0
      %v831 = vadd.f32 0.0, %v830
      %v832 = vpop.f32.mrb[0].mxu0
      %v833 = vpop.f32.mrb[0].mxu0
      %v834 = vadd.f32 0.0, %v833
      %v835 = vpop.f32.mrb[0].mxu0
      %836 = vmatprep.mubr.bf16.mxu0 0
      %837 = vmatmul.mubr.bf16.gmra.mrb[0].mxu0 %v704
      %v838 = vpop.f32.mrb[0].mxu0
      %v839 = vadd.f32 0.0, %v838
      %v840 = vpop.f32.mrb[0].mxu0
      %v841 = vpop.f32.mrb[0].mxu0
      %v842 = vadd.f32 0.0, %v841
      %v843 = vpop.f32.mrb[0].mxu0
      %844 = vmatprep.mubr.bf16.mxu0 0
      %845 = vmatmul.mubr.bf16.gmra.mrb[0].mxu0 %v707
      %v846 = vpop.f32.mrb[0].mxu0
      %v847 = vadd.f32 0.0, %v846
      %v848 = vpop.f32.mrb[0].mxu0
      %v849 = vpop.f32.mrb[0].mxu0
      %v850 = vadd.f32 0.0, %v849
      %v851 = vpop.f32.mrb[0].mxu0
      %852 = vmatprep.mubr.bf16.mxu0 0
      %853 = vmatmul.mubr.bf16.gmra.mrb[0].mxu0 %v710
      %v854 = vpop.f32.mrb[0].mxu0
      %v855 = vadd.f32 0.0, %v854
      %v856 = vpop.f32.mrb[0].mxu0
      %v857 = vpop.f32.mrb[0].mxu0
      %v858 = vadd.f32 0.0, %v857
      %v859 = vpop.f32.mrb[0].mxu0
      %860 = vmatprep.mubr.bf16.mxu0 0
      %861 = vmatmul.mubr.bf16.gmra.mrb[0].mxu0 %v713
      %v862 = vpop.f32.mrb[0].mxu0
      %v863 = vadd.f32 0.0, %v862
      %v864 = vpop.f32.mrb[0].mxu0
      %v865 = vpop.f32.mrb[0].mxu0
      %v866 = vadd.f32 0.0, %v865
      %v867 = vpop.f32.mrb[0].mxu0
      %868 = vmatprep.mubr.bf16.mxu0 0
      %869 = vmatmul.mubr.bf16.gmra.mrb[0].mxu0 %v716
      %v870 = vpop.f32.mrb[0].mxu0
      %v871 = vadd.f32 0.0, %v870
      %v872 = vpop.f32.mrb[0].mxu0
      %v873 = vpop.f32.mrb[0].mxu0
      %v874 = vadd.f32 0.0, %v873
      %v875 = vpop.f32.mrb[0].mxu0
      %876 = vmatprep.mubr.bf16.mxu0 0
      %877 = vmatmul.mubr.bf16.gmra.mrb[0].mxu0 %v719
      %v878 = vpop.f32.mrb[0].mxu0
      %v879 = vadd.f32 0.0, %v878
      %v880 = vpop.f32.mrb[0].mxu0
      %v881 = vpop.f32.mrb[0].mxu0
      %v882 = vadd.f32 0.0, %v881
      %v883 = vpop.f32.mrb[0].mxu0
      %884 = vmatprep.mubr.bf16.mxu0 0
      %885 = vmatmul.mubr.bf16.gmra.mrb[0].mxu0 %v722
      %v886 = vpop.f32.mrb[0].mxu0
      %v887 = vadd.f32 0.0, %v886
      %v888 = vpop.f32.mrb[0].mxu0
      %v889 = vpop.f32.mrb[0].mxu0
      %v890 = vadd.f32 0.0, %v889
      %v891 = vpop.f32.mrb[0].mxu0
      %892 = vdwg.mxu0
      %v909 = vunpack.c.l.b16 %v518
      %v910 = vunpack.c.l.b16 %v519
      %v911 = vunpack.c.l.b16 %v520
      %v912 = vunpack.c.l.b16 %v521
      %v913 = vunpack.c.l.b16 %v522
      %v914 = vunpack.c.l.b16 %v523
      %v915 = vunpack.c.l.b16 %v524
      %v916 = vunpack.c.l.b16 %v525
      %v917 = vunpack.c.l.b16 %v526
      %v918 = vunpack.c.l.b16 %v527
      %v919 = vunpack.c.l.b16 %v528
      %v920 = vunpack.c.l.b16 %v529
      %v921 = vunpack.c.l.b16 %v530
      %v922 = vunpack.c.l.b16 %v531
      %v923 = vunpack.c.l.b16 %v532
      %v924 = vunpack.c.l.b16 %v533
      %v925 = vpack.c.b16 %v910, %v909
      %v926 = vpack.c.b16 %v912, %v911
      %v927 = vpack.c.b16 %v914, %v913
      %v928 = vpack.c.b16 %v916, %v915
      %v929 = vpack.c.b16 %v918, %v917
      %v930 = vpack.c.b16 %v920, %v919
      %v931 = vpack.c.b16 %v922, %v921
      %v932 = vpack.c.b16 %v924, %v923
      %941 = vmatprep.subr.bf16.mxu0 0
      %942 = vmatpush1.bf16.msra.mxu0 %v925
      %943 = vmatprep.subr.bf16.mxu0 0
      %944 = vmatpush1.bf16.msra.mxu0 %v926
      %945 = vmatprep.subr.bf16.mxu0 0
      %946 = vmatpush1.bf16.msra.mxu0 %v927
      %947 = vmatprep.subr.bf16.mxu0 0
      %948 = vmatpush1.bf16.msra.mxu0 %v928
      %949 = vmatprep.subr.bf16.mxu0 0
      %950 = vmatpush1.bf16.msra.mxu0 %v929
      %951 = vmatprep.subr.bf16.mxu0 0
      %952 = vmatpush1.bf16.msra.mxu0 %v930
      %953 = vmatprep.subr.bf16.mxu0 0
      %954 = vmatpush1.bf16.msra.mxu0 %v931
      %955 = vmatprep.subr.bf16.mxu0 0
      %956 = vmatpush1.bf16.msra.mxu0 %v932
      %957 = vmatprep.subr.bf16.mxu0 0
      %958 = vmatpush1.bf16.msra.mxu0 0
      %959 = vmatprep.subr.bf16.mxu0 0
      %960 = vmatpush1.bf16.msra.mxu0 0
      %961 = vmatprep.subr.bf16.mxu0 0
      %962 = vmatpush1.bf16.msra.mxu0 0
      %963 = vmatprep.subr.bf16.mxu0 0
      %964 = vmatpush1.bf16.msra.mxu0 0
      %965 = vmatprep.subr.bf16.mxu0 0
      %966 = vmatpush1.bf16.msra.mxu0 0
      %967 = vmatprep.subr.bf16.mxu0 0
      %968 = vmatpush1.bf16.msra.mxu0 0
      %969 = vmatprep.subr.bf16.mxu0 0
      %970 = vmatpush1.bf16.msra.mxu0 0
      %971 = vmatprep.subr.bf16.mxu0 0
      %972 = vmatpush1.bf16.msra.mxu0 0
      %973 = vmatprep.mubr.bf16.mxu0 0
      %974 = vmatmul.mubr.bf16.gmra.mrb[0].mxu0 %v495
      %v975 = vpop.f32.mrb[0].mxu0
      %v976 = vadd.f32 %v831, %v975
      %v977 = vpop.f32.mrb[0].mxu0
      %v978 = vpop.f32.mrb[0].mxu0
      %v979 = vadd.f32 %v834, %v978
      %v980 = vpop.f32.mrb[0].mxu0
      %981 = vmatprep.mubr.bf16.mxu0 0
      %982 = vmatmul.mubr.bf16.gmra.mrb[0].mxu0 %v498
      %v983 = vpop.f32.mrb[0].mxu0
      %v984 = vadd.f32 %v839, %v983
      %v985 = vpop.f32.mrb[0].mxu0
      %v986 = vpop.f32.mrb[0].mxu0
      %v987 = vadd.f32 %v842, %v986
      %v988 = vpop.f32.mrb[0].mxu0
      %989 = vmatprep.mubr.bf16.mxu0 0
      %990 = vmatmul.mubr.bf16.gmra.mrb[0].mxu0 %v501
      %v991 = vpop.f32.mrb[0].mxu0
      %v992 = vadd.f32 %v847, %v991
      %v993 = vpop.f32.mrb[0].mxu0
      %v994 = vpop.f32.mrb[0].mxu0
      %v995 = vadd.f32 %v850, %v994
      %v996 = vpop.f32.mrb[0].mxu0
      %997 = vmatprep.mubr.bf16.mxu0 0
      %998 = vmatmul.mubr.bf16.gmra.mrb[0].mxu0 %v504
      %v999 = vpop.f32.mrb[0].mxu0
      %v1000 = vadd.f32 %v855, %v999
      %v1001 = vpop.f32.mrb[0].mxu0
      %v1002 = vpop.f32.mrb[0].mxu0
      %v1003 = vadd.f32 %v858, %v1002
      %v1004 = vpop.f32.mrb[0].mxu0
      %1005 = vmatprep.mubr.bf16.mxu0 0
      %1006 = vmatmul.mubr.bf16.gmra.mrb[0].mxu0 %v507
      %v1007 = vpop.f32.mrb[0].mxu0
      %v1008 = vadd.f32 %v863, %v1007
      %v1009 = vpop.f32.mrb[0].mxu0
      %v1010 = vpop.f32.mrb[0].mxu0
      %v1011 = vadd.f32 %v866, %v1010
      %v1012 = vpop.f32.mrb[0].mxu0
      %1013 = vmatprep.mubr.bf16.mxu0 0
      %1014 = vmatmul.mubr.bf16.gmra.mrb[0].mxu0 %v510
      %v1015 = vpop.f32.mrb[0].mxu0
      %v1016 = vadd.f32 %v871, %v1015
      %v1017 = vpop.f32.mrb[0].mxu0
      %v1018 = vpop.f32.mrb[0].mxu0
      %v1019 = vadd.f32 %v874, %v1018
      %v1020 = vpop.f32.mrb[0].mxu0
      %1021 = vmatprep.mubr.bf16.mxu0 0
      %1022 = vmatmul.mubr.bf16.gmra.mrb[0].mxu0 %v513
      %v1023 = vpop.f32.mrb[0].mxu0
      %v1024 = vadd.f32 %v879, %v1023
      %v1025 = vpop.f32.mrb[0].mxu0
      %v1026 = vpop.f32.mrb[0].mxu0
      %v1027 = vadd.f32 %v882, %v1026
      %v1028 = vpop.f32.mrb[0].mxu0
      %1029 = vmatprep.mubr.bf16.mxu0 0
      %1030 = vmatmul.mubr.bf16.gmra.mrb[0].mxu0 %v516
      %v1031 = vpop.f32.mrb[0].mxu0
      %v1032 = vadd.f32 %v887, %v1031
      %v1033 = vpop.f32.mrb[0].mxu0
      %v1034 = vpop.f32.mrb[0].mxu0
      %v1035 = vadd.f32 %v890, %v1034
      %v1036 = vpop.f32.mrb[0].mxu0
      %1037 = vdwg.mxu0
      %v1038 = vld [vmem:[%s545] sm:$0xf]
      %v1039 = vld [vmem:[%s545 + $0x4] sm:$0xf]
      %v1040 = vld [vmem:[%s545 + $0x8] sm:$0x1]
      %v1041 = vld [vmem:[%s545 + $0xc] sm:$0xf]
      %v1042 = vld [vmem:[%s545 + $0x10] sm:$0xf]
      %v1043 = vld [vmem:[%s545 + $0x14] sm:$0x1]
      %v1044 = vld [vmem:[%s545 + $0x18] sm:$0xf]
      %v1045 = vld [vmem:[%s545 + $0x1c] sm:$0xf]
      %v1046 = vld [vmem:[%s545 + $0x20] sm:$0x1]
      %v1047 = vld [vmem:[%s545 + $0x24] sm:$0xf]
      %v1048 = vld [vmem:[%s545 + $0x28] sm:$0xf]
      %v1049 = vld [vmem:[%s545 + $0x2c] sm:$0x1]
      %v1050 = vld [vmem:[%s545 + $0x30] sm:$0xf]
      %v1051 = vld [vmem:[%s545 + $0x34] sm:$0xf]
      %v1052 = vld [vmem:[%s545 + $0x38] sm:$0x1]
      %v1053 = vld [vmem:[%s545 + $0x3c] sm:$0xf]
      %v1054 = vld [vmem:[%s545 + $0x40] sm:$0xf]
      %v1055 = vld [vmem:[%s545 + $0x44] sm:$0x1]
      %v1056 = vld [vmem:[%s545 + $0x48] sm:$0xf]
      %v1057 = vld [vmem:[%s545 + $0x4c] sm:$0xf]
      %v1058 = vld [vmem:[%s545 + $0x50] sm:$0x1]
      %v1059 = vld [vmem:[%s545 + $0x54] sm:$0xf]
      %v1060 = vld [vmem:[%s545 + $0x58] sm:$0xf]
      %v1061 = vld [vmem:[%s545 + $0x5c] sm:$0x1]
      %v1062 = vld [vmem:[%s545] sm:$0xe]
      %v1063 = vld [vmem:[%s545 + $0xc] sm:$0xe]
      %v1064 = vld [vmem:[%s545 + $0x18] sm:$0xe]
      %v1065 = vld [vmem:[%s545 + $0x24] sm:$0xe]
      %v1066 = vld [vmem:[%s545 + $0x30] sm:$0xe]
      %v1067 = vld [vmem:[%s545 + $0x3c] sm:$0xe]
      %v1068 = vld [vmem:[%s545 + $0x48] sm:$0xe]
      %v1069 = vld [vmem:[%s545 + $0x54] sm:$0xe]
      %v1094 = vunpack.c.l.b16 %v1038
      %v1095 = vunpack.c.l.b16 %v1039
      %v1096 = vunpack.c.l.b16 %v1040
      %v1097 = vunpack.c.l.b16 %v1041
      %v1098 = vunpack.c.l.b16 %v1042
      %v1099 = vunpack.c.l.b16 %v1043
      %v1100 = vunpack.c.l.b16 %v1044
      %v1101 = vunpack.c.l.b16 %v1045
      %v1102 = vunpack.c.l.b16 %v1046
      %v1103 = vunpack.c.l.b16 %v1047
      %v1104 = vunpack.c.l.b16 %v1048
      %v1105 = vunpack.c.l.b16 %v1049
      %v1106 = vunpack.c.l.b16 %v1050
      %v1107 = vunpack.c.l.b16 %v1051
      %v1108 = vunpack.c.l.b16 %v1052
      %v1109 = vunpack.c.l.b16 %v1053
      %v1110 = vunpack.c.l.b16 %v1054
      %v1111 = vunpack.c.l.b16 %v1055
      %v1112 = vunpack.c.l.b16 %v1056
      %v1113 = vunpack.c.l.b16 %v1057
      %v1114 = vunpack.c.l.b16 %v1058
      %v1115 = vunpack.c.l.b16 %v1059
      %v1116 = vunpack.c.l.b16 %v1060
      %v1117 = vunpack.c.l.b16 %v1061
      %v1118 = vpack.c.b16 %v1095, %v1094
      %v1119 = vpack.c.b16 %v1096, %v1096
      %v1120 = vpack.c.b16 %v1098, %v1097
      %v1121 = vpack.c.b16 %v1099, %v1099
      %v1122 = vpack.c.b16 %v1101, %v1100
      %v1123 = vpack.c.b16 %v1102, %v1102
      %v1124 = vpack.c.b16 %v1104, %v1103
      %v1125 = vpack.c.b16 %v1105, %v1105
      %v1126 = vpack.c.b16 %v1107, %v1106
      %v1127 = vpack.c.b16 %v1108, %v1108
      %v1128 = vpack.c.b16 %v1110, %v1109
      %v1129 = vpack.c.b16 %v1111, %v1111
      %v1130 = vpack.c.b16 %v1113, %v1112
      %v1131 = vpack.c.b16 %v1114, %v1114
      %v1132 = vpack.c.b16 %v1116, %v1115
      %v1133 = vpack.c.b16 %v1117, %v1117
      %v1142 = vunpack.c.l.b16 %v1062
      %v1143 = vunpack.c.l.b16 %v1063
      %v1144 = vunpack.c.l.b16 %v1064
      %v1145 = vunpack.c.l.b16 %v1065
      %v1146 = vunpack.c.l.b16 %v1066
      %v1147 = vunpack.c.l.b16 %v1067
      %v1148 = vunpack.c.l.b16 %v1068
      %v1149 = vunpack.c.l.b16 %v1069
      %v1150 = vpack.c.b16 %v1095, %v1142
      %v1151 = vpack.c.b16 %v1098, %v1143
      %v1152 = vpack.c.b16 %v1101, %v1144
      %v1153 = vpack.c.b16 %v1104, %v1145
      %v1154 = vpack.c.b16 %v1107, %v1146
      %v1155 = vpack.c.b16 %v1110, %v1147
      %v1156 = vpack.c.b16 %v1113, %v1148
      %v1157 = vpack.c.b16 %v1116, %v1149
      %v1159 = vshrl.u32 %v1150, 16
      %v1161 = vshll.u32 %v1150, 16
      %v1163 = vrot.slane %v1161, 1
      %v1164 = vor.u32 %v1159, %v1163
      %v1166 = vshll.u32 %v1119, 16
      %v1168 = vrot.slane %v1166, 1
      %v1169 = vsel %vm380, %v1164, %v1168
      %v1170 = vshrl.u32 %v1119, 16
      %v1173 = vshrl.u32 %v1151, 16
      %v1175 = vshll.u32 %v1151, 16
      %v1177 = vrot.slane %v1175, 1
      %v1178 = vor.u32 %v1173, %v1177
      %v1180 = vshll.u32 %v1121, 16
      %v1182 = vrot.slane %v1180, 1
      %v1183 = vsel %vm380, %v1178, %v1182
      %v1184 = vshrl.u32 %v1121, 16
      %v1187 = vshrl.u32 %v1152, 16
      %v1189 = vshll.u32 %v1152, 16
      %v1191 = vrot.slane %v1189, 1
      %v1192 = vor.u32 %v1187, %v1191
      %v1194 = vshll.u32 %v1123, 16
      %v1196 = vrot.slane %v1194, 1
      %v1197 = vsel %vm380, %v1192, %v1196
      %v1198 = vshrl.u32 %v1123, 16
      %v1201 = vshrl.u32 %v1153, 16
      %v1203 = vshll.u32 %v1153, 16
      %v1205 = vrot.slane %v1203, 1
      %v1206 = vor.u32 %v1201, %v1205
      %v1208 = vshll.u32 %v1125, 16
      %v1210 = vrot.slane %v1208, 1
      %v1211 = vsel %vm380, %v1206, %v1210
      %v1212 = vshrl.u32 %v1125, 16
      %v1215 = vshrl.u32 %v1154, 16
      %v1217 = vshll.u32 %v1154, 16
      %v1219 = vrot.slane %v1217, 1
      %v1220 = vor.u32 %v1215, %v1219
      %v1222 = vshll.u32 %v1127, 16
      %v1224 = vrot.slane %v1222, 1
      %v1225 = vsel %vm380, %v1220, %v1224
      %v1226 = vshrl.u32 %v1127, 16
      %v1229 = vshrl.u32 %v1155, 16
      %v1231 = vshll.u32 %v1155, 16
      %v1233 = vrot.slane %v1231, 1
      %v1234 = vor.u32 %v1229, %v1233
      %v1236 = vshll.u32 %v1129, 16
      %v1238 = vrot.slane %v1236, 1
      %v1239 = vsel %vm380, %v1234, %v1238
      %v1240 = vshrl.u32 %v1129, 16
      %v1243 = vshrl.u32 %v1156, 16
      %v1245 = vshll.u32 %v1156, 16
      %v1247 = vrot.slane %v1245, 1
      %v1248 = vor.u32 %v1243, %v1247
      %v1250 = vshll.u32 %v1131, 16
      %v1252 = vrot.slane %v1250, 1
      %v1253 = vsel %vm380, %v1248, %v1252
      %v1254 = vshrl.u32 %v1131, 16
      %v1257 = vshrl.u32 %v1157, 16
      %v1259 = vshll.u32 %v1157, 16
      %v1261 = vrot.slane %v1259, 1
      %v1262 = vor.u32 %v1257, %v1261
      %v1264 = vshll.u32 %v1133, 16
      %v1266 = vrot.slane %v1264, 1
      %v1267 = vsel %vm380, %v1262, %v1266
      %v1268 = vshrl.u32 %v1133, 16
      %1270 = vrot.lane.b32.xlu0 %v1169, 64
      %v1271 = vpop.permute.xlu0 %1270
      %1272 = vrot.lane.b32.xlu0 %v1170, 64
      %v1273 = vpop.permute.xlu0 %1272
      %1274 = vrot.lane.b32.xlu0 %v1183, 64
      %v1275 = vpop.permute.xlu0 %1274
      %1276 = vrot.lane.b32.xlu0 %v1184, 64
      %v1277 = vpop.permute.xlu0 %1276
      %1278 = vrot.lane.b32.xlu0 %v1197, 64
      %v1279 = vpop.permute.xlu0 %1278
      %1280 = vrot.lane.b32.xlu0 %v1198, 64
      %v1281 = vpop.permute.xlu0 %1280
      %1282 = vrot.lane.b32.xlu0 %v1211, 64
      %v1283 = vpop.permute.xlu0 %1282
      %1284 = vrot.lane.b32.xlu0 %v1212, 64
      %v1285 = vpop.permute.xlu0 %1284
      %1286 = vrot.lane.b32.xlu0 %v1225, 64
      %v1287 = vpop.permute.xlu0 %1286
      %1288 = vrot.lane.b32.xlu0 %v1226, 64
      %v1289 = vpop.permute.xlu0 %1288
      %1290 = vrot.lane.b32.xlu0 %v1239, 64
      %v1291 = vpop.permute.xlu0 %1290
      %1292 = vrot.lane.b32.xlu0 %v1240, 64
      %v1293 = vpop.permute.xlu0 %1292
      %1294 = vrot.lane.b32.xlu0 %v1253, 64
      %v1295 = vpop.permute.xlu0 %1294
      %1296 = vrot.lane.b32.xlu0 %v1254, 64
      %v1297 = vpop.permute.xlu0 %1296
      %1298 = vrot.lane.b32.xlu0 %v1267, 64
      %v1299 = vpop.permute.xlu0 %1298
      %1300 = vrot.lane.b32.xlu0 %v1268, 64
      %v1301 = vpop.permute.xlu0 %1300
      %v1304 = vsel %vm493, %v1118, %v1271
      %v1306 = vsel %vm493, %v1119, %v1273
      %v1309 = vsel %vm493, %v1120, %v1275
      %v1311 = vsel %vm493, %v1121, %v1277
      %v1314 = vsel %vm493, %v1122, %v1279
      %v1316 = vsel %vm493, %v1123, %v1281
      %v1319 = vsel %vm493, %v1124, %v1283
      %v1321 = vsel %vm493, %v1125, %v1285
      %v1324 = vsel %vm493, %v1126, %v1287
      %v1326 = vsel %vm493, %v1127, %v1289
      %v1329 = vsel %vm493, %v1128, %v1291
      %v1331 = vsel %vm493, %v1129, %v1293
      %v1334 = vsel %vm493, %v1130, %v1295
      %v1336 = vsel %vm493, %v1131, %v1297
      %v1339 = vsel %vm493, %v1132, %v1299
      %v1341 = vsel %vm493, %v1133, %v1301
      %v1342 = vshrl.u32 %v1304, 16
      %v1344 = vshll.u32 %v1304, 16
      %v1346 = vrot.slane %v1344, 1
      %v1347 = vor.u32 %v1342, %v1346
      %v1348 = vshll.u32 %v1306, 16
      %v1350 = vrot.slane %v1348, 1
      %v1351 = vsel %vm380, %v1347, %v1350
      %v1352 = vshrl.u32 %v1309, 16
      %v1354 = vshll.u32 %v1309, 16
      %v1356 = vrot.slane %v1354, 1
      %v1357 = vor.u32 %v1352, %v1356
      %v1358 = vshll.u32 %v1311, 16
      %v1360 = vrot.slane %v1358, 1
      %v1361 = vsel %vm380, %v1357, %v1360
      %v1362 = vshrl.u32 %v1314, 16
      %v1364 = vshll.u32 %v1314, 16
      %v1366 = vrot.slane %v1364, 1
      %v1367 = vor.u32 %v1362, %v1366
      %v1368 = vshll.u32 %v1316, 16
      %v1370 = vrot.slane %v1368, 1
      %v1371 = vsel %vm380, %v1367, %v1370
      %v1372 = vshrl.u32 %v1319, 16
      %v1374 = vshll.u32 %v1319, 16
      %v1376 = vrot.slane %v1374, 1
      %v1377 = vor.u32 %v1372, %v1376
      %v1378 = vshll.u32 %v1321, 16
      %v1380 = vrot.slane %v1378, 1
      %v1381 = vsel %vm380, %v1377, %v1380
      %v1382 = vshrl.u32 %v1324, 16
      %v1384 = vshll.u32 %v1324, 16
      %v1386 = vrot.slane %v1384, 1
      %v1387 = vor.u32 %v1382, %v1386
      %v1388 = vshll.u32 %v1326, 16
      %v1390 = vrot.slane %v1388, 1
      %v1391 = vsel %vm380, %v1387, %v1390
      %v1392 = vshrl.u32 %v1329, 16
      %v1394 = vshll.u32 %v1329, 16
      %v1396 = vrot.slane %v1394, 1
      %v1397 = vor.u32 %v1392, %v1396
      %v1398 = vshll.u32 %v1331, 16
      %v1400 = vrot.slane %v1398, 1
      %v1401 = vsel %vm380, %v1397, %v1400
      %v1402 = vshrl.u32 %v1334, 16
      %v1404 = vshll.u32 %v1334, 16
      %v1406 = vrot.slane %v1404, 1
      %v1407 = vor.u32 %v1402, %v1406
      %v1408 = vshll.u32 %v1336, 16
      %v1410 = vrot.slane %v1408, 1
      %v1411 = vsel %vm380, %v1407, %v1410
      %v1412 = vshrl.u32 %v1339, 16
      %v1414 = vshll.u32 %v1339, 16
      %v1416 = vrot.slane %v1414, 1
      %v1417 = vor.u32 %v1412, %v1416
      %v1418 = vshll.u32 %v1341, 16
      %v1420 = vrot.slane %v1418, 1
      %v1421 = vsel %vm380, %v1417, %v1420
      %s1430 = scalar_lea.vmem %s1, 128
      %v1431 = vld [vmem:[%s1430] sm:$0xf]
      %v1432 = vld [vmem:[%s1430 + $0x4] sm:$0xf]
      %v1433 = vld [vmem:[%s1430 + $0x8] sm:$0xf]
      %v1434 = vld [vmem:[%s1430 + $0xc] sm:$0xf]
      %v1435 = vld [vmem:[%s1430 + $0x10] sm:$0xf]
      %v1436 = vld [vmem:[%s1430 + $0x14] sm:$0xf]
      %v1437 = vld [vmem:[%s1430 + $0x18] sm:$0xf]
      %v1438 = vld [vmem:[%s1430 + $0x1c] sm:$0xf]
      %v1439 = vld [vmem:[%s1430 + $0x20] sm:$0xf]
      %v1440 = vld [vmem:[%s1430 + $0x24] sm:$0xf]
      %v1441 = vld [vmem:[%s1430 + $0x28] sm:$0xf]
      %v1442 = vld [vmem:[%s1430 + $0x2c] sm:$0xf]
      %v1443 = vld [vmem:[%s1430 + $0x30] sm:$0xf]
      %v1444 = vld [vmem:[%s1430 + $0x34] sm:$0xf]
      %v1445 = vld [vmem:[%s1430 + $0x38] sm:$0xf]
      %v1446 = vld [vmem:[%s1430 + $0x3c] sm:$0xf]
      %v1463 = vunpack.c.l.b16 %v1431
      %v1464 = vunpack.c.l.b16 %v1432
      %v1465 = vunpack.c.l.b16 %v1433
      %v1466 = vunpack.c.l.b16 %v1434
      %v1467 = vunpack.c.l.b16 %v1435
      %v1468 = vunpack.c.l.b16 %v1436
      %v1469 = vunpack.c.l.b16 %v1437
      %v1470 = vunpack.c.l.b16 %v1438
      %v1471 = vunpack.c.l.b16 %v1439
      %v1472 = vunpack.c.l.b16 %v1440
      %v1473 = vunpack.c.l.b16 %v1441
      %v1474 = vunpack.c.l.b16 %v1442
      %v1475 = vunpack.c.l.b16 %v1443
      %v1476 = vunpack.c.l.b16 %v1444
      %v1477 = vunpack.c.l.b16 %v1445
      %v1478 = vunpack.c.l.b16 %v1446
      %v1479 = vpack.c.b16 %v1464, %v1463
      %v1480 = vpack.c.b16 %v1466, %v1465
      %v1481 = vpack.c.b16 %v1468, %v1467
      %v1482 = vpack.c.b16 %v1470, %v1469
      %v1483 = vpack.c.b16 %v1472, %v1471
      %v1484 = vpack.c.b16 %v1474, %v1473
      %v1485 = vpack.c.b16 %v1476, %v1475
      %v1486 = vpack.c.b16 %v1478, %v1477
      %1495 = vmatprep.subr.bf16.mxu0 0
      %1496 = vmatpush1.bf16.msra.mxu0 %v1479
      %1497 = vmatprep.subr.bf16.mxu0 0
      %1498 = vmatpush1.bf16.msra.mxu0 %v1480
      %1499 = vmatprep.subr.bf16.mxu0 0
      %1500 = vmatpush1.bf16.msra.mxu0 %v1481
      %1501 = vmatprep.subr.bf16.mxu0 0
      %1502 = vmatpush1.bf16.msra.mxu0 %v1482
      %1503 = vmatprep.subr.bf16.mxu0 0
      %1504 = vmatpush1.bf16.msra.mxu0 %v1483
      %1505 = vmatprep.subr.bf16.mxu0 0
      %1506 = vmatpush1.bf16.msra.mxu0 %v1484
      %1507 = vmatprep.subr.bf16.mxu0 0
      %1508 = vmatpush1.bf16.msra.mxu0 %v1485
      %1509 = vmatprep.subr.bf16.mxu0 0
      %1510 = vmatpush1.bf16.msra.mxu0 %v1486
      %1511 = vmatprep.subr.bf16.mxu0 0
      %1512 = vmatpush1.bf16.msra.mxu0 0
      %1513 = vmatprep.subr.bf16.mxu0 0
      %1514 = vmatpush1.bf16.msra.mxu0 0
      %1515 = vmatprep.subr.bf16.mxu0 0
      %1516 = vmatpush1.bf16.msra.mxu0 0
      %1517 = vmatprep.subr.bf16.mxu0 0
      %1518 = vmatpush1.bf16.msra.mxu0 0
      %1519 = vmatprep.subr.bf16.mxu0 0
      %1520 = vmatpush1.bf16.msra.mxu0 0
      %1521 = vmatprep.subr.bf16.mxu0 0
      %1522 = vmatpush1.bf16.msra.mxu0 0
      %1523 = vmatprep.subr.bf16.mxu0 0
      %1524 = vmatpush1.bf16.msra.mxu0 0
      %1525 = vmatprep.subr.bf16.mxu0 0
      %1526 = vmatpush1.bf16.msra.mxu0 0
      %1527 = vmatprep.mubr.bf16.mxu0 0
      %1528 = vmatmul.mubr.bf16.gmra.mrb[0].mxu0 %v1351
      %v1529 = vpop.f32.mrb[0].mxu0
      %v1530 = vadd.f32 0.0, %v1529
      %v1531 = vpop.f32.mrb[0].mxu0
      %v1532 = vpop.f32.mrb[0].mxu0
      %v1533 = vadd.f32 0.0, %v1532
      %v1534 = vpop.f32.mrb[0].mxu0
      %1535 = vmatprep.mubr.bf16.mxu0 0
      %1536 = vmatmul.mubr.bf16.gmra.mrb[0].mxu0 %v1361
      %v1537 = vpop.f32.mrb[0].mxu0
      %v1538 = vadd.f32 0.0, %v1537
      %v1539 = vpop.f32.mrb[0].mxu0
      %v1540 = vpop.f32.mrb[0].mxu0
      %v1541 = vadd.f32 0.0, %v1540
      %v1542 = vpop.f32.mrb[0].mxu0
      %1543 = vmatprep.mubr.bf16.mxu0 0
      %1544 = vmatmul.mubr.bf16.gmra.mrb[0].mxu0 %v1371
      %v1545 = vpop.f32.mrb[0].mxu0
      %v1546 = vadd.f32 0.0, %v1545
      %v1547 = vpop.f32.mrb[0].mxu0
      %v1548 = vpop.f32.mrb[0].mxu0
      %v1549 = vadd.f32 0.0, %v1548
      %v1550 = vpop.f32.mrb[0].mxu0
      %1551 = vmatprep.mubr.bf16.mxu0 0
      %1552 = vmatmul.mubr.bf16.gmra.mrb[0].mxu0 %v1381
      %v1553 = vpop.f32.mrb[0].mxu0
      %v1554 = vadd.f32 0.0, %v1553
      %v1555 = vpop.f32.mrb[0].mxu0
      %v1556 = vpop.f32.mrb[0].mxu0
      %v1557 = vadd.f32 0.0, %v1556
      %v1558 = vpop.f32.mrb[0].mxu0
      %1559 = vmatprep.mubr.bf16.mxu0 0
      %1560 = vmatmul.mubr.bf16.gmra.mrb[0].mxu0 %v1391
      %v1561 = vpop.f32.mrb[0].mxu0
      %v1562 = vadd.f32 0.0, %v1561
      %v1563 = vpop.f32.mrb[0].mxu0
      %v1564 = vpop.f32.mrb[0].mxu0
      %v1565 = vadd.f32 0.0, %v1564
      %v1566 = vpop.f32.mrb[0].mxu0
      %1567 = vmatprep.mubr.bf16.mxu0 0
      %1568 = vmatmul.mubr.bf16.gmra.mrb[0].mxu0 %v1401
      %v1569 = vpop.f32.mrb[0].mxu0
      %v1570 = vadd.f32 0.0, %v1569
      %v1571 = vpop.f32.mrb[0].mxu0
      %v1572 = vpop.f32.mrb[0].mxu0
      %v1573 = vadd.f32 0.0, %v1572
      %v1574 = vpop.f32.mrb[0].mxu0
      %1575 = vmatprep.mubr.bf16.mxu0 0
      %1576 = vmatmul.mubr.bf16.gmra.mrb[0].mxu0 %v1411
      %v1577 = vpop.f32.mrb[0].mxu0
      %v1578 = vadd.f32 0.0, %v1577
      %v1579 = vpop.f32.mrb[0].mxu0
      %v1580 = vpop.f32.mrb[0].mxu0
      %v1581 = vadd.f32 0.0, %v1580
      %v1582 = vpop.f32.mrb[0].mxu0
      %1583 = vmatprep.mubr.bf16.mxu0 0
      %1584 = vmatmul.mubr.bf16.gmra.mrb[0].mxu0 %v1421
      %v1585 = vpop.f32.mrb[0].mxu0
      %v1586 = vadd.f32 0.0, %v1585
      %v1587 = vpop.f32.mrb[0].mxu0
      %v1588 = vpop.f32.mrb[0].mxu0
      %v1589 = vadd.f32 0.0, %v1588
      %v1590 = vpop.f32.mrb[0].mxu0
      %1591 = vdwg.mxu0
      %v1592 = vadd.f32 %v976, %v1530
      %v1593 = vadd.f32 %v979, %v1533
      %v1594 = vadd.f32 %v984, %v1538
      %v1595 = vadd.f32 %v987, %v1541
      %v1596 = vadd.f32 %v992, %v1546
      %v1597 = vadd.f32 %v995, %v1549
      %v1598 = vadd.f32 %v1000, %v1554
      %v1599 = vadd.f32 %v1003, %v1557
      %v1600 = vadd.f32 %v1008, %v1562
      %v1601 = vadd.f32 %v1011, %v1565
      %v1602 = vadd.f32 %v1016, %v1570
      %v1603 = vadd.f32 %v1019, %v1573
      %v1604 = vadd.f32 %v1024, %v1578
      %v1605 = vadd.f32 %v1027, %v1581
      %v1606 = vadd.f32 %v1032, %v1586
      %v1607 = vadd.f32 %v1035, %v1589
      %s1608 = sadd.s32 %s288, 2
      %s1609 = smul.u32 %s1608, 3
      %s1610 = smul.addr %s1609, 4
      %s1611 = scalar_lea.vmem %s261, %s1610
      %v1612 = vld [vmem:[%s1611] sm:$0xf]
      %v1613 = vld [vmem:[%s1611 + $0x4] sm:$0xf]
      %v1614 = vld [vmem:[%s1611 + $0xc] sm:$0xf]
      %v1615 = vld [vmem:[%s1611 + $0x10] sm:$0xf]
      %v1616 = vld [vmem:[%s1611 + $0x18] sm:$0xf]
      %v1617 = vld [vmem:[%s1611 + $0x1c] sm:$0xf]
      %v1618 = vld [vmem:[%s1611 + $0x24] sm:$0xf]
      %v1619 = vld [vmem:[%s1611 + $0x28] sm:$0xf]
      %v1620 = vld [vmem:[%s1611 + $0x30] sm:$0xf]
      %v1621 = vld [vmem:[%s1611 + $0x34] sm:$0xf]
      %v1622 = vld [vmem:[%s1611 + $0x3c] sm:$0xf]
      %v1623 = vld [vmem:[%s1611 + $0x40] sm:$0xf]
      %v1624 = vld [vmem:[%s1611 + $0x48] sm:$0xf]
      %v1625 = vld [vmem:[%s1611 + $0x4c] sm:$0xf]
      %v1626 = vld [vmem:[%s1611 + $0x54] sm:$0xf]
      %v1627 = vld [vmem:[%s1611 + $0x58] sm:$0xf]
      %v1628 = vld [vmem:[%s1611 + $0x8] sm:$0x1]
      %v1629 = vld [vmem:[%s1611 + $0x14] sm:$0x1]
      %v1630 = vld [vmem:[%s1611 + $0x20] sm:$0x1]
      %v1631 = vld [vmem:[%s1611 + $0x2c] sm:$0x1]
      %v1632 = vld [vmem:[%s1611 + $0x38] sm:$0x1]
      %v1633 = vld [vmem:[%s1611 + $0x44] sm:$0x1]
      %v1634 = vld [vmem:[%s1611 + $0x50] sm:$0x1]
      %v1635 = vld [vmem:[%s1611 + $0x5c] sm:$0x1]
      %v1652 = vunpack.c.l.b16 %v1612
      %v1653 = vunpack.c.l.b16 %v1613
      %v1654 = vunpack.c.l.b16 %v1614
      %v1655 = vunpack.c.l.b16 %v1615
      %v1656 = vunpack.c.l.b16 %v1616
      %v1657 = vunpack.c.l.b16 %v1617
      %v1658 = vunpack.c.l.b16 %v1618
      %v1659 = vunpack.c.l.b16 %v1619
      %v1660 = vunpack.c.l.b16 %v1620
      %v1661 = vunpack.c.l.b16 %v1621
      %v1662 = vunpack.c.l.b16 %v1622
      %v1663 = vunpack.c.l.b16 %v1623
      %v1664 = vunpack.c.l.b16 %v1624
      %v1665 = vunpack.c.l.b16 %v1625
      %v1666 = vunpack.c.l.b16 %v1626
      %v1667 = vunpack.c.l.b16 %v1627
      %v1668 = vpack.c.b16 %v1653, %v1652
      %v1669 = vpack.c.b16 %v1655, %v1654
      %v1670 = vpack.c.b16 %v1657, %v1656
      %v1671 = vpack.c.b16 %v1659, %v1658
      %v1672 = vpack.c.b16 %v1661, %v1660
      %v1673 = vpack.c.b16 %v1663, %v1662
      %v1674 = vpack.c.b16 %v1665, %v1664
      %v1675 = vpack.c.b16 %v1667, %v1666
      %v1684 = vunpack.c.l.b16 %v1628
      %v1685 = vunpack.c.l.b16 %v1629
      %v1686 = vunpack.c.l.b16 %v1630
      %v1687 = vunpack.c.l.b16 %v1631
      %v1688 = vunpack.c.l.b16 %v1632
      %v1689 = vunpack.c.l.b16 %v1633
      %v1690 = vunpack.c.l.b16 %v1634
      %v1691 = vunpack.c.l.b16 %v1635
      %v1692 = vpack.c.b16 %v1684, %v1684
      %v1693 = vpack.c.b16 %v1685, %v1685
      %v1694 = vpack.c.b16 %v1686, %v1686
      %v1695 = vpack.c.b16 %v1687, %v1687
      %v1696 = vpack.c.b16 %v1688, %v1688
      %v1697 = vpack.c.b16 %v1689, %v1689
      %v1698 = vpack.c.b16 %v1690, %v1690
      %v1699 = vpack.c.b16 %v1691, %v1691
      %v1701 = vshrl.u32 %v1668, 16
      %v1703 = vshll.u32 %v1668, 16
      %v1705 = vrot.slane %v1703, 1
      %v1706 = vor.u32 %v1701, %v1705
      %v1708 = vshll.u32 %v1692, 16
      %v1710 = vrot.slane %v1708, 1
      %v1711 = vsel %vm380, %v1706, %v1710
      %v1713 = vshrl.u32 %v1669, 16
      %v1715 = vshll.u32 %v1669, 16
      %v1717 = vrot.slane %v1715, 1
      %v1718 = vor.u32 %v1713, %v1717
      %v1720 = vshll.u32 %v1693, 16
      %v1722 = vrot.slane %v1720, 1
      %v1723 = vsel %vm380, %v1718, %v1722
      %v1725 = vshrl.u32 %v1670, 16
      %v1727 = vshll.u32 %v1670, 16
      %v1729 = vrot.slane %v1727, 1
      %v1730 = vor.u32 %v1725, %v1729
      %v1732 = vshll.u32 %v1694, 16
      %v1734 = vrot.slane %v1732, 1
      %v1735 = vsel %vm380, %v1730, %v1734
      %v1737 = vshrl.u32 %v1671, 16
      %v1739 = vshll.u32 %v1671, 16
      %v1741 = vrot.slane %v1739, 1
      %v1742 = vor.u32 %v1737, %v1741
      %v1744 = vshll.u32 %v1695, 16
      %v1746 = vrot.slane %v1744, 1
      %v1747 = vsel %vm380, %v1742, %v1746
      %v1749 = vshrl.u32 %v1672, 16
      %v1751 = vshll.u32 %v1672, 16
      %v1753 = vrot.slane %v1751, 1
      %v1754 = vor.u32 %v1749, %v1753
      %v1756 = vshll.u32 %v1696, 16
      %v1758 = vrot.slane %v1756, 1
      %v1759 = vsel %vm380, %v1754, %v1758
      %v1761 = vshrl.u32 %v1673, 16
      %v1763 = vshll.u32 %v1673, 16
      %v1765 = vrot.slane %v1763, 1
      %v1766 = vor.u32 %v1761, %v1765
      %v1768 = vshll.u32 %v1697, 16
      %v1770 = vrot.slane %v1768, 1
      %v1771 = vsel %vm380, %v1766, %v1770
      %v1773 = vshrl.u32 %v1674, 16
      %v1775 = vshll.u32 %v1674, 16
      %v1777 = vrot.slane %v1775, 1
      %v1778 = vor.u32 %v1773, %v1777
      %v1780 = vshll.u32 %v1698, 16
      %v1782 = vrot.slane %v1780, 1
      %v1783 = vsel %vm380, %v1778, %v1782
      %v1785 = vshrl.u32 %v1675, 16
      %v1787 = vshll.u32 %v1675, 16
      %v1789 = vrot.slane %v1787, 1
      %v1790 = vor.u32 %v1785, %v1789
      %v1792 = vshll.u32 %v1699, 16
      %v1794 = vrot.slane %v1792, 1
      %v1795 = vsel %vm380, %v1790, %v1794
      %1796 = vrot.lane.b32.xlu0 %v1711, 64
      %v1797 = vpop.permute.xlu0 %1796
      %1798 = vrot.lane.b32.xlu0 %v1723, 64
      %v1799 = vpop.permute.xlu0 %1798
      %1800 = vrot.lane.b32.xlu0 %v1735, 64
      %v1801 = vpop.permute.xlu0 %1800
      %1802 = vrot.lane.b32.xlu0 %v1747, 64
      %v1803 = vpop.permute.xlu0 %1802
      %1804 = vrot.lane.b32.xlu0 %v1759, 64
      %v1805 = vpop.permute.xlu0 %1804
      %1806 = vrot.lane.b32.xlu0 %v1771, 64
      %v1807 = vpop.permute.xlu0 %1806
      %1808 = vrot.lane.b32.xlu0 %v1783, 64
      %v1809 = vpop.permute.xlu0 %1808
      %1810 = vrot.lane.b32.xlu0 %v1795, 64
      %v1811 = vpop.permute.xlu0 %1810
      %v1813 = vsel %vm493, %v1668, %v1797
      %v1816 = vsel %vm493, %v1669, %v1799
      %v1819 = vsel %vm493, %v1670, %v1801
      %v1822 = vsel %vm493, %v1671, %v1803
      %v1825 = vsel %vm493, %v1672, %v1805
      %v1828 = vsel %vm493, %v1673, %v1807
      %v1831 = vsel %vm493, %v1674, %v1809
      %v1834 = vsel %vm493, %v1675, %v1811
      %s1836 = scalar_lea.vmem %s1, 192
      %v1837 = vld [vmem:[%s1836] sm:$0xf]
      %v1838 = vld [vmem:[%s1836 + $0x4] sm:$0xf]
      %v1839 = vld [vmem:[%s1836 + $0x8] sm:$0xf]
      %v1840 = vld [vmem:[%s1836 + $0xc] sm:$0xf]
      %v1841 = vld [vmem:[%s1836 + $0x10] sm:$0xf]
      %v1842 = vld [vmem:[%s1836 + $0x14] sm:$0xf]
      %v1843 = vld [vmem:[%s1836 + $0x18] sm:$0xf]
      %v1844 = vld [vmem:[%s1836 + $0x1c] sm:$0xf]
      %v1845 = vld [vmem:[%s1836 + $0x20] sm:$0xf]
      %v1846 = vld [vmem:[%s1836 + $0x24] sm:$0xf]
      %v1847 = vld [vmem:[%s1836 + $0x28] sm:$0xf]
      %v1848 = vld [vmem:[%s1836 + $0x2c] sm:$0xf]
      %v1849 = vld [vmem:[%s1836 + $0x30] sm:$0xf]
      %v1850 = vld [vmem:[%s1836 + $0x34] sm:$0xf]
      %v1851 = vld [vmem:[%s1836 + $0x38] sm:$0xf]
      %v1852 = vld [vmem:[%s1836 + $0x3c] sm:$0xf]
      %v1869 = vunpack.c.l.b16 %v1837
      %v1870 = vunpack.c.l.b16 %v1838
      %v1871 = vunpack.c.l.b16 %v1839
      %v1872 = vunpack.c.l.b16 %v1840
      %v1873 = vunpack.c.l.b16 %v1841
      %v1874 = vunpack.c.l.b16 %v1842
      %v1875 = vunpack.c.l.b16 %v1843
      %v1876 = vunpack.c.l.b16 %v1844
      %v1877 = vunpack.c.l.b16 %v1845
      %v1878 = vunpack.c.l.b16 %v1846
      %v1879 = vunpack.c.l.b16 %v1847
      %v1880 = vunpack.c.l.b16 %v1848
      %v1881 = vunpack.c.l.b16 %v1849
      %v1882 = vunpack.c.l.b16 %v1850
      %v1883 = vunpack.c.l.b16 %v1851
      %v1884 = vunpack.c.l.b16 %v1852
      %v1885 = vpack.c.b16 %v1870, %v1869
      %v1886 = vpack.c.b16 %v1872, %v1871
      %v1887 = vpack.c.b16 %v1874, %v1873
      %v1888 = vpack.c.b16 %v1876, %v1875
      %v1889 = vpack.c.b16 %v1878, %v1877
      %v1890 = vpack.c.b16 %v1880, %v1879
      %v1891 = vpack.c.b16 %v1882, %v1881
      %v1892 = vpack.c.b16 %v1884, %v1883
      %1901 = vmatprep.subr.bf16.mxu0 0
      %1902 = vmatpush1.bf16.msra.mxu0 %v1885
      %1903 = vmatprep.subr.bf16.mxu0 0
      %1904 = vmatpush1.bf16.msra.mxu0 %v1886
      %1905 = vmatprep.subr.bf16.mxu0 0
      %1906 = vmatpush1.bf16.msra.mxu0 %v1887
      %1907 = vmatprep.subr.bf16.mxu0 0
      %1908 = vmatpush1.bf16.msra.mxu0 %v1888
      %1909 = vmatprep.subr.bf16.mxu0 0
      %1910 = vmatpush1.bf16.msra.mxu0 %v1889
      %1911 = vmatprep.subr.bf16.mxu0 0
      %1912 = vmatpush1.bf16.msra.mxu0 %v1890
      %1913 = vmatprep.subr.bf16.mxu0 0
      %1914 = vmatpush1.bf16.msra.mxu0 %v1891
      %1915 = vmatprep.subr.bf16.mxu0 0
      %1916 = vmatpush1.bf16.msra.mxu0 %v1892
      %1917 = vmatprep.subr.bf16.mxu0 0
      %1918 = vmatpush1.bf16.msra.mxu0 0
      %1919 = vmatprep.subr.bf16.mxu0 0
      %1920 = vmatpush1.bf16.msra.mxu0 0
      %1921 = vmatprep.subr.bf16.mxu0 0
      %1922 = vmatpush1.bf16.msra.mxu0 0
      %1923 = vmatprep.subr.bf16.mxu0 0
      %1924 = vmatpush1.bf16.msra.mxu0 0
      %1925 = vmatprep.subr.bf16.mxu0 0
      %1926 = vmatpush1.bf16.msra.mxu0 0
      %1927 = vmatprep.subr.bf16.mxu0 0
      %1928 = vmatpush1.bf16.msra.mxu0 0
      %1929 = vmatprep.subr.bf16.mxu0 0
      %1930 = vmatpush1.bf16.msra.mxu0 0
      %1931 = vmatprep.subr.bf16.mxu0 0
      %1932 = vmatpush1.bf16.msra.mxu0 0
      %1933 = vmatprep.mubr.bf16.mxu0 0
      %1934 = vmatmul.mubr.bf16.gmra.mrb[0].mxu0 %v1813
      %v1935 = vpop.f32.mrb[0].mxu0
      %v1936 = vadd.f32 0.0, %v1935
      %v1937 = vpop.f32.mrb[0].mxu0
      %v1938 = vpop.f32.mrb[0].mxu0
      %v1939 = vadd.f32 0.0, %v1938
      %v1940 = vpop.f32.mrb[0].mxu0
      %1941 = vmatprep.mubr.bf16.mxu0 0
      %1942 = vmatmul.mubr.bf16.gmra.mrb[0].mxu0 %v1816
      %v1943 = vpop.f32.mrb[0].mxu0
      %v1944 = vadd.f32 0.0, %v1943
      %v1945 = vpop.f32.mrb[0].mxu0
      %v1946 = vpop.f32.mrb[0].mxu0
      %v1947 = vadd.f32 0.0, %v1946
      %v1948 = vpop.f32.mrb[0].mxu0
      %1949 = vmatprep.mubr.bf16.mxu0 0
      %1950 = vmatmul.mubr.bf16.gmra.mrb[0].mxu0 %v1819
      %v1951 = vpop.f32.mrb[0].mxu0
      %v1952 = vadd.f32 0.0, %v1951
      %v1953 = vpop.f32.mrb[0].mxu0
      %v1954 = vpop.f32.mrb[0].mxu0
      %v1955 = vadd.f32 0.0, %v1954
      %v1956 = vpop.f32.mrb[0].mxu0
      %1957 = vmatprep.mubr.bf16.mxu0 0
      %1958 = vmatmul.mubr.bf16.gmra.mrb[0].mxu0 %v1822
      %v1959 = vpop.f32.mrb[0].mxu0
      %v1960 = vadd.f32 0.0, %v1959
      %v1961 = vpop.f32.mrb[0].mxu0
      %v1962 = vpop.f32.mrb[0].mxu0
      %v1963 = vadd.f32 0.0, %v1962
      %v1964 = vpop.f32.mrb[0].mxu0
      %1965 = vmatprep.mubr.bf16.mxu0 0
      %1966 = vmatmul.mubr.bf16.gmra.mrb[0].mxu0 %v1825
      %v1967 = vpop.f32.mrb[0].mxu0
      %v1968 = vadd.f32 0.0, %v1967
      %v1969 = vpop.f32.mrb[0].mxu0
      %v1970 = vpop.f32.mrb[0].mxu0
      %v1971 = vadd.f32 0.0, %v1970
      %v1972 = vpop.f32.mrb[0].mxu0
      %1973 = vmatprep.mubr.bf16.mxu0 0
      %1974 = vmatmul.mubr.bf16.gmra.mrb[0].mxu0 %v1828
      %v1975 = vpop.f32.mrb[0].mxu0
      %v1976 = vadd.f32 0.0, %v1975
      %v1977 = vpop.f32.mrb[0].mxu0
      %v1978 = vpop.f32.mrb[0].mxu0
      %v1979 = vadd.f32 0.0, %v1978
      %v1980 = vpop.f32.mrb[0].mxu0
      %1981 = vmatprep.mubr.bf16.mxu0 0
      %1982 = vmatmul.mubr.bf16.gmra.mrb[0].mxu0 %v1831
      %v1983 = vpop.f32.mrb[0].mxu0
      %v1984 = vadd.f32 0.0, %v1983
      %v1985 = vpop.f32.mrb[0].mxu0
      %v1986 = vpop.f32.mrb[0].mxu0
      %v1987 = vadd.f32 0.0, %v1986
      %v1988 = vpop.f32.mrb[0].mxu0
      %1989 = vmatprep.mubr.bf16.mxu0 0
      %1990 = vmatmul.mubr.bf16.gmra.mrb[0].mxu0 %v1834
      %v1991 = vpop.f32.mrb[0].mxu0
      %v1992 = vadd.f32 0.0, %v1991
      %v1993 = vpop.f32.mrb[0].mxu0
      %v1994 = vpop.f32.mrb[0].mxu0
      %v1995 = vadd.f32 0.0, %v1994
      %v1996 = vpop.f32.mrb[0].mxu0
      %1997 = vdwg.mxu0
      %v1998 = vadd.f32 %v1592, %v1936
      %v1999 = vadd.f32 %v1593, %v1939
      %v2000 = vadd.f32 %v1594, %v1944
      %v2001 = vadd.f32 %v1595, %v1947
      %v2002 = vadd.f32 %v1596, %v1952
      %v2003 = vadd.f32 %v1597, %v1955
      %v2004 = vadd.f32 %v1598, %v1960
      %v2005 = vadd.f32 %v1599, %v1963
      %v2006 = vadd.f32 %v1600, %v1968
      %v2007 = vadd.f32 %v1601, %v1971
      %v2008 = vadd.f32 %v1602, %v1976
      %v2009 = vadd.f32 %v1603, %v1979
      %v2010 = vadd.f32 %v1604, %v1984
      %v2011 = vadd.f32 %v1605, %v1987
      %v2012 = vadd.f32 %v1606, %v1992
      %v2013 = vadd.f32 %v1607, %v1995
      %v2014 = vld [vmem:[%s1611] sm:$0xe]
      %v2015 = vld [vmem:[%s1611 + $0xc] sm:$0xe]
      %v2016 = vld [vmem:[%s1611 + $0x18] sm:$0xe]
      %v2017 = vld [vmem:[%s1611 + $0x24] sm:$0xe]
      %v2018 = vld [vmem:[%s1611 + $0x30] sm:$0xe]
      %v2019 = vld [vmem:[%s1611 + $0x3c] sm:$0xe]
      %v2020 = vld [vmem:[%s1611 + $0x48] sm:$0xe]
      %v2021 = vld [vmem:[%s1611 + $0x54] sm:$0xe]
      %v2030 = vunpack.c.l.b16 %v2014
      %v2031 = vunpack.c.l.b16 %v2015
      %v2032 = vunpack.c.l.b16 %v2016
      %v2033 = vunpack.c.l.b16 %v2017
      %v2034 = vunpack.c.l.b16 %v2018
      %v2035 = vunpack.c.l.b16 %v2019
      %v2036 = vunpack.c.l.b16 %v2020
      %v2037 = vunpack.c.l.b16 %v2021
      %v2038 = vpack.c.b16 %v1653, %v2030
      %v2039 = vpack.c.b16 %v1655, %v2031
      %v2040 = vpack.c.b16 %v1657, %v2032
      %v2041 = vpack.c.b16 %v1659, %v2033
      %v2042 = vpack.c.b16 %v1661, %v2034
      %v2043 = vpack.c.b16 %v1663, %v2035
      %v2044 = vpack.c.b16 %v1665, %v2036
      %v2045 = vpack.c.b16 %v1667, %v2037
      %2046 = vrot.lane.b32.xlu0 %v2038, 64
      %v2047 = vpop.permute.xlu0 %2046
      %2048 = vrot.lane.b32.xlu0 %v1692, 64
      %v2049 = vpop.permute.xlu0 %2048
      %2050 = vrot.lane.b32.xlu0 %v2039, 64
      %v2051 = vpop.permute.xlu0 %2050
      %2052 = vrot.lane.b32.xlu0 %v1693, 64
      %v2053 = vpop.permute.xlu0 %2052
      %2054 = vrot.lane.b32.xlu0 %v2040, 64
      %v2055 = vpop.permute.xlu0 %2054
      %2056 = vrot.lane.b32.xlu0 %v1694, 64
      %v2057 = vpop.permute.xlu0 %2056
      %2058 = vrot.lane.b32.xlu0 %v2041, 64
      %v2059 = vpop.permute.xlu0 %2058
      %2060 = vrot.lane.b32.xlu0 %v1695, 64
      %v2061 = vpop.permute.xlu0 %2060
      %2062 = vrot.lane.b32.xlu0 %v2042, 64
      %v2063 = vpop.permute.xlu0 %2062
      %2064 = vrot.lane.b32.xlu0 %v1696, 64
      %v2065 = vpop.permute.xlu0 %2064
      %2066 = vrot.lane.b32.xlu0 %v2043, 64
      %v2067 = vpop.permute.xlu0 %2066
      %2068 = vrot.lane.b32.xlu0 %v1697, 64
      %v2069 = vpop.permute.xlu0 %2068
      %2070 = vrot.lane.b32.xlu0 %v2044, 64
      %v2071 = vpop.permute.xlu0 %2070
      %2072 = vrot.lane.b32.xlu0 %v1698, 64
      %v2073 = vpop.permute.xlu0 %2072
      %2074 = vrot.lane.b32.xlu0 %v2045, 64
      %v2075 = vpop.permute.xlu0 %2074
      %2076 = vrot.lane.b32.xlu0 %v1699, 64
      %v2077 = vpop.permute.xlu0 %2076
      %v2080 = vsel %vm493, %v2038, %v2047
      %v2082 = vsel %vm493, %v1692, %v2049
      %v2085 = vsel %vm493, %v2039, %v2051
      %v2087 = vsel %vm493, %v1693, %v2053
      %v2090 = vsel %vm493, %v2040, %v2055
      %v2092 = vsel %vm493, %v1694, %v2057
      %v2095 = vsel %vm493, %v2041, %v2059
      %v2097 = vsel %vm493, %v1695, %v2061
      %v2100 = vsel %vm493, %v2042, %v2063
      %v2102 = vsel %vm493, %v1696, %v2065
      %v2105 = vsel %vm493, %v2043, %v2067
      %v2107 = vsel %vm493, %v1697, %v2069
      %v2110 = vsel %vm493, %v2044, %v2071
      %v2112 = vsel %vm493, %v1698, %v2073
      %v2115 = vsel %vm493, %v2045, %v2075
      %v2117 = vsel %vm493, %v1699, %v2077
      %v2134 = vrot.slane %v2080, 1
      %v2135 = vrot.slane %v2082, 1
      %v2136 = vsel %vm698, %v2134, %v2135
      %v2137 = vrot.slane %v2085, 1
      %v2138 = vrot.slane %v2087, 1
      %v2139 = vsel %vm698, %v2137, %v2138
      %v2140 = vrot.slane %v2090, 1
      %v2141 = vrot.slane %v2092, 1
      %v2142 = vsel %vm698, %v2140, %v2141
      %v2143 = vrot.slane %v2095, 1
      %v2144 = vrot.slane %v2097, 1
      %v2145 = vsel %vm698, %v2143, %v2144
      %v2146 = vrot.slane %v2100, 1
      %v2147 = vrot.slane %v2102, 1
      %v2148 = vsel %vm698, %v2146, %v2147
      %v2149 = vrot.slane %v2105, 1
      %v2150 = vrot.slane %v2107, 1
      %v2151 = vsel %vm698, %v2149, %v2150
      %v2152 = vrot.slane %v2110, 1
      %v2153 = vrot.slane %v2112, 1
      %v2154 = vsel %vm698, %v2152, %v2153
      %v2155 = vrot.slane %v2115, 1
      %v2156 = vrot.slane %v2117, 1
      %v2157 = vsel %vm698, %v2155, %v2156
      %s2166 = scalar_lea.vmem %s1, 256
      %v2167 = vld [vmem:[%s2166] sm:$0xf]
      %v2168 = vld [vmem:[%s2166 + $0x4] sm:$0xf]
      %v2169 = vld [vmem:[%s2166 + $0x8] sm:$0xf]
      %v2170 = vld [vmem:[%s2166 + $0xc] sm:$0xf]
      %v2171 = vld [vmem:[%s2166 + $0x10] sm:$0xf]
      %v2172 = vld [vmem:[%s2166 + $0x14] sm:$0xf]
      %v2173 = vld [vmem:[%s2166 + $0x18] sm:$0xf]
      %v2174 = vld [vmem:[%s2166 + $0x1c] sm:$0xf]
      %v2175 = vld [vmem:[%s2166 + $0x20] sm:$0xf]
      %v2176 = vld [vmem:[%s2166 + $0x24] sm:$0xf]
      %v2177 = vld [vmem:[%s2166 + $0x28] sm:$0xf]
      %v2178 = vld [vmem:[%s2166 + $0x2c] sm:$0xf]
      %v2179 = vld [vmem:[%s2166 + $0x30] sm:$0xf]
      %v2180 = vld [vmem:[%s2166 + $0x34] sm:$0xf]
      %v2181 = vld [vmem:[%s2166 + $0x38] sm:$0xf]
      %v2182 = vld [vmem:[%s2166 + $0x3c] sm:$0xf]
      %v2199 = vunpack.c.l.b16 %v2167
      %v2200 = vunpack.c.l.b16 %v2168
      %v2201 = vunpack.c.l.b16 %v2169
      %v2202 = vunpack.c.l.b16 %v2170
      %v2203 = vunpack.c.l.b16 %v2171
      %v2204 = vunpack.c.l.b16 %v2172
      %v2205 = vunpack.c.l.b16 %v2173
      %v2206 = vunpack.c.l.b16 %v2174
      %v2207 = vunpack.c.l.b16 %v2175
      %v2208 = vunpack.c.l.b16 %v2176
      %v2209 = vunpack.c.l.b16 %v2177
      %v2210 = vunpack.c.l.b16 %v2178
      %v2211 = vunpack.c.l.b16 %v2179
      %v2212 = vunpack.c.l.b16 %v2180
      %v2213 = vunpack.c.l.b16 %v2181
      %v2214 = vunpack.c.l.b16 %v2182
      %v2215 = vpack.c.b16 %v2200, %v2199
      %v2216 = vpack.c.b16 %v2202, %v2201
      %v2217 = vpack.c.b16 %v2204, %v2203
      %v2218 = vpack.c.b16 %v2206, %v2205
      %v2219 = vpack.c.b16 %v2208, %v2207
      %v2220 = vpack.c.b16 %v2210, %v2209
      %v2221 = vpack.c.b16 %v2212, %v2211
      %v2222 = vpack.c.b16 %v2214, %v2213
      %2231 = vmatprep.subr.bf16.mxu0 0
      %2232 = vmatpush1.bf16.msra.mxu0 %v2215
      %2233 = vmatprep.subr.bf16.mxu0 0
      %2234 = vmatpush1.bf16.msra.mxu0 %v2216
      %2235 = vmatprep.subr.bf16.mxu0 0
      %2236 = vmatpush1.bf16.msra.mxu0 %v2217
      %2237 = vmatprep.subr.bf16.mxu0 0
      %2238 = vmatpush1.bf16.msra.mxu0 %v2218
      %2239 = vmatprep.subr.bf16.mxu0 0
      %2240 = vmatpush1.bf16.msra.mxu0 %v2219
      %2241 = vmatprep.subr.bf16.mxu0 0
      %2242 = vmatpush1.bf16.msra.mxu0 %v2220
      %2243 = vmatprep.subr.bf16.mxu0 0
      %2244 = vmatpush1.bf16.msra.mxu0 %v2221
      %2245 = vmatprep.subr.bf16.mxu0 0
      %2246 = vmatpush1.bf16.msra.mxu0 %v2222
      %2247 = vmatprep.subr.bf16.mxu0 0
      %2248 = vmatpush1.bf16.msra.mxu0 0
      %2249 = vmatprep.subr.bf16.mxu0 0
      %2250 = vmatpush1.bf16.msra.mxu0 0
      %2251 = vmatprep.subr.bf16.mxu0 0
      %2252 = vmatpush1.bf16.msra.mxu0 0
      %2253 = vmatprep.subr.bf16.mxu0 0
      %2254 = vmatpush1.bf16.msra.mxu0 0
      %2255 = vmatprep.subr.bf16.mxu0 0
      %2256 = vmatpush1.bf16.msra.mxu0 0
      %2257 = vmatprep.subr.bf16.mxu0 0
      %2258 = vmatpush1.bf16.msra.mxu0 0
      %2259 = vmatprep.subr.bf16.mxu0 0
      %2260 = vmatpush1.bf16.msra.mxu0 0
      %2261 = vmatprep.subr.bf16.mxu0 0
      %2262 = vmatpush1.bf16.msra.mxu0 0
      %2263 = vmatprep.mubr.bf16.mxu0 0
      %2264 = vmatmul.mubr.bf16.gmra.mrb[0].mxu0 %v2136
      %v2265 = vpop.f32.mrb[0].mxu0
      %v2266 = vadd.f32 0.0, %v2265
      %v2267 = vpop.f32.mrb[0].mxu0
      %v2268 = vpop.f32.mrb[0].mxu0
      %v2269 = vadd.f32 0.0, %v2268
      %v2270 = vpop.f32.mrb[0].mxu0
      %2271 = vmatprep.mubr.bf16.mxu0 0
      %2272 = vmatmul.mubr.bf16.gmra.mrb[0].mxu0 %v2139
      %v2273 = vpop.f32.mrb[0].mxu0
      %v2274 = vadd.f32 0.0, %v2273
      %v2275 = vpop.f32.mrb[0].mxu0
      %v2276 = vpop.f32.mrb[0].mxu0
      %v2277 = vadd.f32 0.0, %v2276
      %v2278 = vpop.f32.mrb[0].mxu0
      %2279 = vmatprep.mubr.bf16.mxu0 0
      %2280 = vmatmul.mubr.bf16.gmra.mrb[0].mxu0 %v2142
      %v2281 = vpop.f32.mrb[0].mxu0
      %v2282 = vadd.f32 0.0, %v2281
      %v2283 = vpop.f32.mrb[0].mxu0
      %v2284 = vpop.f32.mrb[0].mxu0
      %v2285 = vadd.f32 0.0, %v2284
      %v2286 = vpop.f32.mrb[0].mxu0
      %2287 = vmatprep.mubr.bf16.mxu0 0
      %2288 = vmatmul.mubr.bf16.gmra.mrb[0].mxu0 %v2145
      %v2289 = vpop.f32.mrb[0].mxu0
      %v2290 = vadd.f32 0.0, %v2289
      %v2291 = vpop.f32.mrb[0].mxu0
      %v2292 = vpop.f32.mrb[0].mxu0
      %v2293 = vadd.f32 0.0, %v2292
      %v2294 = vpop.f32.mrb[0].mxu0
      %2295 = vmatprep.mubr.bf16.mxu0 0
      %2296 = vmatmul.mubr.bf16.gmra.mrb[0].mxu0 %v2148
      %v2297 = vpop.f32.mrb[0].mxu0
      %v2298 = vadd.f32 0.0, %v2297
      %v2299 = vpop.f32.mrb[0].mxu0
      %v2300 = vpop.f32.mrb[0].mxu0
      %v2301 = vadd.f32 0.0, %v2300
      %v2302 = vpop.f32.mrb[0].mxu0
      %2303 = vmatprep.mubr.bf16.mxu0 0
      %2304 = vmatmul.mubr.bf16.gmra.mrb[0].mxu0 %v2151
      %v2305 = vpop.f32.mrb[0].mxu0
      %v2306 = vadd.f32 0.0, %v2305
      %v2307 = vpop.f32.mrb[0].mxu0
      %v2308 = vpop.f32.mrb[0].mxu0
      %v2309 = vadd.f32 0.0, %v2308
      %v2310 = vpop.f32.mrb[0].mxu0
      %2311 = vmatprep.mubr.bf16.mxu0 0
      %2312 = vmatmul.mubr.bf16.gmra.mrb[0].mxu0 %v2154
      %v2313 = vpop.f32.mrb[0].mxu0
      %v2314 = vadd.f32 0.0, %v2313
      %v2315 = vpop.f32.mrb[0].mxu0
      %v2316 = vpop.f32.mrb[0].mxu0
      %v2317 = vadd.f32 0.0, %v2316
      %v2318 = vpop.f32.mrb[0].mxu0
      %2319 = vmatprep.mubr.bf16.mxu0 0
      %2320 = vmatmul.mubr.bf16.gmra.mrb[0].mxu0 %v2157
      %v2321 = vpop.f32.mrb[0].mxu0
      %v2322 = vadd.f32 0.0, %v2321
      %v2323 = vpop.f32.mrb[0].mxu0
      %v2324 = vpop.f32.mrb[0].mxu0
      %v2325 = vadd.f32 0.0, %v2324
      %v2326 = vpop.f32.mrb[0].mxu0
      %2327 = vdwg.mxu0
      %v2328 = vadd.f32 %v1998, %v2266
      %v2329 = vadd.f32 %v1999, %v2269
      %v2330 = vadd.f32 %v2000, %v2274
      %v2331 = vadd.f32 %v2001, %v2277
      %v2332 = vadd.f32 %v2002, %v2282
      %v2333 = vadd.f32 %v2003, %v2285
      %v2334 = vadd.f32 %v2004, %v2290
      %v2335 = vadd.f32 %v2005, %v2293
      %v2336 = vadd.f32 %v2006, %v2298
      %v2337 = vadd.f32 %v2007, %v2301
      %v2338 = vadd.f32 %v2008, %v2306
      %v2339 = vadd.f32 %v2009, %v2309
      %v2340 = vadd.f32 %v2010, %v2314
      %v2341 = vadd.f32 %v2011, %v2317
      %v2342 = vadd.f32 %v2012, %v2322
      %v2343 = vadd.f32 %v2013, %v2325
      %v2344 = vld [vmem:[%s2] sm:$0x1]
      %v2346 = vlaneseq
      %v2347 = vshrl.u32 %v2346, 7
      %v2348 = vsub.s32 0, %v2347
      %v2349 = vrot.slane %v2344, %v2348
      %v2351 = vadd.f32 %v2328, %v2349
      %v2352 = vadd.f32 %v2329, %v2349
      %v2353 = vadd.f32 %v2330, %v2349
      %v2354 = vadd.f32 %v2331, %v2349
      %v2355 = vadd.f32 %v2332, %v2349
      %v2356 = vadd.f32 %v2333, %v2349
      %v2357 = vadd.f32 %v2334, %v2349
      %v2358 = vadd.f32 %v2335, %v2349
      %v2359 = vadd.f32 %v2336, %v2349
      %v2360 = vadd.f32 %v2337, %v2349
      %v2361 = vadd.f32 %v2338, %v2349
      %v2362 = vadd.f32 %v2339, %v2349
      %v2363 = vadd.f32 %v2340, %v2349
      %v2364 = vadd.f32 %v2341, %v2349
      %v2365 = vadd.f32 %v2342, %v2349
      %v2366 = vadd.f32 %v2343, %v2349
      %v2367 = vsel %vm493, %v2351, 0.0
      %v2368 = vsel %vm493, %v2352, 0.0
      %v2369 = vadd.f32 %v2367, %v2368
      %v2370 = vsel %vm493, %v2353, 0.0
      %v2371 = vadd.f32 %v2369, %v2370
      %v2372 = vsel %vm493, %v2354, 0.0
      %v2373 = vadd.f32 %v2371, %v2372
      %v2374 = vsel %vm493, %v2355, 0.0
      %v2375 = vadd.f32 %v2373, %v2374
      %v2376 = vsel %vm493, %v2356, 0.0
      %v2377 = vadd.f32 %v2375, %v2376
      %v2378 = vsel %vm493, %v2357, 0.0
      %v2379 = vadd.f32 %v2377, %v2378
      %v2380 = vsel %vm493, %v2358, 0.0
      %v2381 = vadd.f32 %v2379, %v2380
      %v2382 = vsel %vm493, %v2359, 0.0
      %v2383 = vadd.f32 %v2381, %v2382
      %v2384 = vsel %vm493, %v2360, 0.0
      %v2385 = vadd.f32 %v2383, %v2384
      %v2386 = vsel %vm493, %v2361, 0.0
      %v2387 = vadd.f32 %v2385, %v2386
      %v2388 = vsel %vm493, %v2362, 0.0
      %v2389 = vadd.f32 %v2387, %v2388
      %v2390 = vsel %vm493, %v2363, 0.0
      %v2391 = vadd.f32 %v2389, %v2390
      %v2392 = vsel %vm493, %v2364, 0.0
      %v2393 = vadd.f32 %v2391, %v2392
      %v2394 = vsel %vm493, %v2365, 0.0
      %v2395 = vadd.f32 %v2393, %v2394
      %v2396 = vsel %vm493, %v2366, 0.0
      %v2397 = vadd.f32 %v2395, %v2396
      %v2398 = vrot.slane %v2397, 4
      %v2399 = vadd.f32 %v2397, %v2398
      %v2400 = vrot.slane %v2399, 2
      %v2401 = vadd.f32 %v2399, %v2400
      %v2402 = vrot.slane %v2401, 1
      %v2403 = vadd.f32 %v2401, %v2402
      %vm2404 = vcmask 516096
      %2405 = vst.msk [vmem:[%s279] sm:$0x1] %vm2404, %v2403
      %v2406 = vmul.f32 %v2351, %v2351
      %v2407 = vmul.f32 %v2352, %v2352
      %v2408 = vmul.f32 %v2353, %v2353
      %v2409 = vmul.f32 %v2354, %v2354
      %v2410 = vmul.f32 %v2355, %v2355
      %v2411 = vmul.f32 %v2356, %v2356
      %v2412 = vmul.f32 %v2357, %v2357
      %v2413 = vmul.f32 %v2358, %v2358
      %v2414 = vmul.f32 %v2359, %v2359
      %v2415 = vmul.f32 %v2360, %v2360
      %v2416 = vmul.f32 %v2361, %v2361
      %v2417 = vmul.f32 %v2362, %v2362
      %v2418 = vmul.f32 %v2363, %v2363
      %v2419 = vmul.f32 %v2364, %v2364
      %v2420 = vmul.f32 %v2365, %v2365
      %v2421 = vmul.f32 %v2366, %v2366
      %v2422 = vsel %vm493, %v2406, 0.0
      %v2423 = vsel %vm493, %v2407, 0.0
      %v2424 = vadd.f32 %v2422, %v2423
      %v2425 = vsel %vm493, %v2408, 0.0
      %v2426 = vadd.f32 %v2424, %v2425
      %v2427 = vsel %vm493, %v2409, 0.0
      %v2428 = vadd.f32 %v2426, %v2427
      %v2429 = vsel %vm493, %v2410, 0.0
      %v2430 = vadd.f32 %v2428, %v2429
      %v2431 = vsel %vm493, %v2411, 0.0
      %v2432 = vadd.f32 %v2430, %v2431
      %v2433 = vsel %vm493, %v2412, 0.0
      %v2434 = vadd.f32 %v2432, %v2433
      %v2435 = vsel %vm493, %v2413, 0.0
      %v2436 = vadd.f32 %v2434, %v2435
      %v2437 = vsel %vm493, %v2414, 0.0
      %v2438 = vadd.f32 %v2436, %v2437
      %v2439 = vsel %vm493, %v2415, 0.0
      %v2440 = vadd.f32 %v2438, %v2439
      %v2441 = vsel %vm493, %v2416, 0.0
      %v2442 = vadd.f32 %v2440, %v2441
      %v2443 = vsel %vm493, %v2417, 0.0
      %v2444 = vadd.f32 %v2442, %v2443
      %v2445 = vsel %vm493, %v2418, 0.0
      %v2446 = vadd.f32 %v2444, %v2445
      %v2447 = vsel %vm493, %v2419, 0.0
      %v2448 = vadd.f32 %v2446, %v2447
      %v2449 = vsel %vm493, %v2420, 0.0
      %v2450 = vadd.f32 %v2448, %v2449
      %v2451 = vsel %vm493, %v2421, 0.0
      %v2452 = vadd.f32 %v2450, %v2451
      %v2453 = vrot.slane %v2452, 4
      %v2454 = vadd.f32 %v2452, %v2453
      %v2455 = vrot.slane %v2454, 2
      %v2456 = vadd.f32 %v2454, %v2455
      %v2457 = vrot.slane %v2456, 1
      %v2458 = vadd.f32 %v2456, %v2457
      %2459 = vst.msk [vmem:[%s286] sm:$0x1] %vm2404, %v2458
      %v2460 = vpack.c.bf16 %v2352, %v2351
      %v2461 = vpack.c.bf16 %v2354, %v2353
      %v2462 = vpack.c.bf16 %v2356, %v2355
      %v2463 = vpack.c.bf16 %v2358, %v2357
      %v2464 = vpack.c.bf16 %v2360, %v2359
      %v2465 = vpack.c.bf16 %v2362, %v2361
      %v2466 = vpack.c.bf16 %v2364, %v2363
      %v2467 = vpack.c.bf16 %v2366, %v2365
      %v2476 = vunpack.c.l.b16 %v2460
      %v2477 = vunpack.c.h.b16 %v2460
      %v2478 = vunpack.c.l.b16 %v2461
      %v2479 = vunpack.c.h.b16 %v2461
      %v2480 = vunpack.c.l.b16 %v2462
      %v2481 = vunpack.c.h.b16 %v2462
      %v2482 = vunpack.c.l.b16 %v2463
      %v2483 = vunpack.c.h.b16 %v2463
      %v2484 = vunpack.c.l.b16 %v2464
      %v2485 = vunpack.c.h.b16 %v2464
      %v2486 = vunpack.c.l.b16 %v2465
      %v2487 = vunpack.c.h.b16 %v2465
      %v2488 = vunpack.c.l.b16 %v2466
      %v2489 = vunpack.c.h.b16 %v2466
      %v2490 = vunpack.c.l.b16 %v2467
      %v2491 = vunpack.c.h.b16 %v2467
      %v2492 = vpack.c.b16 %v2476, %v2476
      %v2493 = vpack.c.b16 %v2477, %v2477
      %v2494 = vpack.c.b16 %v2478, %v2478
      %v2495 = vpack.c.b16 %v2479, %v2479
      %v2496 = vpack.c.b16 %v2480, %v2480
      %v2497 = vpack.c.b16 %v2481, %v2481
      %v2498 = vpack.c.b16 %v2482, %v2482
      %v2499 = vpack.c.b16 %v2483, %v2483
      %v2500 = vpack.c.b16 %v2484, %v2484
      %v2501 = vpack.c.b16 %v2485, %v2485
      %v2502 = vpack.c.b16 %v2486, %v2486
      %v2503 = vpack.c.b16 %v2487, %v2487
      %v2504 = vpack.c.b16 %v2488, %v2488
      %v2505 = vpack.c.b16 %v2489, %v2489
      %v2506 = vpack.c.b16 %v2490, %v2490
      %v2507 = vpack.c.b16 %v2491, %v2491
      %vm2524 = vcmask 519168
      %2525 = vst.msk [vmem:[%s271] sm:$0xf] %vm2524, %v2492
      %2526 = vst.msk [vmem:[%s271 + $0x4] sm:$0xf] %vm2524, %v2493
      %2527 = vst.msk [vmem:[%s271 + $0x8] sm:$0xf] %vm2524, %v2494
      %2528 = vst.msk [vmem:[%s271 + $0xc] sm:$0xf] %vm2524, %v2495
      %2529 = vst.msk [vmem:[%s271 + $0x10] sm:$0xf] %vm2524, %v2496
      %2530 = vst.msk [vmem:[%s271 + $0x14] sm:$0xf] %vm2524, %v2497
      %2531 = vst.msk [vmem:[%s271 + $0x18] sm:$0xf] %vm2524, %v2498
      %2532 = vst.msk [vmem:[%s271 + $0x1c] sm:$0xf] %vm2524, %v2499
      %2533 = vst.msk [vmem:[%s271 + $0x20] sm:$0xf] %vm2524, %v2500
      %2534 = vst.msk [vmem:[%s271 + $0x24] sm:$0xf] %vm2524, %v2501
      %2535 = vst.msk [vmem:[%s271 + $0x28] sm:$0xf] %vm2524, %v2502
      %2536 = vst.msk [vmem:[%s271 + $0x2c] sm:$0xf] %vm2524, %v2503
      %2537 = vst.msk [vmem:[%s271 + $0x30] sm:$0xf] %vm2524, %v2504
      %2538 = vst.msk [vmem:[%s271 + $0x34] sm:$0xf] %vm2524, %v2505
      %2539 = vst.msk [vmem:[%s271 + $0x38] sm:$0xf] %vm2524, %v2506
      %2540 = vst.msk [vmem:[%s271 + $0x3c] sm:$0xf] %vm2524, %v2507
      %s2541 = smul.u32 8, %s22
      %p2542 = scmp.lt.s32.totalorder %s21, 1
      %s2543 = scalar_select %p2542, %s21, 1
      %p2544 = scmp.lt.s32.totalorder %s2541, 15
      %s2545 = scalar_select %p2544, %s2541, 15
      %s2546 = smul.addr %s2545, 2
      %s2547 = smul.addr %s2543, 32
      %s2548 = sadd.s32 %s2546, %s2547
      %s2549 = smul.addr %s2548, 4
      %s2550 = scalar_lea.vmem %s3, %s2549
      %p2551 = scmp.lt.s32.totalorder %s21, 1
      %s2552 = scalar_select %p2551, %s21, 1
      %p2553 = scmp.lt.s32.totalorder %s22, 1
      %s2554 = scalar_select %p2553, %s22, 1
      %s2555 = smul.addr %s2552, 2
      %s2556 = sadd.s32 %s2554, %s2555
      %s2557 = scalar_lea.vmem %s4, %s2556
      %p2558 = scmp.lt.s32.totalorder %s21, 1
      %s2559 = scalar_select %p2558, %s21, 1
      %p2560 = scmp.lt.s32.totalorder %s22, 1
      %s2561 = scalar_select %p2560, %s22, 1
      %s2562 = smul.addr %s2559, 2
      %s2563 = sadd.s32 %s2561, %s2562
      %s2564 = scalar_lea.vmem %s5, %s2563
      // Predicated region
      $region33: #{compression_network_forward.5} parent=31 // pred_check
        %p2565 = pneg %p117
      $region34: #{compression_network_forward.5} parent=31 // pred_check_branch
        %2567 = sbr.rel (%p2565) target = $region36
      $region35: #{compression_network_forward.5} parent=31 // pred_region
        %s2568 = smul.u32 8, %s22
      $region36: #{compression_network_forward.5} parent=31 // pred_fallthru
        _
      // Predicated region
      $region37: #{compression_network_forward.5} parent=31 // pred_check
        %p2569 = pneg %p145
      $region38: #{compression_network_forward.5} parent=31 // pred_check_branch
        %2571 = sbr.rel (%p2569) target = $region40
      $region39: #{compression_network_forward.5} parent=31 // pred_region
        _
      $region40: #{compression_network_forward.5} parent=31 // pred_fallthru
        _
      // Predicated region
      $region41: #{compression_network_forward.5} parent=31 // pred_check
        %p2572 = pneg %p173
      $region42: #{compression_network_forward.5} parent=31 // pred_check_branch
        %2574 = sbr.rel (%p2572) target = $region44
      $region43: #{compression_network_forward.5} parent=31 // pred_region
        _
      $region44: #{compression_network_forward.5} parent=31 // pred_fallthru
        _
    $region32: #{compression_network_forward.5} parent=5 // pred_fallthru
      _
    %p2575 = scmp.le.s32.totalorder 2, %s12
    // Predicated region
    $region45: #{compression_network_forward.5} parent=5 // pred_check
      %p2576 = pneg %p2575
    $region46: #{compression_network_forward.5} parent=5 // pred_check_branch
      %2578 = sbr.rel (%p2576) target = $region48
    $region47: #{compression_network_forward.5} parent=5 // pred_region
      %s2579 = ssub.s32 %s12, 2
      // Predicated region
      $region49: #{compression_network_forward.5} parent=47 // pred_check
        %p2580 = pneg %p123
      $region50: #{compression_network_forward.5} parent=47 // pred_check_branch
        %2582 = sbr.rel (%p2580) target = $region52
      $region51: #{compression_network_forward.5} parent=47 // pred_region
        %s2583 = smul.u32 8, %s24
        %p2584 = scmp.lt.s32.totalorder %s23, 1
        %s2585 = scalar_select %p2584, %s23, 1
        %p2586 = scmp.lt.s32.totalorder %s2583, 15
        %s2587 = scalar_select %p2586, %s2583, 15
        %s2588 = smul.addr %s2587, 2
        %s2589 = smul.addr %s2585, 32
        %s2590 = sadd.s32 %s2588, %s2589
        %s2591 = smul.addr %s2590, 4
        %s2592 = scalar_lea.vmem %s3, %s2591
      $region52: #{compression_network_forward.5} parent=47 // pred_fallthru
        _
      // Predicated region
      $region53: #{compression_network_forward.5} parent=47 // pred_check
        %p2593 = pneg %p151
      $region54: #{compression_network_forward.5} parent=47 // pred_check_branch
        %2595 = sbr.rel (%p2593) target = $region56
      $region55: #{compression_network_forward.5} parent=47 // pred_region
        %p2596 = scmp.lt.s32.totalorder %s23, 1
        %s2597 = scalar_select %p2596, %s23, 1
        %p2598 = scmp.lt.s32.totalorder %s24, 1
        %s2599 = scalar_select %p2598, %s24, 1
        %s2600 = smul.addr %s2597, 2
        %s2601 = sadd.s32 %s2599, %s2600
        %s2602 = scalar_lea.vmem %s4, %s2601
      $region56: #{compression_network_forward.5} parent=47 // pred_fallthru
        _
      // Predicated region
      $region57: #{compression_network_forward.5} parent=47 // pred_check
        %p2603 = pneg %p179
      $region58: #{compression_network_forward.5} parent=47 // pred_check_branch
        %2605 = sbr.rel (%p2603) target = $region60
      $region59: #{compression_network_forward.5} parent=47 // pred_region
        %p2606 = scmp.lt.s32.totalorder %s23, 1
        %s2607 = scalar_select %p2606, %s23, 1
        %p2608 = scmp.lt.s32.totalorder %s24, 1
        %s2609 = scalar_select %p2608, %s24, 1
        %s2610 = smul.addr %s2607, 2
        %s2611 = sadd.s32 %s2609, %s2610
        %s2612 = scalar_lea.vmem %s5, %s2611
      $region60: #{compression_network_forward.5} parent=47 // pred_fallthru
        _
    $region48: #{compression_network_forward.5} parent=5 // pred_fallthru
      _
  $region6: #{compression_network_forward.5} parent=0 // loop_footer
    %s16 = sadd.s32 1, %s12
  $region7: #{compression_network_forward.5} parent=0 // loop_footer_branch
    %11 = sbr.rel target = $region3
  $region8: #{compression_network_forward.5} parent=0 // loop_exit
    _

// kernel: compression_network_forward.6
$region0: #{compression_network_forward.6}
  #allocation0 [shape = 'u32[]', space=smem, size = 0x4, offset = 0x4, fixed_abs, tag = 'smem constant byte address 0x4 - core index']
  #allocation1 [shape = 'u32[144,128]{1,0:T(1,128)}', space=vmem, size = 0x12000, scoped, tag = 'internal scratch']
  #allocation2 [shape = 'f32[1]{0:T(128)S(6)}', space=smem, size = 0x200, scoped, tag = 'scoped memory for compression_network_forward.6']
  %s0 = inlined_call_operand.vmem [shape: bf16[2,9,9,64], index: 0, kind: input, shape index: {}]
  %s1 = inlined_call_operand.vmem [shape: bf16[2,9,9,64], index: 1, kind: input, shape index: {}]
  %s2 = inlined_call_operand.vmem [shape: bf16[2,9,9,64], index: 2, kind: input, shape index: {}]
  %s3 = inlined_call_operand.vmem [shape: bf16[2,9,9,64], index: 3, kind: input, shape index: {}]
  %s4 = inlined_call_operand.vmem [shape: bf16[5,128,12], index: 4, kind: input, shape index: {}]
  %s5 = inlined_call_operand.vmem [shape: f32[1,12], index: 5, kind: input, shape index: {}]
  %s6 = inlined_call_operand.vmem [shape: f32[1,64], index: 6, kind: input, shape index: {}]
  %s7 = inlined_call_operand.vmem [shape: f32[1,64], index: 7, kind: input, shape index: {}]
  %s8 = inlined_call_operand.<no memory space> [shape: f32[1], index: 8, kind: input, shape index: {}]
  %s9 = inlined_call_operand.vmem [shape: bf16[2,8,8,12], index: 9, kind: output, shape index: {}]
  %s10 = sld [smem:[#allocation0]]
  $region69: #{compression_network_forward.6} parent=0
    _
  %s12 = ssub.s32 1, %s10
  %s13 = scalar_select 0, %s12, %s10
  %14 = sst [smem:[#allocation2]] %s8
  loop: start=0, step=1, limit=6
  $region2: #{compression_network_forward.6} parent=0 // loop_pre_header
    _
  $region3: #{compression_network_forward.6} parent=0 // loop_header
    %s16 = sphi 0, %s20
    %p17 = scmp.ge.s32.totalorder %s16, 6
    %s23 = sphi 0, %s35
    %s24 = sphi 0, %s31
    %s25 = sphi 0, %s23
    %s26 = sphi 0, %s24
    %s27 = sphi 0, %s25
    %s28 = sphi 0, %s26
    %s38 = sphi 0, %s40
    %s41 = sphi 0, %s38
    %s42 = sphi 0, %s41
    %s58 = sphi 0, %s42
    %s64 = sphi 0, %s66
    %s67 = sphi 0, %s64
    %s68 = sphi 0, %s67
    %s84 = sphi 0, %s68
    %s90 = sphi 0, %s92
    %s93 = sphi 0, %s90
    %s94 = sphi 0, %s93
    %s110 = sphi 0, %s94
    %s116 = sphi 0, %s118
    %s119 = sphi 0, %s116
    %s120 = sphi 0, %s119
    %s136 = sphi 0, %s120
    %s140 = sphi 0, %s140
    %s142 = sphi 0, %s140
    %s143 = sphi 0, %s142
    %s157 = sphi 0, %s143
    %s161 = sphi 0, %s161
    %s163 = sphi 0, %s161
    %s164 = sphi 0, %s163
    %s178 = sphi 0, %s164
    %s182 = sphi 0, %s182
    %s184 = sphi 0, %s182
    %s185 = sphi 0, %s184
    %s199 = sphi 0, %s185
    %s203 = sphi 0, %s203
    %s205 = sphi 0, %s203
    %s206 = sphi 0, %s205
    %s220 = sphi 0, %s206
    %s224 = sphi 0, %s224
    %s226 = sphi 0, %s224
    %s227 = sphi 0, %s226
    %s241 = sphi 0, %s227
    %s249 = sphi 0, %s251
    %s252 = sphi 0, %s249
    %s253 = sphi 0, %s252
    %s269 = sphi 0, %s253
  $region4: #{compression_network_forward.6} parent=0 // loop_header_branch
    %19 = sbr.rel (%p17) target = $region8
  $region5: #{compression_network_forward.6} parent=0 // loop_body
    %s21 = ssub.s32 %s16, 1
    %s22 = ssub.s32 %s16, 2
    %s29 = sadd.s32 1, %s24
    %p30 = scmp.ge.s32.totalorder %s29, 2
    %s31 = scalar_select %p30, 0, %s29
    %s32 = sadd.s32 1, %s23
    %s33 = scalar_select %p30, %s32, %s23
    %p34 = scmp.ge.s32.totalorder %s33, 2
    %s35 = scalar_select %p34, 0, %s33
    %s36 = ssub.s32 %s23, %s35
    %p37 = scmp.eq.s32.totalorder %s36, 0
    %s39 = sadd.s32 %s38, 1
    %s40 = scalar_select %p37, %s38, %s39
    %p43 = pneg %p37
    %p44 = scmp.eq.s32.totalorder %s16, 3
    %p45 = por %p43, %p44
    %p46 = scmp.ne.s32.totalorder %s38, %s41
    %p47 = scmp.eq.s32.totalorder %s16, 0
    %p48 = por %p46, %p47
    %p49 = scmp.ne.s32.totalorder %s38, %s41
    %p50 = scmp.eq.s32.totalorder %s21, 3
    %p51 = por %p49, %p50
    %p52 = scmp.ne.s32.totalorder %s41, %s42
    %p53 = scmp.eq.s32.totalorder %s21, 0
    %p54 = por %p52, %p53
    %p55 = scmp.ne.s32.totalorder %s41, %s42
    %p56 = scmp.eq.s32.totalorder %s22, 3
    %p57 = por %p55, %p56
    %p59 = scmp.ne.s32.totalorder %s42, %s58
    %p60 = scmp.eq.s32.totalorder %s22, 0
    %p61 = por %p59, %p60
    %s62 = ssub.s32 %s23, %s35
    %p63 = scmp.eq.s32.totalorder %s62, 0
    %s65 = sadd.s32 %s64, 1
    %s66 = scalar_select %p63, %s64, %s65
    %p69 = pneg %p63
    %p70 = scmp.eq.s32.totalorder %s16, 3
    %p71 = por %p69, %p70
    %p72 = scmp.ne.s32.totalorder %s64, %s67
    %p73 = scmp.eq.s32.totalorder %s16, 0
    %p74 = por %p72, %p73
    %p75 = scmp.ne.s32.totalorder %s64, %s67
    %p76 = scmp.eq.s32.totalorder %s21, 3
    %p77 = por %p75, %p76
    %p78 = scmp.ne.s32.totalorder %s67, %s68
    %p79 = scmp.eq.s32.totalorder %s21, 0
    %p80 = por %p78, %p79
    %p81 = scmp.ne.s32.totalorder %s67, %s68
    %p82 = scmp.eq.s32.totalorder %s22, 3
    %p83 = por %p81, %p82
    %p85 = scmp.ne.s32.totalorder %s68, %s84
    %p86 = scmp.eq.s32.totalorder %s22, 0
    %p87 = por %p85, %p86
    %s88 = ssub.s32 %s23, %s35
    %p89 = scmp.eq.s32.totalorder %s88, 0
    %s91 = sadd.s32 %s90, 1
    %s92 = scalar_select %p89, %s90, %s91
    %p95 = pneg %p89
    %p96 = scmp.eq.s32.totalorder %s16, 3
    %p97 = por %p95, %p96
    %p98 = scmp.ne.s32.totalorder %s90, %s93
    %p99 = scmp.eq.s32.totalorder %s16, 0
    %p100 = por %p98, %p99
    %p101 = scmp.ne.s32.totalorder %s90, %s93
    %p102 = scmp.eq.s32.totalorder %s21, 3
    %p103 = por %p101, %p102
    %p104 = scmp.ne.s32.totalorder %s93, %s94
    %p105 = scmp.eq.s32.totalorder %s21, 0
    %p106 = por %p104, %p105
    %p107 = scmp.ne.s32.totalorder %s93, %s94
    %p108 = scmp.eq.s32.totalorder %s22, 3
    %p109 = por %p107, %p108
    %p111 = scmp.ne.s32.totalorder %s94, %s110
    %p112 = scmp.eq.s32.totalorder %s22, 0
    %p113 = por %p111, %p112
    %s114 = ssub.s32 %s23, %s35
    %p115 = scmp.eq.s32.totalorder %s114, 0
    %s117 = sadd.s32 %s116, 1
    %s118 = scalar_select %p115, %s116, %s117
    %p121 = pneg %p115
    %p122 = scmp.eq.s32.totalorder %s16, 3
    %p123 = por %p121, %p122
    %p124 = scmp.ne.s32.totalorder %s116, %s119
    %p125 = scmp.eq.s32.totalorder %s16, 0
    %p126 = por %p124, %p125
    %p127 = scmp.ne.s32.totalorder %s116, %s119
    %p128 = scmp.eq.s32.totalorder %s21, 3
    %p129 = por %p127, %p128
    %p130 = scmp.ne.s32.totalorder %s119, %s120
    %p131 = scmp.eq.s32.totalorder %s21, 0
    %p132 = por %p130, %p131
    %p133 = scmp.ne.s32.totalorder %s119, %s120
    %p134 = scmp.eq.s32.totalorder %s22, 3
    %p135 = por %p133, %p134
    %p137 = scmp.ne.s32.totalorder %s120, %s136
    %p138 = scmp.eq.s32.totalorder %s22, 0
    %p139 = por %p137, %p138
    %s141 = sadd.s32 %s140, 1
    %p144 = scmp.eq.s32.totalorder %s16, 3
    %p145 = scmp.ne.s32.totalorder %s140, %s142
    %p146 = scmp.eq.s32.totalorder %s16, 0
    %p147 = por %p145, %p146
    %p148 = scmp.ne.s32.totalorder %s140, %s142
    %p149 = scmp.eq.s32.totalorder %s21, 3
    %p150 = por %p148, %p149
    %p151 = scmp.ne.s32.totalorder %s142, %s143
    %p152 = scmp.eq.s32.totalorder %s21, 0
    %p153 = por %p151, %p152
    %p154 = scmp.ne.s32.totalorder %s142, %s143
    %p155 = scmp.eq.s32.totalorder %s22, 3
    %p156 = por %p154, %p155
    %p158 = scmp.ne.s32.totalorder %s143, %s157
    %p159 = scmp.eq.s32.totalorder %s22, 0
    %p160 = por %p158, %p159
    %s162 = sadd.s32 %s161, 1
    %p165 = scmp.eq.s32.totalorder %s16, 3
    %p166 = scmp.ne.s32.totalorder %s161, %s163
    %p167 = scmp.eq.s32.totalorder %s16, 0
    %p168 = por %p166, %p167
    %p169 = scmp.ne.s32.totalorder %s161, %s163
    %p170 = scmp.eq.s32.totalorder %s21, 3
    %p171 = por %p169, %p170
    %p172 = scmp.ne.s32.totalorder %s163, %s164
    %p173 = scmp.eq.s32.totalorder %s21, 0
    %p174 = por %p172, %p173
    %p175 = scmp.ne.s32.totalorder %s163, %s164
    %p176 = scmp.eq.s32.totalorder %s22, 3
    %p177 = por %p175, %p176
    %p179 = scmp.ne.s32.totalorder %s164, %s178
    %p180 = scmp.eq.s32.totalorder %s22, 0
    %p181 = por %p179, %p180
    %s183 = sadd.s32 %s182, 1
    %p186 = scmp.eq.s32.totalorder %s16, 3
    %p187 = scmp.ne.s32.totalorder %s182, %s184
    %p188 = scmp.eq.s32.totalorder %s16, 0
    %p189 = por %p187, %p188
    %p190 = scmp.ne.s32.totalorder %s182, %s184
    %p191 = scmp.eq.s32.totalorder %s21, 3
    %p192 = por %p190, %p191
    %p193 = scmp.ne.s32.totalorder %s184, %s185
    %p194 = scmp.eq.s32.totalorder %s21, 0
    %p195 = por %p193, %p194
    %p196 = scmp.ne.s32.totalorder %s184, %s185
    %p197 = scmp.eq.s32.totalorder %s22, 3
    %p198 = por %p196, %p197
    %p200 = scmp.ne.s32.totalorder %s185, %s199
    %p201 = scmp.eq.s32.totalorder %s22, 0
    %p202 = por %p200, %p201
    %s204 = sadd.s32 %s203, 1
    %p207 = scmp.eq.s32.totalorder %s16, 3
    %p208 = scmp.ne.s32.totalorder %s203, %s205
    %p209 = scmp.eq.s32.totalorder %s16, 0
    %p210 = por %p208, %p209
    %p211 = scmp.ne.s32.totalorder %s203, %s205
    %p212 = scmp.eq.s32.totalorder %s21, 3
    %p213 = por %p211, %p212
    %p214 = scmp.ne.s32.totalorder %s205, %s206
    %p215 = scmp.eq.s32.totalorder %s21, 0
    %p216 = por %p214, %p215
    %p217 = scmp.ne.s32.totalorder %s205, %s206
    %p218 = scmp.eq.s32.totalorder %s22, 3
    %p219 = por %p217, %p218
    %p221 = scmp.ne.s32.totalorder %s206, %s220
    %p222 = scmp.eq.s32.totalorder %s22, 0
    %p223 = por %p221, %p222
    %s225 = sadd.s32 %s224, 1
    %p228 = scmp.eq.s32.totalorder %s16, 3
    %p229 = scmp.ne.s32.totalorder %s224, %s226
    %p230 = scmp.eq.s32.totalorder %s16, 0
    %p231 = por %p229, %p230
    %p232 = scmp.ne.s32.totalorder %s224, %s226
    %p233 = scmp.eq.s32.totalorder %s21, 3
    %p234 = por %p232, %p233
    %p235 = scmp.ne.s32.totalorder %s226, %s227
    %p236 = scmp.eq.s32.totalorder %s21, 0
    %p237 = por %p235, %p236
    %p238 = scmp.ne.s32.totalorder %s226, %s227
    %p239 = scmp.eq.s32.totalorder %s22, 3
    %p240 = por %p238, %p239
    %p242 = scmp.ne.s32.totalorder %s227, %s241
    %p243 = scmp.eq.s32.totalorder %s22, 0
    %p244 = por %p242, %p243
    %s245 = ssub.s32 %s23, %s35
    %s246 = ssub.s32 %s24, %s31
    %s247 = sor.u32 %s245, %s246
    %p248 = scmp.eq.s32.totalorder %s247, 0
    %s250 = sadd.s32 %s249, 1
    %s251 = scalar_select %p248, %s249, %s250
    %p254 = pneg %p248
    %p255 = scmp.eq.s32.totalorder %s16, 3
    %p256 = por %p254, %p255
    %p257 = scmp.ne.s32.totalorder %s249, %s252
    %p258 = scmp.eq.s32.totalorder %s16, 0
    %p259 = por %p257, %p258
    %p260 = scmp.ne.s32.totalorder %s249, %s252
    %p261 = scmp.eq.s32.totalorder %s21, 3
    %p262 = por %p260, %p261
    %p263 = scmp.ne.s32.totalorder %s252, %s253
    %p264 = scmp.eq.s32.totalorder %s21, 0
    %p265 = por %p263, %p264
    %p266 = scmp.ne.s32.totalorder %s252, %s253
    %p267 = scmp.eq.s32.totalorder %s22, 3
    %p268 = por %p266, %p267
    %p270 = scmp.ne.s32.totalorder %s253, %s269
    %p271 = scmp.eq.s32.totalorder %s22, 0
    %p272 = por %p270, %p271
    %p273 = scmp.le.s32.totalorder 1, %s16
    %p274 = scmp.lt.s32.totalorder %s16, 5
    %p275 = pnand %p273, %p274
    %p276 = pneg %p275
    // Predicated region
    $region9: #{compression_network_forward.6} parent=5 // pred_check
      _
    $region10: #{compression_network_forward.6} parent=5 // pred_check_branch
      %278 = sbr.rel (%p275) target = $region12
    $region11: #{compression_network_forward.6} parent=5 // pred_region
      %s279 = ssub.s32 %s16, 1
      // Predicated region
      $region13: #{compression_network_forward.6} parent=11 // pred_check
        %p280 = pneg %p153
      $region14: #{compression_network_forward.6} parent=11 // pred_check_branch
        %282 = sbr.rel (%p280) target = $region16
      $region15: #{compression_network_forward.6} parent=11 // pred_region
        _
      $region16: #{compression_network_forward.6} parent=11 // pred_fallthru
        _
      // Predicated region
      $region17: #{compression_network_forward.6} parent=11 // pred_check
        %p283 = pneg %p174
      $region18: #{compression_network_forward.6} parent=11 // pred_check_branch
        %285 = sbr.rel (%p283) target = $region20
      $region19: #{compression_network_forward.6} parent=11 // pred_region
        _
      $region20: #{compression_network_forward.6} parent=11 // pred_fallthru
        _
      // Predicated region
      $region21: #{compression_network_forward.6} parent=11 // pred_check
        %p286 = pneg %p195
      $region22: #{compression_network_forward.6} parent=11 // pred_check_branch
        %288 = sbr.rel (%p286) target = $region24
      $region23: #{compression_network_forward.6} parent=11 // pred_region
        _
      $region24: #{compression_network_forward.6} parent=11 // pred_fallthru
        _
      // Predicated region
      $region25: #{compression_network_forward.6} parent=11 // pred_check
        %p289 = pneg %p216
      $region26: #{compression_network_forward.6} parent=11 // pred_check_branch
        %291 = sbr.rel (%p289) target = $region28
      $region27: #{compression_network_forward.6} parent=11 // pred_region
        _
      $region28: #{compression_network_forward.6} parent=11 // pred_fallthru
        _
      // Predicated region
      $region29: #{compression_network_forward.6} parent=11 // pred_check
        %p292 = pneg %p237
      $region30: #{compression_network_forward.6} parent=11 // pred_check_branch
        %294 = sbr.rel (%p292) target = $region32
      $region31: #{compression_network_forward.6} parent=11 // pred_region
        _
      $region32: #{compression_network_forward.6} parent=11 // pred_fallthru
        _
    $region12: #{compression_network_forward.6} parent=5 // pred_fallthru
      _
    %p295 = scmp.lt.s32.totalorder %s16, 4
    // Predicated region
    $region33: #{compression_network_forward.6} parent=5 // pred_check
      %p296 = pneg %p295
    $region34: #{compression_network_forward.6} parent=5 // pred_check_branch
      %298 = sbr.rel (%p296) target = $region36
    $region35: #{compression_network_forward.6} parent=5 // pred_region
      // Predicated region
      $region37: #{compression_network_forward.6} parent=35 // pred_check
        %p299 = pneg %p48
      $region38: #{compression_network_forward.6} parent=35 // pred_check_branch
        %301 = sbr.rel (%p299) target = $region40
      $region39: #{compression_network_forward.6} parent=35 // pred_region
        %p302 = scmp.lt.s32.totalorder %s23, 1
        %s303 = scalar_select %p302, %s23, 1
        %s304 = smul.addr %s303, 18
        %s305 = smul.addr %s304, 4
        %s306 = scalar_lea.vmem %s0, %s305
      $region40: #{compression_network_forward.6} parent=35 // pred_fallthru
        _
      // Predicated region
      $region41: #{compression_network_forward.6} parent=35 // pred_check
        %p307 = pneg %p74
      $region42: #{compression_network_forward.6} parent=35 // pred_check_branch
        %309 = sbr.rel (%p307) target = $region44
      $region43: #{compression_network_forward.6} parent=35 // pred_region
        %p310 = scmp.lt.s32.totalorder %s23, 1
        %s311 = scalar_select %p310, %s23, 1
        %s312 = smul.addr %s311, 18
        %s313 = smul.addr %s312, 4
        %s314 = scalar_lea.vmem %s1, %s313
      $region44: #{compression_network_forward.6} parent=35 // pred_fallthru
        _
      // Predicated region
      $region45: #{compression_network_forward.6} parent=35 // pred_check
        %p315 = pneg %p100
      $region46: #{compression_network_forward.6} parent=35 // pred_check_branch
        %317 = sbr.rel (%p315) target = $region48
      $region47: #{compression_network_forward.6} parent=35 // pred_region
        %p318 = scmp.lt.s32.totalorder %s23, 1
        %s319 = scalar_select %p318, %s23, 1
        %s320 = smul.addr %s319, 18
        %s321 = smul.addr %s320, 4
        %s322 = scalar_lea.vmem %s2, %s321
      $region48: #{compression_network_forward.6} parent=35 // pred_fallthru
        _
      // Predicated region
      $region49: #{compression_network_forward.6} parent=35 // pred_check
        %p323 = pneg %p126
      $region50: #{compression_network_forward.6} parent=35 // pred_check_branch
        %325 = sbr.rel (%p323) target = $region52
      $region51: #{compression_network_forward.6} parent=35 // pred_region
        %p326 = scmp.lt.s32.totalorder %s23, 1
        %s327 = scalar_select %p326, %s23, 1
        %s328 = smul.addr %s327, 18
        %s329 = smul.addr %s328, 4
        %s330 = scalar_lea.vmem %s3, %s329
      $region52: #{compression_network_forward.6} parent=35 // pred_fallthru
        _
    $region36: #{compression_network_forward.6} parent=5 // pred_fallthru
      _
    %p331 = scmp.le.s32.totalorder 1, %s16
    %p332 = scmp.lt.s32.totalorder %s16, 5
    %p333 = pnand %p331, %p332
    %p334 = pneg %p333
    // Predicated region
    $region53: #{compression_network_forward.6} parent=5 // pred_check
      _
    $region54: #{compression_network_forward.6} parent=5 // pred_check_branch
      %336 = sbr.rel (%p333) target = $region56
    $region55: #{compression_network_forward.6} parent=5 // pred_region
      %s337 = ssub.s32 %s16, 1
      %p338 = scmp.lt.s32.totalorder %s25, 1
      %s339 = scalar_select %p338, %s25, 1
      %s340 = smul.addr %s339, 18
      %s341 = smul.addr %s340, 4
      %s342 = scalar_lea.vmem %s0, %s341
      %p343 = pneg %p54
      %p344 = pneg %p51
      %p345 = scmp.lt.s32.totalorder %s25, 1
      %s346 = scalar_select %p345, %s25, 1
      %s347 = smul.addr %s346, 18
      %s348 = smul.addr %s347, 4
      %s349 = scalar_lea.vmem %s1, %s348
      %p350 = pneg %p80
      %p351 = pneg %p77
      %p352 = scmp.lt.s32.totalorder %s25, 1
      %s353 = scalar_select %p352, %s25, 1
      %s354 = smul.addr %s353, 18
      %s355 = smul.addr %s354, 4
      %s356 = scalar_lea.vmem %s2, %s355
      %p357 = pneg %p106
      %p358 = pneg %p103
      %p359 = scmp.lt.s32.totalorder %s25, 1
      %s360 = scalar_select %p359, %s25, 1
      %s361 = smul.addr %s360, 18
      %s362 = smul.addr %s361, 4
      %s363 = scalar_lea.vmem %s3, %s362
      %p364 = pneg %p132
      %p365 = pneg %p129
      %p366 = pneg %p153
      %p367 = pneg %p150
      %p368 = pneg %p174
      %p369 = pneg %p171
      %p370 = pneg %p195
      %p371 = pneg %p192
      %p372 = pneg %p216
      %p373 = pneg %p213
      %p374 = pneg %p237
      %p375 = pneg %p234
      %p376 = pneg %p265
      %p377 = pneg %p262
      %s378 = smul.u32 4, %s26
      %p379 = scmp.lt.s32.totalorder %s25, 1
      %s380 = scalar_select %p379, %s25, 1
      %p381 = scmp.lt.s32.totalorder %s378, 7
      %s382 = scalar_select %p381, %s378, 7
      %s383 = smul.addr %s380, 8
      %s384 = sadd.s32 %s382, %s383
      %s385 = smul.addr %s384, 4
      %s386 = scalar_lea.vmem %s9, %s385
      %p387 = scmp.lt.s32.totalorder %s25, 1
      %s388 = scalar_select %p387, %s25, 1
      %s389 = smul.addr %s388, 18
      %s390 = smul.addr %s389, 4
      %s391 = scalar_lea.vmem %s0, %s390
      %p392 = scmp.lt.s32.totalorder %s25, 1
      %s393 = scalar_select %p392, %s25, 1
      %s394 = smul.addr %s393, 18
      %s395 = smul.addr %s394, 4
      %s396 = scalar_lea.vmem %s1, %s395
      %p397 = scmp.lt.s32.totalorder %s25, 1
      %s398 = scalar_select %p397, %s25, 1
      %s399 = smul.addr %s398, 18
      %s400 = smul.addr %s399, 4
      %s401 = scalar_lea.vmem %s2, %s400
      %p402 = scmp.lt.s32.totalorder %s25, 1
      %s403 = scalar_select %p402, %s25, 1
      %s404 = smul.addr %s403, 18
      %s405 = smul.addr %s404, 4
      %s406 = scalar_lea.vmem %s3, %s405
      %s407 = smul.u32 4, %s26
      %p408 = scmp.lt.s32.totalorder %s25, 1
      %s409 = scalar_select %p408, %s25, 1
      %p410 = scmp.lt.s32.totalorder %s407, 7
      %s411 = scalar_select %p410, %s407, 7
      %s412 = smul.addr %s409, 8
      %s413 = sadd.s32 %s411, %s412
      %s414 = smul.addr %s413, 4
      %s415 = scalar_lea.vmem %s9, %s414
      %s416 = smul.u32 4, %s26
      %s418 = smul.u32 %s26, 4
      %v419 = vld [vmem:[%s6] sm:$0x1]
      %v420 = vld [vmem:[%s7] sm:$0x1]
      %s421 = sld [smem:[#allocation2]]
      %s422 = smul.u32 %s418, 2
      %s423 = smul.addr %s422, 4
      %s424 = scalar_lea.vmem %s391, %s423
      %v425 = vld [vmem:[%s424] sm:$0xf]
      %v426 = vld [vmem:[%s424 + $0x4] sm:$0x1]
      %v427 = vld [vmem:[%s424 + $0x8] sm:$0xf]
      %v428 = vld [vmem:[%s424 + $0xc] sm:$0x1]
      %v429 = vld [vmem:[%s424 + $0x10] sm:$0xf]
      %v430 = vld [vmem:[%s424 + $0x14] sm:$0x1]
      %v431 = vld [vmem:[%s424 + $0x18] sm:$0xf]
      %v432 = vld [vmem:[%s424 + $0x1c] sm:$0x1]
      %v433 = vld [vmem:[%s424 + $0x20] sm:$0xf]
      %v434 = vld [vmem:[%s424 + $0x24] sm:$0x1]
      %v435 = vunpack.c.l.bf16 %v425
      %v436 = vunpack.c.l.bf16 %v426
      %v437 = vunpack.c.l.bf16 %v427
      %v438 = vunpack.c.l.bf16 %v428
      %v439 = vunpack.c.l.bf16 %v429
      %v440 = vunpack.c.l.bf16 %v430
      %v441 = vunpack.c.l.bf16 %v431
      %v442 = vunpack.c.l.bf16 %v432
      %v443 = vunpack.c.l.bf16 %v433
      %v444 = vunpack.c.l.bf16 %v434
      %v446 = vlaneseq
      %v447 = vshrl.u32 %v446, 7
      %v448 = vsub.s32 0, %v447
      %v449 = vrot.slane %v419, %v448
      %v451 = vmul.f32 %v435, %v449
      %v452 = vmul.f32 %v436, %v449
      %v453 = vmul.f32 %v437, %v449
      %v454 = vmul.f32 %v438, %v449
      %v455 = vmul.f32 %v439, %v449
      %v456 = vmul.f32 %v440, %v449
      %v457 = vmul.f32 %v441, %v449
      %v458 = vmul.f32 %v442, %v449
      %v459 = vmul.f32 %v443, %v449
      %v460 = vmul.f32 %v444, %v449
      %v462 = vlaneseq
      %v463 = vshrl.u32 %v462, 7
      %v464 = vsub.s32 0, %v463
      %v465 = vrot.slane %v420, %v464
      %v467 = vadd.f32 %v451, %v465
      %v468 = vadd.f32 %v452, %v465
      %v469 = vadd.f32 %v453, %v465
      %v470 = vadd.f32 %v454, %v465
      %v471 = vadd.f32 %v455, %v465
      %v472 = vadd.f32 %v456, %v465
      %v473 = vadd.f32 %v457, %v465
      %v474 = vadd.f32 %v458, %v465
      %v475 = vadd.f32 %v459, %v465
      %v476 = vadd.f32 %v460, %v465
      %vm477 = vcmp.ge.f32.partialorder %v467, 0.0
      %vm478 = vcmp.ge.f32.partialorder %v468, 0.0
      %vm479 = vcmp.ge.f32.partialorder %v469, 0.0
      %vm480 = vcmp.ge.f32.partialorder %v470, 0.0
      %vm481 = vcmp.ge.f32.partialorder %v471, 0.0
      %vm482 = vcmp.ge.f32.partialorder %v472, 0.0
      %vm483 = vcmp.ge.f32.partialorder %v473, 0.0
      %vm484 = vcmp.ge.f32.partialorder %v474, 0.0
      %vm485 = vcmp.ge.f32.partialorder %v475, 0.0
      %vm486 = vcmp.ge.f32.partialorder %v476, 0.0
      %v487 = vstv %s421
      %v488 = vmul.f32 %v487, %v467
      %v489 = vmul.f32 %v487, %v468
      %v490 = vmul.f32 %v487, %v469
      %v491 = vmul.f32 %v487, %v470
      %v492 = vmul.f32 %v487, %v471
      %v493 = vmul.f32 %v487, %v472
      %v494 = vmul.f32 %v487, %v473
      %v495 = vmul.f32 %v487, %v474
      %v496 = vmul.f32 %v487, %v475
      %v497 = vmul.f32 %v487, %v476
      %v498 = vsel %vm477, %v467, %v488
      %v499 = vsel %vm478, %v468, %v489
      %v500 = vsel %vm479, %v469, %v490
      %v501 = vsel %vm480, %v470, %v491
      %v502 = vsel %vm481, %v471, %v492
      %v503 = vsel %vm482, %v472, %v493
      %v504 = vsel %vm483, %v473, %v494
      %v505 = vsel %vm484, %v474, %v495
      %v506 = vsel %vm485, %v475, %v496
      %v507 = vsel %vm486, %v476, %v497
      %v508 = vpack.c.bf16 %v499, %v498
      %v509 = vpack.c.bf16 %v501, %v500
      %v510 = vpack.c.bf16 %v503, %v502
      %v511 = vpack.c.bf16 %v505, %v504
      %v512 = vpack.c.bf16 %v507, %v506
      %s513 = smul.addr %s422, 4
      %s514 = scalar_lea.vmem %s396, %s513
      %v515 = vld [vmem:[%s514] sm:$0xf]
      %v516 = vld [vmem:[%s514 + $0x4] sm:$0x1]
      %v517 = vld [vmem:[%s514 + $0x8] sm:$0xf]
      %v518 = vld [vmem:[%s514 + $0xc] sm:$0x1]
      %v519 = vld [vmem:[%s514 + $0x10] sm:$0xf]
      %v520 = vld [vmem:[%s514 + $0x14] sm:$0x1]
      %v521 = vld [vmem:[%s514 + $0x18] sm:$0xf]
      %v522 = vld [vmem:[%s514 + $0x1c] sm:$0x1]
      %v523 = vld [vmem:[%s514 + $0x20] sm:$0xf]
      %v524 = vld [vmem:[%s514 + $0x24] sm:$0x1]
      %v525 = vunpack.c.l.bf16 %v515
      %v526 = vunpack.c.l.bf16 %v516
      %v527 = vunpack.c.l.bf16 %v517
      %v528 = vunpack.c.l.bf16 %v518
      %v529 = vunpack.c.l.bf16 %v519
      %v530 = vunpack.c.l.bf16 %v520
      %v531 = vunpack.c.l.bf16 %v521
      %v532 = vunpack.c.l.bf16 %v522
      %v533 = vunpack.c.l.bf16 %v523
      %v534 = vunpack.c.l.bf16 %v524
      %v535 = vmul.f32 %v525, %v449
      %v536 = vmul.f32 %v526, %v449
      %v537 = vmul.f32 %v527, %v449
      %v538 = vmul.f32 %v528, %v449
      %v539 = vmul.f32 %v529, %v449
      %v540 = vmul.f32 %v530, %v449
      %v541 = vmul.f32 %v531, %v449
      %v542 = vmul.f32 %v532, %v449
      %v543 = vmul.f32 %v533, %v449
      %v544 = vmul.f32 %v534, %v449
      %v545 = vadd.f32 %v535, %v465
      %v546 = vadd.f32 %v536, %v465
      %v547 = vadd.f32 %v537, %v465
      %v548 = vadd.f32 %v538, %v465
      %v549 = vadd.f32 %v539, %v465
      %v550 = vadd.f32 %v540, %v465
      %v551 = vadd.f32 %v541, %v465
      %v552 = vadd.f32 %v542, %v465
      %v553 = vadd.f32 %v543, %v465
      %v554 = vadd.f32 %v544, %v465
      %vm555 = vcmp.ge.f32.partialorder %v545, 0.0
      %vm556 = vcmp.ge.f32.partialorder %v546, 0.0
      %vm557 = vcmp.ge.f32.partialorder %v547, 0.0
      %vm558 = vcmp.ge.f32.partialorder %v548, 0.0
      %vm559 = vcmp.ge.f32.partialorder %v549, 0.0
      %vm560 = vcmp.ge.f32.partialorder %v550, 0.0
      %vm561 = vcmp.ge.f32.partialorder %v551, 0.0
      %vm562 = vcmp.ge.f32.partialorder %v552, 0.0
      %vm563 = vcmp.ge.f32.partialorder %v553, 0.0
      %vm564 = vcmp.ge.f32.partialorder %v554, 0.0
      %v565 = vmul.f32 %v487, %v545
      %v566 = vmul.f32 %v487, %v546
      %v567 = vmul.f32 %v487, %v547
      %v568 = vmul.f32 %v487, %v548
      %v569 = vmul.f32 %v487, %v549
      %v570 = vmul.f32 %v487, %v550
      %v571 = vmul.f32 %v487, %v551
      %v572 = vmul.f32 %v487, %v552
      %v573 = vmul.f32 %v487, %v553
      %v574 = vmul.f32 %v487, %v554
      %v575 = vsel %vm555, %v545, %v565
      %v576 = vsel %vm556, %v546, %v566
      %v577 = vsel %vm557, %v547, %v567
      %v578 = vsel %vm558, %v548, %v568
      %v579 = vsel %vm559, %v549, %v569
      %v580 = vsel %vm560, %v550, %v570
      %v581 = vsel %vm561, %v551, %v571
      %v582 = vsel %vm562, %v552, %v572
      %v583 = vsel %vm563, %v553, %v573
      %v584 = vsel %vm564, %v554, %v574
      %v585 = vpack.c.bf16 %v576, %v575
      %v586 = vpack.c.bf16 %v578, %v577
      %v587 = vpack.c.bf16 %v580, %v579
      %v588 = vpack.c.bf16 %v582, %v581
      %v589 = vpack.c.bf16 %v584, %v583
      %s590 = smul.addr %s422, 4
      %s591 = scalar_lea.vmem %s401, %s590
      %v592 = vld [vmem:[%s591] sm:$0xf]
      %v593 = vld [vmem:[%s591 + $0x4] sm:$0x1]
      %v594 = vld [vmem:[%s591 + $0x8] sm:$0xf]
      %v595 = vld [vmem:[%s591 + $0xc] sm:$0x1]
      %v596 = vld [vmem:[%s591 + $0x10] sm:$0xf]
      %v597 = vld [vmem:[%s591 + $0x14] sm:$0x1]
      %v598 = vld [vmem:[%s591 + $0x18] sm:$0xf]
      %v599 = vld [vmem:[%s591 + $0x1c] sm:$0x1]
      %v600 = vunpack.c.l.bf16 %v592
      %v601 = vunpack.c.l.bf16 %v593
      %v602 = vunpack.c.l.bf16 %v594
      %v603 = vunpack.c.l.bf16 %v595
      %v604 = vunpack.c.l.bf16 %v596
      %v605 = vunpack.c.l.bf16 %v597
      %v606 = vunpack.c.l.bf16 %v598
      %v607 = vunpack.c.l.bf16 %v599
      %v608 = vmul.f32 %v600, %v449
      %v609 = vmul.f32 %v601, %v449
      %v610 = vmul.f32 %v602, %v449
      %v611 = vmul.f32 %v603, %v449
      %v612 = vmul.f32 %v604, %v449
      %v613 = vmul.f32 %v605, %v449
      %v614 = vmul.f32 %v606, %v449
      %v615 = vmul.f32 %v607, %v449
      %v616 = vadd.f32 %v608, %v465
      %v617 = vadd.f32 %v609, %v465
      %v618 = vadd.f32 %v610, %v465
      %v619 = vadd.f32 %v611, %v465
      %v620 = vadd.f32 %v612, %v465
      %v621 = vadd.f32 %v613, %v465
      %v622 = vadd.f32 %v614, %v465
      %v623 = vadd.f32 %v615, %v465
      %vm624 = vcmp.ge.f32.partialorder %v616, 0.0
      %vm625 = vcmp.ge.f32.partialorder %v617, 0.0
      %vm626 = vcmp.ge.f32.partialorder %v618, 0.0
      %vm627 = vcmp.ge.f32.partialorder %v619, 0.0
      %vm628 = vcmp.ge.f32.partialorder %v620, 0.0
      %vm629 = vcmp.ge.f32.partialorder %v621, 0.0
      %vm630 = vcmp.ge.f32.partialorder %v622, 0.0
      %vm631 = vcmp.ge.f32.partialorder %v623, 0.0
      %v632 = vmul.f32 %v487, %v616
      %v633 = vmul.f32 %v487, %v617
      %v634 = vmul.f32 %v487, %v618
      %v635 = vmul.f32 %v487, %v619
      %v636 = vmul.f32 %v487, %v620
      %v637 = vmul.f32 %v487, %v621
      %v638 = vmul.f32 %v487, %v622
      %v639 = vmul.f32 %v487, %v623
      %v640 = vsel %vm624, %v616, %v632
      %v641 = vsel %vm625, %v617, %v633
      %v642 = vsel %vm626, %v618, %v634
      %v643 = vsel %vm627, %v619, %v635
      %v644 = vsel %vm628, %v620, %v636
      %v645 = vsel %vm629, %v621, %v637
      %v646 = vsel %vm630, %v622, %v638
      %v647 = vsel %vm631, %v623, %v639
      %v648 = vpack.c.bf16 %v641, %v640
      %v649 = vpack.c.bf16 %v643, %v642
      %v650 = vpack.c.bf16 %v645, %v644
      %v651 = vpack.c.bf16 %v647, %v646
      %s652 = smul.addr %s422, 4
      %s653 = scalar_lea.vmem %s406, %s652
      %v654 = vld [vmem:[%s653] sm:$0xf]
      %v655 = vld [vmem:[%s653 + $0x4] sm:$0x1]
      %v656 = vld [vmem:[%s653 + $0x8] sm:$0xf]
      %v657 = vld [vmem:[%s653 + $0xc] sm:$0x1]
      %v658 = vld [vmem:[%s653 + $0x10] sm:$0xf]
      %v659 = vld [vmem:[%s653 + $0x14] sm:$0x1]
      %v660 = vld [vmem:[%s653 + $0x18] sm:$0xf]
      %v661 = vld [vmem:[%s653 + $0x1c] sm:$0x1]
      %v662 = vunpack.c.l.bf16 %v654
      %v663 = vunpack.c.l.bf16 %v655
      %v664 = vunpack.c.l.bf16 %v656
      %v665 = vunpack.c.l.bf16 %v657
      %v666 = vunpack.c.l.bf16 %v658
      %v667 = vunpack.c.l.bf16 %v659
      %v668 = vunpack.c.l.bf16 %v660
      %v669 = vunpack.c.l.bf16 %v661
      %v670 = vmul.f32 %v662, %v449
      %v671 = vmul.f32 %v663, %v449
      %v672 = vmul.f32 %v664, %v449
      %v673 = vmul.f32 %v665, %v449
      %v674 = vmul.f32 %v666, %v449
      %v675 = vmul.f32 %v667, %v449
      %v676 = vmul.f32 %v668, %v449
      %v677 = vmul.f32 %v669, %v449
      %v678 = vadd.f32 %v670, %v465
      %v679 = vadd.f32 %v671, %v465
      %v680 = vadd.f32 %v672, %v465
      %v681 = vadd.f32 %v673, %v465
      %v682 = vadd.f32 %v674, %v465
      %v683 = vadd.f32 %v675, %v465
      %v684 = vadd.f32 %v676, %v465
      %v685 = vadd.f32 %v677, %v465
      %vm686 = vcmp.ge.f32.partialorder %v678, 0.0
      %vm687 = vcmp.ge.f32.partialorder %v679, 0.0
      %vm688 = vcmp.ge.f32.partialorder %v680, 0.0
      %vm689 = vcmp.ge.f32.partialorder %v681, 0.0
      %vm690 = vcmp.ge.f32.partialorder %v682, 0.0
      %vm691 = vcmp.ge.f32.partialorder %v683, 0.0
      %vm692 = vcmp.ge.f32.partialorder %v684, 0.0
      %vm693 = vcmp.ge.f32.partialorder %v685, 0.0
      %v694 = vmul.f32 %v487, %v678
      %v695 = vmul.f32 %v487, %v679
      %v696 = vmul.f32 %v487, %v680
      %v697 = vmul.f32 %v487, %v681
      %v698 = vmul.f32 %v487, %v682
      %v699 = vmul.f32 %v487, %v683
      %v700 = vmul.f32 %v487, %v684
      %v701 = vmul.f32 %v487, %v685
      %v702 = vsel %vm686, %v678, %v694
      %v703 = vsel %vm687, %v679, %v695
      %v704 = vsel %vm688, %v680, %v696
      %v705 = vsel %vm689, %v681, %v697
      %v706 = vsel %vm690, %v682, %v698
      %v707 = vsel %vm691, %v683, %v699
      %v708 = vsel %vm692, %v684, %v700
      %v709 = vsel %vm693, %v685, %v701
      %v710 = vpack.c.bf16 %v703, %v702
      %v711 = vpack.c.bf16 %v705, %v704
      %v712 = vpack.c.bf16 %v707, %v706
      %v713 = vpack.c.bf16 %v709, %v708
      %718 = vrot.lane.b32.xlu0 %v585, 64
      %v719 = vpop.permute.xlu0 %718
      %720 = vrot.lane.b32.xlu0 %v586, 64
      %v721 = vpop.permute.xlu0 %720
      %722 = vrot.lane.b32.xlu0 %v587, 64
      %v723 = vpop.permute.xlu0 %722
      %724 = vrot.lane.b32.xlu0 %v588, 64
      %v725 = vpop.permute.xlu0 %724
      %vm726 = vcmask 523264
      %v729 = vsel %vm726, %v508, %v719
      %v732 = vsel %vm726, %v509, %v721
      %v735 = vsel %vm726, %v510, %v723
      %v738 = vsel %vm726, %v511, %v725
      %v739 = vld [vmem:[%s4] sm:$0xf]
      %v740 = vld [vmem:[%s4 + $0x4] sm:$0xf]
      %v741 = vld [vmem:[%s4 + $0x8] sm:$0xf]
      %v742 = vld [vmem:[%s4 + $0xc] sm:$0xf]
      %v743 = vld [vmem:[%s4 + $0x10] sm:$0xf]
      %v744 = vld [vmem:[%s4 + $0x14] sm:$0xf]
      %v745 = vld [vmem:[%s4 + $0x18] sm:$0xf]
      %v746 = vld [vmem:[%s4 + $0x1c] sm:$0xf]
      %v747 = vld [vmem:[%s4 + $0x20] sm:$0xf]
      %v748 = vld [vmem:[%s4 + $0x24] sm:$0xf]
      %v749 = vld [vmem:[%s4 + $0x28] sm:$0xf]
      %v750 = vld [vmem:[%s4 + $0x2c] sm:$0xf]
      %v751 = vld [vmem:[%s4 + $0x30] sm:$0xf]
      %v752 = vld [vmem:[%s4 + $0x34] sm:$0xf]
      %v753 = vld [vmem:[%s4 + $0x38] sm:$0xf]
      %v754 = vld [vmem:[%s4 + $0x3c] sm:$0xf]
      %v756 = vshrl.u32 %v648, 16
      %v758 = vrot.slane %v756, 7
      %v759 = vshll.u32 %v648, 16
      %v761 = vor.u32 %v758, %v759
      %v763 = vshrl.u32 %v649, 16
      %v765 = vrot.slane %v763, 7
      %v766 = vshll.u32 %v649, 16
      %v768 = vor.u32 %v765, %v766
      %v770 = vshrl.u32 %v650, 16
      %v772 = vrot.slane %v770, 7
      %v773 = vshll.u32 %v650, 16
      %v775 = vor.u32 %v772, %v773
      %v777 = vshrl.u32 %v651, 16
      %v779 = vrot.slane %v777, 7
      %v780 = vshll.u32 %v651, 16
      %v782 = vor.u32 %v779, %v780
      %783 = vrot.lane.b32.xlu0 %v761, 64
      %v784 = vpop.permute.xlu0 %783
      %785 = vrot.lane.b32.xlu0 %v768, 64
      %v786 = vpop.permute.xlu0 %785
      %787 = vrot.lane.b32.xlu0 %v775, 64
      %v788 = vpop.permute.xlu0 %787
      %789 = vrot.lane.b32.xlu0 %v782, 64
      %v790 = vpop.permute.xlu0 %789
      %v792 = vsel %vm726, %v508, %v784
      %v794 = vsel %vm726, %v509, %v786
      %v796 = vsel %vm726, %v510, %v788
      %v798 = vsel %vm726, %v511, %v790
      %v803 = vunpack.c.l.b16 %v792
      %v804 = vunpack.c.h.b16 %v792
      %v805 = vunpack.c.l.b16 %v794
      %v806 = vunpack.c.h.b16 %v794
      %v807 = vunpack.c.l.b16 %v796
      %v808 = vunpack.c.h.b16 %v796
      %v809 = vunpack.c.l.b16 %v798
      %v810 = vunpack.c.h.b16 %v798
      %v811 = vpack.c.b16 %v803, %v803
      %v812 = vpack.c.b16 %v804, %v804
      %v813 = vpack.c.b16 %v805, %v805
      %v814 = vpack.c.b16 %v806, %v806
      %v815 = vpack.c.b16 %v807, %v807
      %v816 = vpack.c.b16 %v808, %v808
      %v817 = vpack.c.b16 %v809, %v809
      %v818 = vpack.c.b16 %v810, %v810
      %vm819 = vsmask.f32 3328
      %vm820 = vsmask.f32 7440
      %vm821 = vmor %vm819, %vm820
      %v823 = vshrl.u32 %v811, 16
      %v825 = vrot.slane %v823, 4
      %v826 = vshll.u32 %v811, 16
      %v828 = vrot.slane %v826, 5
      %v829 = vor.u32 %v825, %v828
      %v830 = vrot.slane %v829, 4
      %v832 = vshll.u32 %v812, 16
      %v834 = vrot.slane %v832, 5
      %v835 = vsel %vm821, %v830, %v834
      %v837 = vshrl.u32 %v813, 16
      %v839 = vrot.slane %v837, 4
      %v840 = vshll.u32 %v813, 16
      %v842 = vrot.slane %v840, 5
      %v843 = vor.u32 %v839, %v842
      %v844 = vrot.slane %v843, 4
      %v846 = vshll.u32 %v814, 16
      %v848 = vrot.slane %v846, 5
      %v849 = vsel %vm821, %v844, %v848
      %v851 = vshrl.u32 %v815, 16
      %v853 = vrot.slane %v851, 4
      %v854 = vshll.u32 %v815, 16
      %v856 = vrot.slane %v854, 5
      %v857 = vor.u32 %v853, %v856
      %v858 = vrot.slane %v857, 4
      %v860 = vshll.u32 %v816, 16
      %v862 = vrot.slane %v860, 5
      %v863 = vsel %vm821, %v858, %v862
      %v865 = vshrl.u32 %v817, 16
      %v867 = vrot.slane %v865, 4
      %v868 = vshll.u32 %v817, 16
      %v870 = vrot.slane %v868, 5
      %v871 = vor.u32 %v867, %v870
      %v872 = vrot.slane %v871, 4
      %v874 = vshll.u32 %v818, 16
      %v876 = vrot.slane %v874, 5
      %v877 = vsel %vm821, %v872, %v876
      %s878 = scalar_lea.vmem %s4, 64
      %v879 = vld [vmem:[%s878] sm:$0xf]
      %v880 = vld [vmem:[%s878 + $0x4] sm:$0xf]
      %v881 = vld [vmem:[%s878 + $0x8] sm:$0xf]
      %v882 = vld [vmem:[%s878 + $0xc] sm:$0xf]
      %v883 = vld [vmem:[%s878 + $0x10] sm:$0xf]
      %v884 = vld [vmem:[%s878 + $0x14] sm:$0xf]
      %v885 = vld [vmem:[%s878 + $0x18] sm:$0xf]
      %v886 = vld [vmem:[%s878 + $0x1c] sm:$0xf]
      %v887 = vld [vmem:[%s878 + $0x20] sm:$0xf]
      %v888 = vld [vmem:[%s878 + $0x24] sm:$0xf]
      %v889 = vld [vmem:[%s878 + $0x28] sm:$0xf]
      %v890 = vld [vmem:[%s878 + $0x2c] sm:$0xf]
      %v891 = vld [vmem:[%s878 + $0x30] sm:$0xf]
      %v892 = vld [vmem:[%s878 + $0x34] sm:$0xf]
      %v893 = vld [vmem:[%s878 + $0x38] sm:$0xf]
      %v894 = vld [vmem:[%s878 + $0x3c] sm:$0xf]
      %v895 = vunpack.c.l.b16 %v835
      %v896 = vunpack.c.l.b16 %v849
      %v897 = vunpack.c.l.b16 %v863
      %v898 = vunpack.c.l.b16 %v877
      %v899 = vpack.c.b16 %v896, %v895
      %v900 = vpack.c.b16 %v898, %v897
      %v919 = vunpack.c.l.b16 %v879
      %v920 = vunpack.c.l.b16 %v880
      %v921 = vunpack.c.l.b16 %v881
      %v922 = vunpack.c.l.b16 %v882
      %v923 = vunpack.c.l.b16 %v883
      %v924 = vunpack.c.l.b16 %v884
      %v925 = vunpack.c.l.b16 %v885
      %v926 = vunpack.c.l.b16 %v886
      %v927 = vunpack.c.l.b16 %v887
      %v928 = vunpack.c.l.b16 %v888
      %v929 = vunpack.c.l.b16 %v889
      %v930 = vunpack.c.l.b16 %v890
      %v931 = vunpack.c.l.b16 %v891
      %v932 = vunpack.c.l.b16 %v892
      %v933 = vunpack.c.l.b16 %v893
      %v934 = vunpack.c.l.b16 %v894
      %v935 = vpack.c.b16 %v920, %v919
      %v936 = vpack.c.b16 %v922, %v921
      %v937 = vpack.c.b16 %v924, %v923
      %v938 = vpack.c.b16 %v926, %v925
      %v939 = vpack.c.b16 %v928, %v927
      %v940 = vpack.c.b16 %v930, %v929
      %v941 = vpack.c.b16 %v932, %v931
      %v942 = vpack.c.b16 %v934, %v933
      %951 = vmatprep.subr.bf16.mxu0 0
      %952 = vmatpush1.bf16.msra.mxu0 %v935
      %953 = vmatprep.subr.bf16.mxu0 0
      %954 = vmatpush1.bf16.msra.mxu0 %v936
      %955 = vmatprep.subr.bf16.mxu0 0
      %956 = vmatpush1.bf16.msra.mxu0 %v937
      %957 = vmatprep.subr.bf16.mxu0 0
      %958 = vmatpush1.bf16.msra.mxu0 %v938
      %959 = vmatprep.subr.bf16.mxu0 0
      %960 = vmatpush1.bf16.msra.mxu0 %v939
      %961 = vmatprep.subr.bf16.mxu0 0
      %962 = vmatpush1.bf16.msra.mxu0 %v940
      %963 = vmatprep.subr.bf16.mxu0 0
      %964 = vmatpush1.bf16.msra.mxu0 %v941
      %965 = vmatprep.subr.bf16.mxu0 0
      %966 = vmatpush1.bf16.msra.mxu0 %v942
      %967 = vmatprep.subr.bf16.mxu0 0
      %968 = vmatpush1.bf16.msra.mxu0 0
      %969 = vmatprep.subr.bf16.mxu0 0
      %970 = vmatpush1.bf16.msra.mxu0 0
      %971 = vmatprep.subr.bf16.mxu0 0
      %972 = vmatpush1.bf16.msra.mxu0 0
      %973 = vmatprep.subr.bf16.mxu0 0
      %974 = vmatpush1.bf16.msra.mxu0 0
      %975 = vmatprep.subr.bf16.mxu0 0
      %976 = vmatpush1.bf16.msra.mxu0 0
      %977 = vmatprep.subr.bf16.mxu0 0
      %978 = vmatpush1.bf16.msra.mxu0 0
      %979 = vmatprep.subr.bf16.mxu0 0
      %980 = vmatpush1.bf16.msra.mxu0 0
      %981 = vmatprep.subr.bf16.mxu0 0
      %982 = vmatpush1.bf16.msra.mxu0 0
      %983 = vmatprep.mubr.bf16.mxu0 0
      %984 = vmatmul.mubr.bf16.gmra.mrb[0].mxu0 %v899
      %v985 = vpop.f32.mrb[0].mxu0
      %v986 = vadd.f32 0.0, %v985
      %v987 = vpop.f32.mrb[0].mxu0
      %v988 = vpop.f32.mrb[0].mxu0
      %v989 = vadd.f32 0.0, %v988
      %v990 = vpop.f32.mrb[0].mxu0
      %991 = vmatprep.mubr.bf16.mxu0 0
      %992 = vmatmul.mubr.bf16.gmra.mrb[0].mxu0 %v900
      %v993 = vpop.f32.mrb[0].mxu0
      %v994 = vadd.f32 0.0, %v993
      %v995 = vpop.f32.mrb[0].mxu0
      %v996 = vpop.f32.mrb[0].mxu0
      %v997 = vadd.f32 0.0, %v996
      %v998 = vpop.f32.mrb[0].mxu0
      %999 = vdwg.mxu0
      %v1004 = vunpack.c.l.b16 %v729
      %v1005 = vunpack.c.l.b16 %v732
      %v1006 = vunpack.c.l.b16 %v735
      %v1007 = vunpack.c.l.b16 %v738
      %v1008 = vpack.c.b16 %v1005, %v1004
      %v1009 = vpack.c.b16 %v1007, %v1006
      %v1028 = vunpack.c.l.b16 %v739
      %v1029 = vunpack.c.l.b16 %v740
      %v1030 = vunpack.c.l.b16 %v741
      %v1031 = vunpack.c.l.b16 %v742
      %v1032 = vunpack.c.l.b16 %v743
      %v1033 = vunpack.c.l.b16 %v744
      %v1034 = vunpack.c.l.b16 %v745
      %v1035 = vunpack.c.l.b16 %v746
      %v1036 = vunpack.c.l.b16 %v747
      %v1037 = vunpack.c.l.b16 %v748
      %v1038 = vunpack.c.l.b16 %v749
      %v1039 = vunpack.c.l.b16 %v750
      %v1040 = vunpack.c.l.b16 %v751
      %v1041 = vunpack.c.l.b16 %v752
      %v1042 = vunpack.c.l.b16 %v753
      %v1043 = vunpack.c.l.b16 %v754
      %v1044 = vpack.c.b16 %v1029, %v1028
      %v1045 = vpack.c.b16 %v1031, %v1030
      %v1046 = vpack.c.b16 %v1033, %v1032
      %v1047 = vpack.c.b16 %v1035, %v1034
      %v1048 = vpack.c.b16 %v1037, %v1036
      %v1049 = vpack.c.b16 %v1039, %v1038
      %v1050 = vpack.c.b16 %v1041, %v1040
      %v1051 = vpack.c.b16 %v1043, %v1042
      %1060 = vmatprep.subr.bf16.mxu0 0
      %1061 = vmatpush1.bf16.msra.mxu0 %v1044
      %1062 = vmatprep.subr.bf16.mxu0 0
      %1063 = vmatpush1.bf16.msra.mxu0 %v1045
      %1064 = vmatprep.subr.bf16.mxu0 0
      %1065 = vmatpush1.bf16.msra.mxu0 %v1046
      %1066 = vmatprep.subr.bf16.mxu0 0
      %1067 = vmatpush1.bf16.msra.mxu0 %v1047
      %1068 = vmatprep.subr.bf16.mxu0 0
      %1069 = vmatpush1.bf16.msra.mxu0 %v1048
      %1070 = vmatprep.subr.bf16.mxu0 0
      %1071 = vmatpush1.bf16.msra.mxu0 %v1049
      %1072 = vmatprep.subr.bf16.mxu0 0
      %1073 = vmatpush1.bf16.msra.mxu0 %v1050
      %1074 = vmatprep.subr.bf16.mxu0 0
      %1075 = vmatpush1.bf16.msra.mxu0 %v1051
      %1076 = vmatprep.subr.bf16.mxu0 0
      %1077 = vmatpush1.bf16.msra.mxu0 0
      %1078 = vmatprep.subr.bf16.mxu0 0
      %1079 = vmatpush1.bf16.msra.mxu0 0
      %1080 = vmatprep.subr.bf16.mxu0 0
      %1081 = vmatpush1.bf16.msra.mxu0 0
      %1082 = vmatprep.subr.bf16.mxu0 0
      %1083 = vmatpush1.bf16.msra.mxu0 0
      %1084 = vmatprep.subr.bf16.mxu0 0
      %1085 = vmatpush1.bf16.msra.mxu0 0
      %1086 = vmatprep.subr.bf16.mxu0 0
      %1087 = vmatpush1.bf16.msra.mxu0 0
      %1088 = vmatprep.subr.bf16.mxu0 0
      %1089 = vmatpush1.bf16.msra.mxu0 0
      %1090 = vmatprep.subr.bf16.mxu0 0
      %1091 = vmatpush1.bf16.msra.mxu0 0
      %1092 = vmatprep.mubr.bf16.mxu0 0
      %1093 = vmatmul.mubr.bf16.gmra.mrb[0].mxu0 %v1008
      %v1094 = vpop.f32.mrb[0].mxu0
      %v1095 = vadd.f32 %v986, %v1094
      %v1096 = vpop.f32.mrb[0].mxu0
      %v1097 = vpop.f32.mrb[0].mxu0
      %v1098 = vadd.f32 %v989, %v1097
      %v1099 = vpop.f32.mrb[0].mxu0
      %1100 = vmatprep.mubr.bf16.mxu0 0
      %1101 = vmatmul.mubr.bf16.gmra.mrb[0].mxu0 %v1009
      %v1102 = vpop.f32.mrb[0].mxu0
      %v1103 = vadd.f32 %v994, %v1102
      %v1104 = vpop.f32.mrb[0].mxu0
      %v1105 = vpop.f32.mrb[0].mxu0
      %v1106 = vadd.f32 %v997, %v1105
      %v1107 = vpop.f32.mrb[0].mxu0
      %1108 = vdwg.mxu0
      %v1109 = vrot.slane %v759, 1
      %v1110 = vor.u32 %v756, %v1109
      %v1111 = vrot.slane %v766, 1
      %v1112 = vor.u32 %v763, %v1111
      %v1113 = vrot.slane %v773, 1
      %v1114 = vor.u32 %v770, %v1113
      %v1115 = vrot.slane %v780, 1
      %v1116 = vor.u32 %v777, %v1115
      %1117 = vrot.lane.b32.xlu0 %v1110, 64
      %v1118 = vpop.permute.xlu0 %1117
      %1119 = vrot.lane.b32.xlu0 %v1112, 64
      %v1120 = vpop.permute.xlu0 %1119
      %1121 = vrot.lane.b32.xlu0 %v1114, 64
      %v1122 = vpop.permute.xlu0 %1121
      %1123 = vrot.lane.b32.xlu0 %v1116, 64
      %v1124 = vpop.permute.xlu0 %1123
      %v1127 = vsel %vm726, %v710, %v1118
      %v1130 = vsel %vm726, %v711, %v1120
      %v1133 = vsel %vm726, %v712, %v1122
      %v1136 = vsel %vm726, %v713, %v1124
      %s1137 = scalar_lea.vmem %s4, 128
      %v1138 = vld [vmem:[%s1137] sm:$0xf]
      %v1139 = vld [vmem:[%s1137 + $0x4] sm:$0xf]
      %v1140 = vld [vmem:[%s1137 + $0x8] sm:$0xf]
      %v1141 = vld [vmem:[%s1137 + $0xc] sm:$0xf]
      %v1142 = vld [vmem:[%s1137 + $0x10] sm:$0xf]
      %v1143 = vld [vmem:[%s1137 + $0x14] sm:$0xf]
      %v1144 = vld [vmem:[%s1137 + $0x18] sm:$0xf]
      %v1145 = vld [vmem:[%s1137 + $0x1c] sm:$0xf]
      %v1146 = vld [vmem:[%s1137 + $0x20] sm:$0xf]
      %v1147 = vld [vmem:[%s1137 + $0x24] sm:$0xf]
      %v1148 = vld [vmem:[%s1137 + $0x28] sm:$0xf]
      %v1149 = vld [vmem:[%s1137 + $0x2c] sm:$0xf]
      %v1150 = vld [vmem:[%s1137 + $0x30] sm:$0xf]
      %v1151 = vld [vmem:[%s1137 + $0x34] sm:$0xf]
      %v1152 = vld [vmem:[%s1137 + $0x38] sm:$0xf]
      %v1153 = vld [vmem:[%s1137 + $0x3c] sm:$0xf]
      %v1158 = vunpack.c.l.b16 %v1127
      %v1159 = vunpack.c.l.b16 %v1130
      %v1160 = vunpack.c.l.b16 %v1133
      %v1161 = vunpack.c.l.b16 %v1136
      %v1162 = vpack.c.b16 %v1159, %v1158
      %v1163 = vpack.c.b16 %v1161, %v1160
      %v1182 = vunpack.c.l.b16 %v1138
      %v1183 = vunpack.c.l.b16 %v1139
      %v1184 = vunpack.c.l.b16 %v1140
      %v1185 = vunpack.c.l.b16 %v1141
      %v1186 = vunpack.c.l.b16 %v1142
      %v1187 = vunpack.c.l.b16 %v1143
      %v1188 = vunpack.c.l.b16 %v1144
      %v1189 = vunpack.c.l.b16 %v1145
      %v1190 = vunpack.c.l.b16 %v1146
      %v1191 = vunpack.c.l.b16 %v1147
      %v1192 = vunpack.c.l.b16 %v1148
      %v1193 = vunpack.c.l.b16 %v1149
      %v1194 = vunpack.c.l.b16 %v1150
      %v1195 = vunpack.c.l.b16 %v1151
      %v1196 = vunpack.c.l.b16 %v1152
      %v1197 = vunpack.c.l.b16 %v1153
      %v1198 = vpack.c.b16 %v1183, %v1182
      %v1199 = vpack.c.b16 %v1185, %v1184
      %v1200 = vpack.c.b16 %v1187, %v1186
      %v1201 = vpack.c.b16 %v1189, %v1188
      %v1202 = vpack.c.b16 %v1191, %v1190
      %v1203 = vpack.c.b16 %v1193, %v1192
      %v1204 = vpack.c.b16 %v1195, %v1194
      %v1205 = vpack.c.b16 %v1197, %v1196
      %1214 = vmatprep.subr.bf16.mxu0 0
      %1215 = vmatpush1.bf16.msra.mxu0 %v1198
      %1216 = vmatprep.subr.bf16.mxu0 0
      %1217 = vmatpush1.bf16.msra.mxu0 %v1199
      %1218 = vmatprep.subr.bf16.mxu0 0
      %1219 = vmatpush1.bf16.msra.mxu0 %v1200
      %1220 = vmatprep.subr.bf16.mxu0 0
      %1221 = vmatpush1.bf16.msra.mxu0 %v1201
      %1222 = vmatprep.subr.bf16.mxu0 0
      %1223 = vmatpush1.bf16.msra.mxu0 %v1202
      %1224 = vmatprep.subr.bf16.mxu0 0
      %1225 = vmatpush1.bf16.msra.mxu0 %v1203
      %1226 = vmatprep.subr.bf16.mxu0 0
      %1227 = vmatpush1.bf16.msra.mxu0 %v1204
      %1228 = vmatprep.subr.bf16.mxu0 0
      %1229 = vmatpush1.bf16.msra.mxu0 %v1205
      %1230 = vmatprep.subr.bf16.mxu0 0
      %1231 = vmatpush1.bf16.msra.mxu0 0
      %1232 = vmatprep.subr.bf16.mxu0 0
      %1233 = vmatpush1.bf16.msra.mxu0 0
      %1234 = vmatprep.subr.bf16.mxu0 0
      %1235 = vmatpush1.bf16.msra.mxu0 0
      %1236 = vmatprep.subr.bf16.mxu0 0
      %1237 = vmatpush1.bf16.msra.mxu0 0
      %1238 = vmatprep.subr.bf16.mxu0 0
      %1239 = vmatpush1.bf16.msra.mxu0 0
      %1240 = vmatprep.subr.bf16.mxu0 0
      %1241 = vmatpush1.bf16.msra.mxu0 0
      %1242 = vmatprep.subr.bf16.mxu0 0
      %1243 = vmatpush1.bf16.msra.mxu0 0
      %1244 = vmatprep.subr.bf16.mxu0 0
      %1245 = vmatpush1.bf16.msra.mxu0 0
      %1246 = vmatprep.mubr.bf16.mxu0 0
      %1247 = vmatmul.mubr.bf16.gmra.mrb[0].mxu0 %v1162
      %v1248 = vpop.f32.mrb[0].mxu0
      %v1249 = vadd.f32 0.0, %v1248
      %v1250 = vpop.f32.mrb[0].mxu0
      %v1251 = vpop.f32.mrb[0].mxu0
      %v1252 = vadd.f32 0.0, %v1251
      %v1253 = vpop.f32.mrb[0].mxu0
      %1254 = vmatprep.mubr.bf16.mxu0 0
      %1255 = vmatmul.mubr.bf16.gmra.mrb[0].mxu0 %v1163
      %v1256 = vpop.f32.mrb[0].mxu0
      %v1257 = vadd.f32 0.0, %v1256
      %v1258 = vpop.f32.mrb[0].mxu0
      %v1259 = vpop.f32.mrb[0].mxu0
      %v1260 = vadd.f32 0.0, %v1259
      %v1261 = vpop.f32.mrb[0].mxu0
      %1262 = vdwg.mxu0
      %v1263 = vadd.f32 %v1095, %v1249
      %v1264 = vadd.f32 %v1098, %v1252
      %v1265 = vadd.f32 %v1103, %v1257
      %v1266 = vadd.f32 %v1106, %v1260
      %1268 = vrot.lane.b32.xlu0 %v589, 64
      %v1269 = vpop.permute.xlu0 %1268
      %v1272 = vsel %vm726, %v512, %v1269
      %s1273 = scalar_lea.vmem %s4, 192
      %v1274 = vld [vmem:[%s1273] sm:$0xf]
      %v1275 = vld [vmem:[%s1273 + $0x4] sm:$0xf]
      %v1276 = vld [vmem:[%s1273 + $0x8] sm:$0xf]
      %v1277 = vld [vmem:[%s1273 + $0xc] sm:$0xf]
      %v1278 = vld [vmem:[%s1273 + $0x10] sm:$0xf]
      %v1279 = vld [vmem:[%s1273 + $0x14] sm:$0xf]
      %v1280 = vld [vmem:[%s1273 + $0x18] sm:$0xf]
      %v1281 = vld [vmem:[%s1273 + $0x1c] sm:$0xf]
      %v1282 = vld [vmem:[%s1273 + $0x20] sm:$0xf]
      %v1283 = vld [vmem:[%s1273 + $0x24] sm:$0xf]
      %v1284 = vld [vmem:[%s1273 + $0x28] sm:$0xf]
      %v1285 = vld [vmem:[%s1273 + $0x2c] sm:$0xf]
      %v1286 = vld [vmem:[%s1273 + $0x30] sm:$0xf]
      %v1287 = vld [vmem:[%s1273 + $0x34] sm:$0xf]
      %v1288 = vld [vmem:[%s1273 + $0x38] sm:$0xf]
      %v1289 = vld [vmem:[%s1273 + $0x3c] sm:$0xf]
      %v1291 = vunpack.c.l.b16 %v1272
      %v1292 = vpack.c.b16 %v1006, %v1005
      %v1293 = vpack.c.b16 %v1291, %v1007
      %v1312 = vunpack.c.l.b16 %v1274
      %v1313 = vunpack.c.l.b16 %v1275
      %v1314 = vunpack.c.l.b16 %v1276
      %v1315 = vunpack.c.l.b16 %v1277
      %v1316 = vunpack.c.l.b16 %v1278
      %v1317 = vunpack.c.l.b16 %v1279
      %v1318 = vunpack.c.l.b16 %v1280
      %v1319 = vunpack.c.l.b16 %v1281
      %v1320 = vunpack.c.l.b16 %v1282
      %v1321 = vunpack.c.l.b16 %v1283
      %v1322 = vunpack.c.l.b16 %v1284
      %v1323 = vunpack.c.l.b16 %v1285
      %v1324 = vunpack.c.l.b16 %v1286
      %v1325 = vunpack.c.l.b16 %v1287
      %v1326 = vunpack.c.l.b16 %v1288
      %v1327 = vunpack.c.l.b16 %v1289
      %v1328 = vpack.c.b16 %v1313, %v1312
      %v1329 = vpack.c.b16 %v1315, %v1314
      %v1330 = vpack.c.b16 %v1317, %v1316
      %v1331 = vpack.c.b16 %v1319, %v1318
      %v1332 = vpack.c.b16 %v1321, %v1320
      %v1333 = vpack.c.b16 %v1323, %v1322
      %v1334 = vpack.c.b16 %v1325, %v1324
      %v1335 = vpack.c.b16 %v1327, %v1326
      %1344 = vmatprep.subr.bf16.mxu0 0
      %1345 = vmatpush1.bf16.msra.mxu0 %v1328
      %1346 = vmatprep.subr.bf16.mxu0 0
      %1347 = vmatpush1.bf16.msra.mxu0 %v1329
      %1348 = vmatprep.subr.bf16.mxu0 0
      %1349 = vmatpush1.bf16.msra.mxu0 %v1330
      %1350 = vmatprep.subr.bf16.mxu0 0
      %1351 = vmatpush1.bf16.msra.mxu0 %v1331
      %1352 = vmatprep.subr.bf16.mxu0 0
      %1353 = vmatpush1.bf16.msra.mxu0 %v1332
      %1354 = vmatprep.subr.bf16.mxu0 0
      %1355 = vmatpush1.bf16.msra.mxu0 %v1333
      %1356 = vmatprep.subr.bf16.mxu0 0
      %1357 = vmatpush1.bf16.msra.mxu0 %v1334
      %1358 = vmatprep.subr.bf16.mxu0 0
      %1359 = vmatpush1.bf16.msra.mxu0 %v1335
      %1360 = vmatprep.subr.bf16.mxu0 0
      %1361 = vmatpush1.bf16.msra.mxu0 0
      %1362 = vmatprep.subr.bf16.mxu0 0
      %1363 = vmatpush1.bf16.msra.mxu0 0
      %1364 = vmatprep.subr.bf16.mxu0 0
      %1365 = vmatpush1.bf16.msra.mxu0 0
      %1366 = vmatprep.subr.bf16.mxu0 0
      %1367 = vmatpush1.bf16.msra.mxu0 0
      %1368 = vmatprep.subr.bf16.mxu0 0
      %1369 = vmatpush1.bf16.msra.mxu0 0
      %1370 = vmatprep.subr.bf16.mxu0 0
      %1371 = vmatpush1.bf16.msra.mxu0 0
      %1372 = vmatprep.subr.bf16.mxu0 0
      %1373 = vmatpush1.bf16.msra.mxu0 0
      %1374 = vmatprep.subr.bf16.mxu0 0
      %1375 = vmatpush1.bf16.msra.mxu0 0
      %1376 = vmatprep.mubr.bf16.mxu0 0
      %1377 = vmatmul.mubr.bf16.gmra.mrb[0].mxu0 %v1292
      %v1378 = vpop.f32.mrb[0].mxu0
      %v1379 = vadd.f32 0.0, %v1378
      %v1380 = vpop.f32.mrb[0].mxu0
      %v1381 = vpop.f32.mrb[0].mxu0
      %v1382 = vadd.f32 0.0, %v1381
      %v1383 = vpop.f32.mrb[0].mxu0
      %1384 = vmatprep.mubr.bf16.mxu0 0
      %1385 = vmatmul.mubr.bf16.gmra.mrb[0].mxu0 %v1293
      %v1386 = vpop.f32.mrb[0].mxu0
      %v1387 = vadd.f32 0.0, %v1386
      %v1388 = vpop.f32.mrb[0].mxu0
      %v1389 = vpop.f32.mrb[0].mxu0
      %v1390 = vadd.f32 0.0, %v1389
      %v1391 = vpop.f32.mrb[0].mxu0
      %1392 = vdwg.mxu0
      %v1393 = vadd.f32 %v1263, %v1379
      %v1394 = vadd.f32 %v1264, %v1382
      %v1395 = vadd.f32 %v1265, %v1387
      %v1396 = vadd.f32 %v1266, %v1390
      %1401 = vrot.lane.b32.xlu0 %v509, 64
      %v1402 = vpop.permute.xlu0 %1401
      %1403 = vrot.lane.b32.xlu0 %v510, 64
      %v1404 = vpop.permute.xlu0 %1403
      %1405 = vrot.lane.b32.xlu0 %v511, 64
      %v1406 = vpop.permute.xlu0 %1405
      %1407 = vrot.lane.b32.xlu0 %v512, 64
      %v1408 = vpop.permute.xlu0 %1407
      %v1410 = vsel %vm726, %v509, %v1402
      %v1412 = vsel %vm726, %v510, %v1404
      %v1414 = vsel %vm726, %v511, %v1406
      %v1416 = vsel %vm726, %v512, %v1408
      %v1421 = vunpack.c.l.b16 %v1410
      %v1422 = vunpack.c.h.b16 %v1410
      %v1423 = vunpack.c.l.b16 %v1412
      %v1424 = vunpack.c.h.b16 %v1412
      %v1425 = vunpack.c.l.b16 %v1414
      %v1426 = vunpack.c.h.b16 %v1414
      %v1427 = vunpack.c.l.b16 %v1416
      %v1428 = vunpack.c.h.b16 %v1416
      %v1429 = vpack.c.b16 %v1421, %v1421
      %v1430 = vpack.c.b16 %v1422, %v1422
      %v1431 = vpack.c.b16 %v1423, %v1423
      %v1432 = vpack.c.b16 %v1424, %v1424
      %v1433 = vpack.c.b16 %v1425, %v1425
      %v1434 = vpack.c.b16 %v1426, %v1426
      %v1435 = vpack.c.b16 %v1427, %v1427
      %v1436 = vpack.c.b16 %v1428, %v1428
      %v1438 = vshrl.u32 %v1429, 16
      %v1440 = vrot.slane %v1438, 4
      %v1441 = vshll.u32 %v1429, 16
      %v1443 = vrot.slane %v1441, 5
      %v1444 = vor.u32 %v1440, %v1443
      %v1445 = vrot.slane %v1444, 4
      %v1447 = vshll.u32 %v1430, 16
      %v1449 = vrot.slane %v1447, 5
      %v1450 = vsel %vm821, %v1445, %v1449
      %v1452 = vshrl.u32 %v1431, 16
      %v1454 = vrot.slane %v1452, 4
      %v1455 = vshll.u32 %v1431, 16
      %v1457 = vrot.slane %v1455, 5
      %v1458 = vor.u32 %v1454, %v1457
      %v1459 = vrot.slane %v1458, 4
      %v1461 = vshll.u32 %v1432, 16
      %v1463 = vrot.slane %v1461, 5
      %v1464 = vsel %vm821, %v1459, %v1463
      %v1466 = vshrl.u32 %v1433, 16
      %v1468 = vrot.slane %v1466, 4
      %v1469 = vshll.u32 %v1433, 16
      %v1471 = vrot.slane %v1469, 5
      %v1472 = vor.u32 %v1468, %v1471
      %v1473 = vrot.slane %v1472, 4
      %v1475 = vshll.u32 %v1434, 16
      %v1477 = vrot.slane %v1475, 5
      %v1478 = vsel %vm821, %v1473, %v1477
      %v1480 = vshrl.u32 %v1435, 16
      %v1482 = vrot.slane %v1480, 4
      %v1483 = vshll.u32 %v1435, 16
      %v1485 = vrot.slane %v1483, 5
      %v1486 = vor.u32 %v1482, %v1485
      %v1487 = vrot.slane %v1486, 4
      %v1489 = vshll.u32 %v1436, 16
      %v1491 = vrot.slane %v1489, 5
      %v1492 = vsel %vm821, %v1487, %v1491
      %s1493 = scalar_lea.vmem %s4, 256
      %v1494 = vld [vmem:[%s1493] sm:$0xf]
      %v1495 = vld [vmem:[%s1493 + $0x4] sm:$0xf]
      %v1496 = vld [vmem:[%s1493 + $0x8] sm:$0xf]
      %v1497 = vld [vmem:[%s1493 + $0xc] sm:$0xf]
      %v1498 = vld [vmem:[%s1493 + $0x10] sm:$0xf]
      %v1499 = vld [vmem:[%s1493 + $0x14] sm:$0xf]
      %v1500 = vld [vmem:[%s1493 + $0x18] sm:$0xf]
      %v1501 = vld [vmem:[%s1493 + $0x1c] sm:$0xf]
      %v1502 = vld [vmem:[%s1493 + $0x20] sm:$0xf]
      %v1503 = vld [vmem:[%s1493 + $0x24] sm:$0xf]
      %v1504 = vld [vmem:[%s1493 + $0x28] sm:$0xf]
      %v1505 = vld [vmem:[%s1493 + $0x2c] sm:$0xf]
      %v1506 = vld [vmem:[%s1493 + $0x30] sm:$0xf]
      %v1507 = vld [vmem:[%s1493 + $0x34] sm:$0xf]
      %v1508 = vld [vmem:[%s1493 + $0x38] sm:$0xf]
      %v1509 = vld [vmem:[%s1493 + $0x3c] sm:$0xf]
      %v1510 = vunpack.c.l.b16 %v1450
      %v1511 = vunpack.c.l.b16 %v1464
      %v1512 = vunpack.c.l.b16 %v1478
      %v1513 = vunpack.c.l.b16 %v1492
      %v1514 = vpack.c.b16 %v1511, %v1510
      %v1515 = vpack.c.b16 %v1513, %v1512
      %v1534 = vunpack.c.l.b16 %v1494
      %v1535 = vunpack.c.l.b16 %v1495
      %v1536 = vunpack.c.l.b16 %v1496
      %v1537 = vunpack.c.l.b16 %v1497
      %v1538 = vunpack.c.l.b16 %v1498
      %v1539 = vunpack.c.l.b16 %v1499
      %v1540 = vunpack.c.l.b16 %v1500
      %v1541 = vunpack.c.l.b16 %v1501
      %v1542 = vunpack.c.l.b16 %v1502
      %v1543 = vunpack.c.l.b16 %v1503
      %v1544 = vunpack.c.l.b16 %v1504
      %v1545 = vunpack.c.l.b16 %v1505
      %v1546 = vunpack.c.l.b16 %v1506
      %v1547 = vunpack.c.l.b16 %v1507
      %v1548 = vunpack.c.l.b16 %v1508
      %v1549 = vunpack.c.l.b16 %v1509
      %v1550 = vpack.c.b16 %v1535, %v1534
      %v1551 = vpack.c.b16 %v1537, %v1536
      %v1552 = vpack.c.b16 %v1539, %v1538
      %v1553 = vpack.c.b16 %v1541, %v1540
      %v1554 = vpack.c.b16 %v1543, %v1542
      %v1555 = vpack.c.b16 %v1545, %v1544
      %v1556 = vpack.c.b16 %v1547, %v1546
      %v1557 = vpack.c.b16 %v1549, %v1548
      %1566 = vmatprep.subr.bf16.mxu0 0
      %1567 = vmatpush1.bf16.msra.mxu0 %v1550
      %1568 = vmatprep.subr.bf16.mxu0 0
      %1569 = vmatpush1.bf16.msra.mxu0 %v1551
      %1570 = vmatprep.subr.bf16.mxu0 0
      %1571 = vmatpush1.bf16.msra.mxu0 %v1552
      %1572 = vmatprep.subr.bf16.mxu0 0
      %1573 = vmatpush1.bf16.msra.mxu0 %v1553
      %1574 = vmatprep.subr.bf16.mxu0 0
      %1575 = vmatpush1.bf16.msra.mxu0 %v1554
      %1576 = vmatprep.subr.bf16.mxu0 0
      %1577 = vmatpush1.bf16.msra.mxu0 %v1555
      %1578 = vmatprep.subr.bf16.mxu0 0
      %1579 = vmatpush1.bf16.msra.mxu0 %v1556
      %1580 = vmatprep.subr.bf16.mxu0 0
      %1581 = vmatpush1.bf16.msra.mxu0 %v1557
      %1582 = vmatprep.subr.bf16.mxu0 0
      %1583 = vmatpush1.bf16.msra.mxu0 0
      %1584 = vmatprep.subr.bf16.mxu0 0
      %1585 = vmatpush1.bf16.msra.mxu0 0
      %1586 = vmatprep.subr.bf16.mxu0 0
      %1587 = vmatpush1.bf16.msra.mxu0 0
      %1588 = vmatprep.subr.bf16.mxu0 0
      %1589 = vmatpush1.bf16.msra.mxu0 0
      %1590 = vmatprep.subr.bf16.mxu0 0
      %1591 = vmatpush1.bf16.msra.mxu0 0
      %1592 = vmatprep.subr.bf16.mxu0 0
      %1593 = vmatpush1.bf16.msra.mxu0 0
      %1594 = vmatprep.subr.bf16.mxu0 0
      %1595 = vmatpush1.bf16.msra.mxu0 0
      %1596 = vmatprep.subr.bf16.mxu0 0
      %1597 = vmatpush1.bf16.msra.mxu0 0
      %1598 = vmatprep.mubr.bf16.mxu0 0
      %1599 = vmatmul.mubr.bf16.gmra.mrb[0].mxu0 %v1514
      %v1600 = vpop.f32.mrb[0].mxu0
      %v1601 = vadd.f32 0.0, %v1600
      %v1602 = vpop.f32.mrb[0].mxu0
      %v1603 = vpop.f32.mrb[0].mxu0
      %v1604 = vadd.f32 0.0, %v1603
      %v1605 = vpop.f32.mrb[0].mxu0
      %1606 = vmatprep.mubr.bf16.mxu0 0
      %1607 = vmatmul.mubr.bf16.gmra.mrb[0].mxu0 %v1515
      %v1608 = vpop.f32.mrb[0].mxu0
      %v1609 = vadd.f32 0.0, %v1608
      %v1610 = vpop.f32.mrb[0].mxu0
      %v1611 = vpop.f32.mrb[0].mxu0
      %v1612 = vadd.f32 0.0, %v1611
      %v1613 = vpop.f32.mrb[0].mxu0
      %1614 = vdwg.mxu0
      %v1615 = vadd.f32 %v1393, %v1601
      %v1616 = vadd.f32 %v1394, %v1604
      %v1617 = vadd.f32 %v1395, %v1609
      %v1618 = vadd.f32 %v1396, %v1612
      %v1619 = vld [vmem:[%s5] sm:$0x1]
      %v1621 = vlaneseq
      %v1622 = vshrl.u32 %v1621, 7
      %v1623 = vsub.s32 0, %v1622
      %v1624 = vrot.slane %v1619, %v1623
      %v1626 = vadd.f32 %v1615, %v1624
      %v1627 = vadd.f32 %v1616, %v1624
      %v1628 = vadd.f32 %v1617, %v1624
      %v1629 = vadd.f32 %v1618, %v1624
      %v1630 = vpack.c.bf16 %v1626, %v1626
      %v1631 = vpack.c.bf16 %v1627, %v1627
      %v1632 = vpack.c.bf16 %v1628, %v1628
      %v1633 = vpack.c.bf16 %v1629, %v1629
      %vm1634 = vcmask 93184
      %1635 = vst.msk [vmem:[%s415] sm:$0xf] %vm1634, %v1630
      %1636 = vst.msk [vmem:[%s415 + $0x4] sm:$0xf] %vm1634, %v1631
      %1637 = vst.msk [vmem:[%s415 + $0x8] sm:$0xf] %vm1634, %v1632
      %1638 = vst.msk [vmem:[%s415 + $0xc] sm:$0xf] %vm1634, %v1633
      %s1639 = smul.u32 4, %s26
      %p1640 = scmp.lt.s32.totalorder %s25, 1
      %s1641 = scalar_select %p1640, %s25, 1
      %p1642 = scmp.lt.s32.totalorder %s1639, 7
      %s1643 = scalar_select %p1642, %s1639, 7
      %s1644 = smul.addr %s1641, 8
      %s1645 = sadd.s32 %s1643, %s1644
      %s1646 = smul.addr %s1645, 4
      %s1647 = scalar_lea.vmem %s9, %s1646
      // Predicated region
      $region57: #{compression_network_forward.6} parent=55 // pred_check
        %p1648 = pneg %p262
      $region58: #{compression_network_forward.6} parent=55 // pred_check_branch
        %1650 = sbr.rel (%p1648) target = $region60
      $region59: #{compression_network_forward.6} parent=55 // pred_region
        %s1651 = smul.u32 4, %s26
      $region60: #{compression_network_forward.6} parent=55 // pred_fallthru
        _
    $region56: #{compression_network_forward.6} parent=5 // pred_fallthru
      _
    %p1652 = scmp.le.s32.totalorder 2, %s16
    // Predicated region
    $region61: #{compression_network_forward.6} parent=5 // pred_check
      %p1653 = pneg %p1652
    $region62: #{compression_network_forward.6} parent=5 // pred_check_branch
      %1655 = sbr.rel (%p1653) target = $region64
    $region63: #{compression_network_forward.6} parent=5 // pred_region
      %s1656 = ssub.s32 %s16, 2
      // Predicated region
      $region65: #{compression_network_forward.6} parent=63 // pred_check
        %p1657 = pneg %p268
      $region66: #{compression_network_forward.6} parent=63 // pred_check_branch
        %1659 = sbr.rel (%p1657) target = $region68
      $region67: #{compression_network_forward.6} parent=63 // pred_region
        %s1660 = smul.u32 4, %s28
        %p1661 = scmp.lt.s32.totalorder %s27, 1
        %s1662 = scalar_select %p1661, %s27, 1
        %p1663 = scmp.lt.s32.totalorder %s1660, 7
        %s1664 = scalar_select %p1663, %s1660, 7
        %s1665 = smul.addr %s1662, 8
        %s1666 = sadd.s32 %s1664, %s1665
        %s1667 = smul.addr %s1666, 4
        %s1668 = scalar_lea.vmem %s9, %s1667
      $region68: #{compression_network_forward.6} parent=63 // pred_fallthru
        _
    $region64: #{compression_network_forward.6} parent=5 // pred_fallthru
      _
  $region6: #{compression_network_forward.6} parent=0 // loop_footer
    %s20 = sadd.s32 1, %s16
  $region7: #{compression_network_forward.6} parent=0 // loop_footer_branch
    %15 = sbr.rel target = $region3
  $region8: #{compression_network_forward.6} parent=0 // loop_exit
    _

// kernel: compression_network_forward.7
$region0: #{compression_network_forward.7}
  #allocation0 [shape = 'u32[]', space=smem, size = 0x4, offset = 0x4, fixed_abs, tag = 'smem constant byte address 0x4 - core index']
  #allocation1 [shape = 'u32[144,128]{1,0:T(1,128)}', space=vmem, size = 0x12000, scoped, tag = 'internal scratch']
  %s0 = inlined_call_operand.vmem [shape: bf16[2,3,256], index: 0, kind: input, shape index: {}]
  %s1 = inlined_call_operand.vmem [shape: f32[2,3,256], index: 1, kind: input, shape index: {}]
  %s2 = inlined_call_operand.vmem [shape: f32[2,3,256], index: 2, kind: output, shape index: {}]
  %s3 = sld [smem:[#allocation0]]
  $region41: #{compression_network_forward.7} parent=0
    _
  %s5 = ssub.s32 1, %s3
  %s6 = scalar_select 0, %s5, %s3
  loop: start=0, step=1, limit=6
  $region2: #{compression_network_forward.7} parent=0 // loop_pre_header
    _
  $region3: #{compression_network_forward.7} parent=0 // loop_header
    %s8 = sphi 0, %s12
    %p9 = scmp.ge.s32.totalorder %s8, 6
    %s15 = sphi 0, %s27
    %s16 = sphi 0, %s23
    %s17 = sphi 0, %s15
    %s18 = sphi 0, %s16
    %s19 = sphi 0, %s17
    %s20 = sphi 0, %s18
    %s32 = sphi 0, %s34
    %s35 = sphi 0, %s32
    %s36 = sphi 0, %s35
    %s52 = sphi 0, %s36
    %s60 = sphi 0, %s62
    %s63 = sphi 0, %s60
    %s64 = sphi 0, %s63
    %s80 = sphi 0, %s64
    %s88 = sphi 0, %s90
    %s91 = sphi 0, %s88
    %s92 = sphi 0, %s91
    %s108 = sphi 0, %s92
  $region4: #{compression_network_forward.7} parent=0 // loop_header_branch
    %11 = sbr.rel (%p9) target = $region8
  $region5: #{compression_network_forward.7} parent=0 // loop_body
    %s13 = ssub.s32 %s8, 1
    %s14 = ssub.s32 %s8, 2
    %s21 = sadd.s32 1, %s16
    %p22 = scmp.ge.s32.totalorder %s21, 2
    %s23 = scalar_select %p22, 0, %s21
    %s24 = sadd.s32 1, %s15
    %s25 = scalar_select %p22, %s24, %s15
    %p26 = scmp.ge.s32.totalorder %s25, 2
    %s27 = scalar_select %p26, 0, %s25
    %s28 = ssub.s32 %s15, %s27
    %s29 = ssub.s32 %s16, %s23
    %s30 = sor.u32 %s28, %s29
    %p31 = scmp.eq.s32.totalorder %s30, 0
    %s33 = sadd.s32 %s32, 1
    %s34 = scalar_select %p31, %s32, %s33
    %p37 = pneg %p31
    %p38 = scmp.eq.s32.totalorder %s8, 3
    %p39 = por %p37, %p38
    %p40 = scmp.ne.s32.totalorder %s32, %s35
    %p41 = scmp.eq.s32.totalorder %s8, 0
    %p42 = por %p40, %p41
    %p43 = scmp.ne.s32.totalorder %s32, %s35
    %p44 = scmp.eq.s32.totalorder %s13, 3
    %p45 = por %p43, %p44
    %p46 = scmp.ne.s32.totalorder %s35, %s36
    %p47 = scmp.eq.s32.totalorder %s13, 0
    %p48 = por %p46, %p47
    %p49 = scmp.ne.s32.totalorder %s35, %s36
    %p50 = scmp.eq.s32.totalorder %s14, 3
    %p51 = por %p49, %p50
    %p53 = scmp.ne.s32.totalorder %s36, %s52
    %p54 = scmp.eq.s32.totalorder %s14, 0
    %p55 = por %p53, %p54
    %s56 = ssub.s32 %s15, %s27
    %s57 = ssub.s32 %s16, %s23
    %s58 = sor.u32 %s56, %s57
    %p59 = scmp.eq.s32.totalorder %s58, 0
    %s61 = sadd.s32 %s60, 1
    %s62 = scalar_select %p59, %s60, %s61
    %p65 = pneg %p59
    %p66 = scmp.eq.s32.totalorder %s8, 3
    %p67 = por %p65, %p66
    %p68 = scmp.ne.s32.totalorder %s60, %s63
    %p69 = scmp.eq.s32.totalorder %s8, 0
    %p70 = por %p68, %p69
    %p71 = scmp.ne.s32.totalorder %s60, %s63
    %p72 = scmp.eq.s32.totalorder %s13, 3
    %p73 = por %p71, %p72
    %p74 = scmp.ne.s32.totalorder %s63, %s64
    %p75 = scmp.eq.s32.totalorder %s13, 0
    %p76 = por %p74, %p75
    %p77 = scmp.ne.s32.totalorder %s63, %s64
    %p78 = scmp.eq.s32.totalorder %s14, 3
    %p79 = por %p77, %p78
    %p81 = scmp.ne.s32.totalorder %s64, %s80
    %p82 = scmp.eq.s32.totalorder %s14, 0
    %p83 = por %p81, %p82
    %s84 = ssub.s32 %s15, %s27
    %s85 = ssub.s32 %s16, %s23
    %s86 = sor.u32 %s84, %s85
    %p87 = scmp.eq.s32.totalorder %s86, 0
    %s89 = sadd.s32 %s88, 1
    %s90 = scalar_select %p87, %s88, %s89
    %p93 = pneg %p87
    %p94 = scmp.eq.s32.totalorder %s8, 3
    %p95 = por %p93, %p94
    %p96 = scmp.ne.s32.totalorder %s88, %s91
    %p97 = scmp.eq.s32.totalorder %s8, 0
    %p98 = por %p96, %p97
    %p99 = scmp.ne.s32.totalorder %s88, %s91
    %p100 = scmp.eq.s32.totalorder %s13, 3
    %p101 = por %p99, %p100
    %p102 = scmp.ne.s32.totalorder %s91, %s92
    %p103 = scmp.eq.s32.totalorder %s13, 0
    %p104 = por %p102, %p103
    %p105 = scmp.ne.s32.totalorder %s91, %s92
    %p106 = scmp.eq.s32.totalorder %s14, 3
    %p107 = por %p105, %p106
    %p109 = scmp.ne.s32.totalorder %s92, %s108
    %p110 = scmp.eq.s32.totalorder %s14, 0
    %p111 = por %p109, %p110
    %p112 = scmp.le.s32.totalorder 1, %s8
    %p113 = scmp.lt.s32.totalorder %s8, 5
    %p114 = pnand %p112, %p113
    %p115 = pneg %p114
    // Predicated region
    $region9: #{compression_network_forward.7} parent=5 // pred_check
      _
    $region10: #{compression_network_forward.7} parent=5 // pred_check_branch
      %117 = sbr.rel (%p114) target = $region12
    $region11: #{compression_network_forward.7} parent=5 // pred_region
      %s118 = ssub.s32 %s8, 1
    $region12: #{compression_network_forward.7} parent=5 // pred_fallthru
      _
    %p119 = scmp.lt.s32.totalorder %s8, 4
    // Predicated region
    $region13: #{compression_network_forward.7} parent=5 // pred_check
      %p120 = pneg %p119
    $region14: #{compression_network_forward.7} parent=5 // pred_check_branch
      %122 = sbr.rel (%p120) target = $region16
    $region15: #{compression_network_forward.7} parent=5 // pred_region
      // Predicated region
      $region17: #{compression_network_forward.7} parent=15 // pred_check
        %p123 = pneg %p42
      $region18: #{compression_network_forward.7} parent=15 // pred_check_branch
        %125 = sbr.rel (%p123) target = $region20
      $region19: #{compression_network_forward.7} parent=15 // pred_region
        %p126 = scmp.lt.s32.totalorder %s15, 1
        %s127 = scalar_select %p126, %s15, 1
        %p128 = scmp.lt.s32.totalorder %s16, 1
        %s129 = scalar_select %p128, %s16, 1
        %s130 = smul.addr %s127, 2
        %s131 = sadd.s32 %s129, %s130
        %s132 = smul.addr %s131, 2
        %s133 = scalar_lea.vmem %s0, %s132
      $region20: #{compression_network_forward.7} parent=15 // pred_fallthru
        _
      // Predicated region
      $region21: #{compression_network_forward.7} parent=15 // pred_check
        %p134 = pneg %p70
      $region22: #{compression_network_forward.7} parent=15 // pred_check_branch
        %136 = sbr.rel (%p134) target = $region24
      $region23: #{compression_network_forward.7} parent=15 // pred_region
        %p137 = scmp.lt.s32.totalorder %s15, 1
        %s138 = scalar_select %p137, %s15, 1
        %p139 = scmp.lt.s32.totalorder %s16, 1
        %s140 = scalar_select %p139, %s16, 1
        %s141 = smul.addr %s138, 2
        %s142 = sadd.s32 %s140, %s141
        %s143 = smul.addr %s142, 4
        %s144 = scalar_lea.vmem %s1, %s143
      $region24: #{compression_network_forward.7} parent=15 // pred_fallthru
        _
    $region16: #{compression_network_forward.7} parent=5 // pred_fallthru
      _
    %p145 = scmp.le.s32.totalorder 1, %s8
    %p146 = scmp.lt.s32.totalorder %s8, 5
    %p147 = pnand %p145, %p146
    %p148 = pneg %p147
    // Predicated region
    $region25: #{compression_network_forward.7} parent=5 // pred_check
      _
    $region26: #{compression_network_forward.7} parent=5 // pred_check_branch
      %150 = sbr.rel (%p147) target = $region28
    $region27: #{compression_network_forward.7} parent=5 // pred_region
      %s151 = ssub.s32 %s8, 1
      %p152 = scmp.lt.s32.totalorder %s17, 1
      %s153 = scalar_select %p152, %s17, 1
      %p154 = scmp.lt.s32.totalorder %s18, 1
      %s155 = scalar_select %p154, %s18, 1
      %s156 = smul.addr %s153, 2
      %s157 = sadd.s32 %s155, %s156
      %s158 = smul.addr %s157, 2
      %s159 = scalar_lea.vmem %s0, %s158
      %p160 = pneg %p48
      %p161 = pneg %p45
      %p162 = scmp.lt.s32.totalorder %s17, 1
      %s163 = scalar_select %p162, %s17, 1
      %p164 = scmp.lt.s32.totalorder %s18, 1
      %s165 = scalar_select %p164, %s18, 1
      %s166 = smul.addr %s163, 2
      %s167 = sadd.s32 %s165, %s166
      %s168 = smul.addr %s167, 4
      %s169 = scalar_lea.vmem %s1, %s168
      %p170 = pneg %p76
      %p171 = pneg %p73
      %p172 = pneg %p104
      %p173 = pneg %p101
      %p174 = scmp.lt.s32.totalorder %s17, 1
      %s175 = scalar_select %p174, %s17, 1
      %p176 = scmp.lt.s32.totalorder %s18, 1
      %s177 = scalar_select %p176, %s18, 1
      %s178 = smul.addr %s175, 2
      %s179 = sadd.s32 %s177, %s178
      %s180 = smul.addr %s179, 4
      %s181 = scalar_lea.vmem %s2, %s180
      %p182 = scmp.lt.s32.totalorder %s17, 1
      %s183 = scalar_select %p182, %s17, 1
      %p184 = scmp.lt.s32.totalorder %s18, 1
      %s185 = scalar_select %p184, %s18, 1
      %s186 = smul.addr %s183, 2
      %s187 = sadd.s32 %s185, %s186
      %s188 = smul.addr %s187, 2
      %s189 = scalar_lea.vmem %s0, %s188
      %p190 = scmp.lt.s32.totalorder %s17, 1
      %s191 = scalar_select %p190, %s17, 1
      %p192 = scmp.lt.s32.totalorder %s18, 1
      %s193 = scalar_select %p192, %s18, 1
      %s194 = smul.addr %s191, 2
      %s195 = sadd.s32 %s193, %s194
      %s196 = smul.addr %s195, 4
      %s197 = scalar_lea.vmem %s1, %s196
      %p198 = scmp.lt.s32.totalorder %s17, 1
      %s199 = scalar_select %p198, %s17, 1
      %p200 = scmp.lt.s32.totalorder %s18, 1
      %s201 = scalar_select %p200, %s18, 1
      %s202 = smul.addr %s199, 2
      %s203 = sadd.s32 %s201, %s202
      %s204 = smul.addr %s203, 4
      %s205 = scalar_lea.vmem %s2, %s204
      %v206 = vld [vmem:[%s189] sm:$0x3]
      %v207 = vunpack.c.l.bf16 %v206
      %v208 = vmul.f32 %v207, %v207
      %vm209 = vcmask 1042432
      %v210 = vsel %vm209, %v208, 0.0
      %v211 = vrot.slane %v210, 4
      %v212 = vadd.f32 %v210, %v211
      %v213 = vrot.slane %v212, 2
      %v214 = vadd.f32 %v212, %v213
      %v215 = vrot.slane %v214, 1
      %v216 = vadd.f32 %v214, %v215
      %v217 = vmax.f32 %v216, 1e-24
      %v218 = vrsqrt.pop %v217
      %v219 = vld [vmem:[%s197] sm:$0x7]
      %v220 = vmul.f32 %v207, %v218
      %v221 = vadd.f32 %v219, %v220
      %222 = vst [vmem:[%s205] sm:$0x7] %v221
      %p223 = scmp.lt.s32.totalorder %s17, 1
      %s224 = scalar_select %p223, %s17, 1
      %p225 = scmp.lt.s32.totalorder %s18, 1
      %s226 = scalar_select %p225, %s18, 1
      %s227 = smul.addr %s224, 2
      %s228 = sadd.s32 %s226, %s227
      %s229 = smul.addr %s228, 4
      %s230 = scalar_lea.vmem %s2, %s229
      // Predicated region
      $region29: #{compression_network_forward.7} parent=27 // pred_check
        %p231 = pneg %p101
      $region30: #{compression_network_forward.7} parent=27 // pred_check_branch
        %233 = sbr.rel (%p231) target = $region32
      $region31: #{compression_network_forward.7} parent=27 // pred_region
        _
      $region32: #{compression_network_forward.7} parent=27 // pred_fallthru
        _
    $region28: #{compression_network_forward.7} parent=5 // pred_fallthru
      _
    %p234 = scmp.le.s32.totalorder 2, %s8
    // Predicated region
    $region33: #{compression_network_forward.7} parent=5 // pred_check
      %p235 = pneg %p234
    $region34: #{compression_network_forward.7} parent=5 // pred_check_branch
      %237 = sbr.rel (%p235) target = $region36
    $region35: #{compression_network_forward.7} parent=5 // pred_region
      %s238 = ssub.s32 %s8, 2
      // Predicated region
      $region37: #{compression_network_forward.7} parent=35 // pred_check
        %p239 = pneg %p107
      $region38: #{compression_network_forward.7} parent=35 // pred_check_branch
        %241 = sbr.rel (%p239) target = $region40
      $region39: #{compression_network_forward.7} parent=35 // pred_region
        %p242 = scmp.lt.s32.totalorder %s19, 1
        %s243 = scalar_select %p242, %s19, 1
        %p244 = scmp.lt.s32.totalorder %s20, 1
        %s245 = scalar_select %p244, %s20, 1
        %s246 = smul.addr %s243, 2
        %s247 = sadd.s32 %s245, %s246
        %s248 = smul.addr %s247, 4
        %s249 = scalar_lea.vmem %s2, %s248
      $region40: #{compression_network_forward.7} parent=35 // pred_fallthru
        _
    $region36: #{compression_network_forward.7} parent=5 // pred_fallthru
      _
  $region6: #{compression_network_forward.7} parent=0 // loop_footer
    %s12 = sadd.s32 1, %s8
  $region7: #{compression_network_forward.7} parent=0 // loop_footer_branch
    %7 = sbr.rel target = $region3
  $region8: #{compression_network_forward.7} parent=0 // loop_exit
    _

</llo_original>
